<compile_context>
chip_gen: v7x
topology: tpu7x:2x2x1
jax: 0.10.0
libtpu: 0.0.40
codegen_flags: <defaults>
</compile_context>

<pallas_src>
import math
from functools import partial

import jax
import jax.numpy as jnp
from jax import lax
from jax.experimental import pallas as pl
from jax.experimental.pallas import tpu as pltpu

D_PAD = 128        # feats_dim zero-padded to the 128-lane width
ROW_TILE = 512     # cell-row tile (M) for conv / emb / decode
GENE_ALIGN = 256   # gene-row padding granularity (genes stay VMEM-resident)

_MiB = 1024 * 1024


def _round_up(n, m):
    return ((n + m - 1) // m) * m


def _mosaic_params(semantics, est_vmem_bytes):
    """dimension_semantics + an explicit VMEM limit (2x headroom over the
    estimated working set), clamped so it is legal on v5e/v6e/v7x."""
    limit = int(min(max(2 * est_vmem_bytes, 32 * _MiB), 64 * _MiB))
    return pltpu.CompilerParams(dimension_semantics=semantics,
                                vmem_limit_bytes=limit)


# ---------------------------------------------------------------------------
# Pallas kernels
# ---------------------------------------------------------------------------

def _fused_layer_kernel(s_ref, g_ref, u_ref, uhp_ref, ihp_ref,
                        newu_ref, uhout_ref, newi_ref, ihout_ref,
                        acc_i_ref, *, lw, inv_nb):
    """One LightGCN layer in a single pass over S.

    grid = (cell_row_tiles,) marked 'arbitrary' (it is the reduction axis of
    the gene-side update).  Per step:
        new_u_tile     = S_blk @ G                      (G VMEM-resident)
        u_hidden_tile  = u_hidden_prev_tile + lw * new_u_tile
        acc_i         += S_blk^T @ U_tile               (cell dim contracted)
    Last step flushes:
        new_i          = acc_i / n_batch                (HeteroGraphConv mean)
        i_hidden       = i_hidden_prev + lw * new_i
    """
    i = pl.program_id(0)

    @pl.when(i == 0)
    def _():
        acc_i_ref[...] = jnp.zeros_like(acc_i_ref)

    s_blk = s_ref[...]                                     # (TM, Ng_pad) bf16

    # Cell-side update: full-K matmul in one shot against the resident G.
    new_u = jnp.dot(s_blk, g_ref[...], preferred_element_type=jnp.float32)
    newu_ref[...] = new_u.astype(newu_ref.dtype)
    uhout_ref[...] = (uhp_ref[...] + lw * new_u).astype(uhout_ref.dtype)

    # Gene-side partial update: contract the cell dimension (dim 0 of both).
    acc_i_ref[...] += lax.dot_general(
        s_blk, u_ref[...], (((0,), (0,)), ((), ())),
        preferred_element_type=jnp.float32)

    @pl.when(i == pl.num_programs(0) - 1)
    def _():
        acc = acc_i_ref[...]
        newi_ref[...] = (acc * inv_nb).astype(newi_ref.dtype)
        ihout_ref[...] = (ihp_ref[...] + (lw * inv_nb) * acc).astype(
            ihout_ref.dtype)


def _emb_kernel(bid_ref, x_ref, w_ref, shift_ref, o_ref):
    """Fused  ELU( x @ W_fold + shift_batch )  for one cell-row tile.

    One-hot batch column and BatchNorm1d(eval) are pre-folded into W_fold /
    shift; the per-tile shift is selected by the scalar-prefetched batch id.
    x arrives already in bf16 (emitted by the last LightGCN layer).
    """
    del bid_ref  # consumed by the index_maps only
    y = jnp.dot(x_ref[...], w_ref[...], preferred_element_type=jnp.float32)
    y = y + shift_ref[...][0, 0:1, :]
    # ELU(alpha=1); clamp the discarded branch so expm1 never sees large +y.
    o_ref[...] = jnp.where(y > 0.0, y,
                           jnp.expm1(jnp.minimum(y, 0.0))).astype(o_ref.dtype)


def _decode_kernel(c_ref, g_ref, o_ref):
    """Dense DotDecoder tile: scores = cell_emb @ i_hidden^T (contract dim 1).
    i_hidden is VMEM-resident; output is written in bf16 (writeback-bound)."""
    o_ref[...] = lax.dot_general(
        c_ref[...], g_ref[...], (((1,), (1,)), ((), ())),
        preferred_element_type=jnp.float32).astype(o_ref.dtype)


# ---------------------------------------------------------------------------
# Pallas wrappers
# ---------------------------------------------------------------------------

def lightgcn_layer(s_bf, ufeats_bf, ifeats_bf, u_hidden, i_hidden, lw, n_batch,
                   hidden_dtype=jnp.float32, tile=ROW_TILE):
    """One fused LightGCNLayer over all cell batches (rows concatenated).

    Returns (new_u_bf, u_hidden_new, new_i_bf, i_hidden_new)."""
    mc, ng = s_bf.shape
    d = ifeats_bf.shape[1]

    est = (2 * tile * ng * 2            # S row slab, double-buffered
           + 2 * tile * d * 12          # streamed cell-row blocks (in + out)
           + 5 * ng * d * 4)            # resident gene-side blocks + acc

    return pl.pallas_call(
        partial(_fused_layer_kernel, lw=float(lw), inv_nb=1.0 / n_batch),
        out_shape=(
            jax.ShapeDtypeStruct((mc, d), jnp.bfloat16),   # new_u (next ufeats)
            jax.ShapeDtypeStruct((mc, d), hidden_dtype),   # u_hidden out
            jax.ShapeDtypeStruct((ng, d), jnp.bfloat16),   # new_i (next ifeats)
            jax.ShapeDtypeStruct((ng, d), hidden_dtype),   # i_hidden out
        ),
        grid=(mc // tile,),
        in_specs=[
            pl.BlockSpec((tile, ng), lambda i: (i, 0)),    # S row slab
            pl.BlockSpec((ng, d), lambda i: (0, 0)),       # G (resident)
            pl.BlockSpec((tile, d), lambda i: (i, 0)),     # cell feats U
            pl.BlockSpec((tile, d), lambda i: (i, 0)),     # u_hidden prev
            pl.BlockSpec((ng, d), lambda i: (0, 0)),       # i_hidden prev
        ],
        out_specs=(
            pl.BlockSpec((tile, d), lambda i: (i, 0)),
            pl.BlockSpec((tile, d), lambda i: (i, 0)),
            pl.BlockSpec((ng, d), lambda i: (0, 0)),       # resident / flushed
            pl.BlockSpec((ng, d), lambda i: (0, 0)),       # resident / flushed
        ),
        scratch_shapes=[pltpu.VMEM((ng, d), jnp.float32)],
        compiler_params=_mosaic_params(("arbitrary",), est),
    )(s_bf, ifeats_bf, ufeats_bf, u_hidden, i_hidden)


def emb_layer_pallas(tile_bid, u_hidden_bf, w_fold_bf, shift_rep,
                     tile=ROW_TILE):
    mc, d = u_hidden_bf.shape
    est = 2 * tile * d * 4 + d * d * 2 + shift_rep.size * 4
    return pl.pallas_call(
        _emb_kernel,
        out_shape=jax.ShapeDtypeStruct((mc, d), jnp.bfloat16),
        grid_spec=pltpu.PrefetchScalarGridSpec(
            num_scalar_prefetch=1,
            grid=(mc // tile,),
            in_specs=[
                pl.BlockSpec((tile, d), lambda i, bid: (i, 0)),
                pl.BlockSpec((d, d), lambda i, bid: (0, 0)),
                pl.BlockSpec((1, 8, d), lambda i, bid: (bid[i], 0, 0)),
            ],
            out_specs=pl.BlockSpec((tile, d), lambda i, bid: (i, 0)),
        ),
        compiler_params=_mosaic_params(("parallel",), est),
    )(tile_bid, u_hidden_bf, w_fold_bf, shift_rep)


def decode_pallas(cell_emb_bf, i_hidden_bf, tile=ROW_TILE):
    mc, d = cell_emb_bf.shape
    ng = i_hidden_bf.shape[0]
    est = 2 * tile * d * 2 + ng * d * 2 + 2 * tile * ng * 2
    return pl.pallas_call(
        _decode_kernel,
        out_shape=jax.ShapeDtypeStruct((mc, ng), jnp.bfloat16),
        grid=(mc // tile,),
        in_specs=[
            pl.BlockSpec((tile, d), lambda i: (i, 0)),
            pl.BlockSpec((ng, d), lambda i: (0, 0)),       # i_hidden resident
        ],
        out_specs=pl.BlockSpec((tile, ng), lambda i: (i, 0)),
        compiler_params=_mosaic_params(("parallel",), est),
    )(cell_emb_bf, i_hidden_bf)


# ---------------------------------------------------------------------------
# Model setup (deterministic parameter init, mirrors scHetG.__init__)
# ---------------------------------------------------------------------------

def xavier_uniform(key, shape):
    fan_out, fan_in = shape[0], shape[1]
    bound = math.sqrt(6.0 / (fan_in + fan_out))
    return jax.random.uniform(key, shape, jnp.float32, -bound, bound)


def init_params(key, n_cells, n_genes, feats_dim, n_layers):
    n_batch = len(n_cells)
    keys = jax.random.split(key, 3 + n_batch)

    gene_feature = xavier_uniform(keys[0], (n_genes, feats_dim))
    cell_feature = [xavier_uniform(keys[1 + i], (n_cells[i], feats_dim))
                    for i in range(n_batch)]

    # nn.Linear(feats_dim + n_batch, feats_dim), PyTorch default init
    in_dim = feats_dim + n_batch
    lim = 1.0 / math.sqrt(in_dim)
    lin_w = jax.random.uniform(keys[1 + n_batch], (in_dim, feats_dim),
                               jnp.float32, -lim, lim)            # stored as W^T
    lin_b = jax.random.uniform(keys[2 + n_batch], (1, feats_dim),
                               jnp.float32, -lim, lim)

    if n_layers == 2:
        weights = [1.0 / 3, 1.0 / 3, 1.0 / 3]
    else:
        weights = [1.0, 0.5, 1.0, 0.5, 1.0]

    return dict(gene_feature=gene_feature, cell_feature=cell_feature,
                lin_w=lin_w, lin_b=lin_b, weights=weights)


def build_normed_adj(key, n_cells, n_genes):
    """Dense bipartite adjacency per cell batch, symmetrically normalized."""
    s_list = []
    for i, nc in enumerate(n_cells):
        k = jax.random.fold_in(key, i)
        adj = jax.random.bernoulli(k, 0.2, (nc, n_genes)).astype(jnp.float32)
        deg_c = jnp.sum(adj, axis=1, keepdims=True)
        deg_g = jnp.sum(adj, axis=0, keepdims=True)
        inv_c = jnp.where(deg_c > 0, deg_c ** -0.5, 0.0)
        inv_g = jnp.where(deg_g > 0, deg_g ** -0.5, 0.0)
        s_list.append(adj * inv_c * inv_g)
    return s_list


def prepare_inputs(params, s_list, tile=ROW_TILE, d_pad=D_PAD):
    """Pad to lane-dense / tile-aligned shapes, concat cell batches, fold
    one-hot + BatchNorm into the emb Linear, pre-cast MXU operands to bf16."""
    n_batch = len(s_list)
    n_genes, feats_dim = params["gene_feature"].shape
    ng_pad = _round_up(n_genes, GENE_ALIGN)
    pad_cells = [_round_up(s.shape[0], tile) for s in s_list]
    mc_pad = sum(pad_cells)

    s_full = jnp.zeros((mc_pad, ng_pad), jnp.float32)
    u_full = jnp.zeros((mc_pad, d_pad), jnp.float32)
    off = 0
    for i, s in enumerate(s_list):
        nc = s.shape[0]
        s_full = s_full.at[off:off + nc, :n_genes].set(s)
        u_full = u_full.at[off:off + nc, :feats_dim].set(
            params["cell_feature"][i])
        off += pad_cells[i]
    g_full = jnp.zeros((ng_pad, d_pad), jnp.float32)
    g_full = g_full.at[:n_genes, :feats_dim].set(params["gene_feature"])

    # Fold BatchNorm1d (eval: mean=0, var=1, gamma=1, beta=0) and the one-hot
    # batch indicator (it selects row feats_dim+i of lin_w) into the Linear.
    # TODO(synk): training-mode dropout / batch-statistics BatchNorm not modeled.
    eps = 1e-5
    bn_scale = 1.0 / math.sqrt(1.0 + eps)
    w_fold = jnp.zeros((d_pad, d_pad), jnp.float32)
    w_fold = w_fold.at[:feats_dim, :feats_dim].set(
        params["lin_w"][:feats_dim, :] * bn_scale)
    shifts = []
    for i in range(n_batch):
        sh = (params["lin_b"][0] + params["lin_w"][feats_dim + i, :]) * bn_scale
        shifts.append(jnp.zeros((d_pad,), jnp.float32).at[:feats_dim].set(sh))
    shift = jnp.stack(shifts)                              # (n_batch, D_PAD)
    shift_rep = jnp.tile(shift[:, None, :], (1, 8, 1))     # (n_batch, 8, D_PAD)

    tile_bid = jnp.concatenate(
        [jnp.full((pad_cells[i] // tile,), i, jnp.int32)
         for i in range(n_batch)])

    return dict(
        S_bf=s_full.astype(jnp.bfloat16),
        cell_feature_pad=u_full, gene_feature_pad=g_full,
        w_fold_bf=w_fold.astype(jnp.bfloat16), shift_rep=shift_rep,
        tile_bid=tile_bid, weights=params["weights"],
        n_batch=n_batch, n_cells=[s.shape[0] for s in s_list],
        n_genes=n_genes, pad_cells=pad_cells)


# ---------------------------------------------------------------------------
# Forward pass
# ---------------------------------------------------------------------------

def schetg_forward(prep):
    """Returns the dense padded (Mc_pad, Ng_pad) bf16 score matrix; downstream
    consumers should index it with the per-batch row offsets (pad_cells)."""
    s_bf = prep["S_bf"]
    n_batch = prep["n_batch"]
    w = prep["weights"]

    u0 = prep["cell_feature_pad"]      # (Mc_pad, D_PAD) f32
    g0 = prep["gene_feature_pad"]      # (Ng_pad, D_PAD) f32

    u_hidden = w[0] * u0
    i_hidden = w[0] * g0
    ufeats_bf = u0.astype(jnp.bfloat16)
    ifeats_bf = g0.astype(jnp.bfloat16)

    # encode(): fused single-pass-over-S LightGCN layers; the weighted hidden
    # sums are carried in f32 and the last layer emits them in bf16 for the
    # emb layer / decoder.
    n_conv = len(w) - 1
    for li, lw in enumerate(w[1:]):
        hidden_dtype = jnp.bfloat16 if li == n_conv - 1 else jnp.float32
        ufeats_bf, u_hidden, ifeats_bf, i_hidden = lightgcn_layer(
            s_bf, ufeats_bf, ifeats_bf, u_hidden, i_hidden, lw, n_batch,
            hidden_dtype=hidden_dtype)

    # emb_layer: fused Linear(+folded one-hot / BatchNorm) + ELU.
    cell_emb_bf = emb_layer_pallas(prep["tile_bid"], u_hidden,
                                   prep["w_fold_bf"], prep["shift_rep"])

    # DotDecoder: dense cell x gene scores (bf16, i_hidden VMEM-resident).
    return decode_pallas(cell_emb_bf, i_hidden)


# ---------------------------------------------------------------------------
# Pure-f32 JAX reference (for validation of the bf16 Pallas pipeline)
# ---------------------------------------------------------------------------

def reference_forward_f32(params, s_list):
    w = params["weights"]
    n_batch = len(s_list)
    G = params["gene_feature"]
    U = list(params["cell_feature"])
    feats_dim = G.shape[1]

    ufeats, ifeats = U, G
    u_hidden = [w[0] * u for u in U]
    i_hidden = w[0] * G
    for lw in w[1:]:
        new_u = [s_list[i] @ ifeats for i in range(n_batch)]
        new_i = sum(s_list[i].T @ ufeats[i] for i in range(n_batch)) / n_batch
        ufeats, ifeats = new_u, new_i
        u_hidden = [u_hidden[i] + lw * new_u[i] for i in range(n_batch)]
        i_hidden = i_hidden + lw * new_i

    bn_scale = 1.0 / math.sqrt(1.0 + 1e-5)
    preds = []
    for i in range(n_batch):
        y = (u_hidden[i] @ params["lin_w"][:feats_dim, :]
             + params["lin_w"][feats_dim + i, :] + params["lin_b"][0]) * bn_scale
        y = jnp.where(y > 0.0, y, jnp.expm1(jnp.minimum(y, 0.0)))
        preds.append(y @ i_hidden.T)
    return preds


# ---------------------------------------------------------------------------
# Main
# ---------------------------------------------------------------------------

if __name__ == "__main__":
    key = jax.random.PRNGKey(0)
    k_param, k_graph = jax.random.split(key)

    n_cells = [200, 120]   # two cell batches (non-tile-aligned on purpose)
    n_genes = 300
    feats_dim = 32
    n_layers = 2

    params = init_params(k_param, n_cells, n_genes, feats_dim, n_layers)
    s_list = build_normed_adj(k_graph, n_cells, n_genes)
    prep = prepare_inputs(params, s_list)

    pred_full = jax.block_until_ready(schetg_forward(prep))

    # Verification only: slice the padded dense score matrix back to per-batch
    # (nc, n_genes) views and compare against the pure-f32 JAX reference.
    # TODO(synk): real pipelines should consume pred_full via row offsets (or a
    #             per-edge gather for pos/neg graphs) instead of re-slicing.
    ref_preds = reference_forward_f32(params, s_list)
    off = 0
    all_ok = True
    for i, nc in enumerate(prep["n_cells"]):
        got = pred_full[off:off + nc, :n_genes].astype(jnp.float32)
        assert got.shape == (nc, n_genes)
        all_ok = all_ok and bool(jnp.all(jnp.isfinite(got)))
        all_ok = all_ok and bool(
            jnp.allclose(got, ref_preds[i], rtol=0.15, atol=0.02))
        off += prep["pad_cells"][i]
    assert all_ok, "Pallas forward does not match the f32 reference"
    print("KERNEL_OK")
</pallas_src>

<mosaic_0001>
module attributes {stable_mosaic.version = 11 : i64} {
  func.func @_fused_layer_kernel(%arg0: i32, %arg1: memref<512x512xbf16, #tpu.memory_space<vmem>>, %arg2: memref<512x128xbf16, #tpu.memory_space<vmem>>, %arg3: memref<512x128xbf16, #tpu.memory_space<vmem>>, %arg4: memref<512x128xf32, #tpu.memory_space<vmem>>, %arg5: memref<512x128xf32, #tpu.memory_space<vmem>>, %arg6: memref<512x128xbf16, #tpu.memory_space<vmem>>, %arg7: memref<512x128xf32, #tpu.memory_space<vmem>>, %arg8: memref<512x128xbf16, #tpu.memory_space<vmem>>, %arg9: memref<512x128xf32, #tpu.memory_space<vmem>>, %arg10: memref<512x128xf32, #tpu.memory_space<vmem>>) attributes {dimension_semantics = [#tpu.dimension_semantics<arbitrary>], iteration_bounds = array<i64: 2>, scalar_prefetch = 0 : i64, scratch_operands = 1 : i64, tpu.core_type = #tpu.core_type<tc>, window_params = [{transform_indices = @transform_0, window_bounds = array<i64: 512, 512>}, {pipeline_mode = #tpu.pipeline_mode<synchronous>, transform_indices = @transform_1, window_bounds = array<i64: 512, 128>}, {transform_indices = @transform_2, window_bounds = array<i64: 512, 128>}, {transform_indices = @transform_3, window_bounds = array<i64: 512, 128>}, {pipeline_mode = #tpu.pipeline_mode<synchronous>, transform_indices = @transform_4, window_bounds = array<i64: 512, 128>}, {transform_indices = @transform_5, window_bounds = array<i64: 512, 128>}, {transform_indices = @transform_6, window_bounds = array<i64: 512, 128>}, {pipeline_mode = #tpu.pipeline_mode<synchronous>, transform_indices = @transform_7, window_bounds = array<i64: 512, 128>}, {pipeline_mode = #tpu.pipeline_mode<synchronous>, transform_indices = @transform_8, window_bounds = array<i64: 512, 128>}]} {
    %c0_i32 = arith.constant 0 : i32
    %0 = arith.cmpi eq, %arg0, %c0_i32 : i32
    %1 = arith.extui %0 : i1 to i32
    %c0_i32_0 = arith.constant 0 : i32
    %2 = arith.cmpi ne, %1, %c0_i32_0 : i32
    scf.if %2 {
      %cst_19 = arith.constant 0.000000e+00 : f32
      %21 = vector.broadcast %cst_19 : f32 to vector<512x128xf32>
      %c0_20 = arith.constant 0 : index
      %c0_21 = arith.constant 0 : index
      %22 = vector.load %arg10[%c0_20, %c0_21] : memref<512x128xf32, #tpu.memory_space<vmem>>, vector<512x128xf32>
      tpu.vector_store %arg10[%c0_20, %c0_21], %21 {strides = array<i32>} : memref<512x128xf32, #tpu.memory_space<vmem>>, vector<512x128xf32>,
    } else {
    }
    %c0 = arith.constant 0 : index
    %c0_1 = arith.constant 0 : index
    %3 = vector.load %arg1[%c0, %c0_1] : memref<512x512xbf16, #tpu.memory_space<vmem>>, vector<512x512xbf16>
    %c0_2 = arith.constant 0 : index
    %c0_3 = arith.constant 0 : index
    %4 = vector.load %arg2[%c0_2, %c0_3] : memref<512x128xbf16, #tpu.memory_space<vmem>>, vector<512x128xbf16>
    %cst = arith.constant dense<0.000000e+00> : vector<512x128xf32>
    %5 = tpu.matmul %3, %4, %cst {dimension_numbers = #tpu.dot_dimension_numbers<[1], [0], [0], [1], [0, 0, 1, 1], [], []>} : vector<512x512xbf16>, vector<512x128xbf16>, vector<512x128xf32> -> vector<512x128xf32>
    %6 = arith.truncf %5 : vector<512x128xf32> to vector<512x128xbf16>
    %c0_4 = arith.constant 0 : index
    %c0_5 = arith.constant 0 : index
    %7 = vector.load %arg6[%c0_4, %c0_5] : memref<512x128xbf16, #tpu.memory_space<vmem>>, vector<512x128xbf16>
    tpu.vector_store %arg6[%c0_4, %c0_5], %6 {strides = array<i32>} : memref<512x128xbf16, #tpu.memory_space<vmem>>, vector<512x128xbf16>,
    %c0_6 = arith.constant 0 : index
    %c0_7 = arith.constant 0 : index
    %8 = vector.load %arg4[%c0_6, %c0_7] : memref<512x128xf32, #tpu.memory_space<vmem>>, vector<512x128xf32>
    %cst_8 = arith.constant 0.333333343 : f32
    %9 = vector.broadcast %cst_8 : f32 to vector<512x128xf32>
    %10 = arith.mulf %9, %5 : vector<512x128xf32>
    %11 = arith.addf %8, %10 : vector<512x128xf32>
    %c0_9 = arith.constant 0 : index
    %c0_10 = arith.constant 0 : index
    %12 = vector.load %arg7[%c0_9, %c0_10] : memref<512x128xf32, #tpu.memory_space<vmem>>, vector<512x128xf32>
    tpu.vector_store %arg7[%c0_9, %c0_10], %11 {strides = array<i32>} : memref<512x128xf32, #tpu.memory_space<vmem>>, vector<512x128xf32>,
    %c0_11 = arith.constant 0 : index
    %c0_12 = arith.constant 0 : index
    %13 = vector.load %arg10[%c0_11, %c0_12] : memref<512x128xf32, #tpu.memory_space<vmem>>, vector<512x128xf32>
    %c0_13 = arith.constant 0 : index
    %c0_14 = arith.constant 0 : index
    %14 = vector.load %arg3[%c0_13, %c0_14] : memref<512x128xbf16, #tpu.memory_space<vmem>>, vector<512x128xbf16>
    %cst_15 = arith.constant dense<0.000000e+00> : vector<512x128xf32>
    %15 = tpu.matmul %3, %14, %cst_15 {dimension_numbers = #tpu.dot_dimension_numbers<[0], [0], [1], [1], [0, 1, 1, 1], [], []>} : vector<512x512xbf16>, vector<512x128xbf16>, vector<512x128xf32> -> vector<512x128xf32>
    %16 = arith.addf %13, %15 : vector<512x128xf32>
    %c0_16 = arith.constant 0 : index
    %c0_17 = arith.constant 0 : index
    %17 = vector.load %arg10[%c0_16, %c0_17] : memref<512x128xf32, #tpu.memory_space<vmem>>, vector<512x128xf32>
    tpu.vector_store %arg10[%c0_16, %c0_17], %16 {strides = array<i32>} : memref<512x128xf32, #tpu.memory_space<vmem>>, vector<512x128xf32>,
    %c1_i32 = arith.constant 1 : i32
    %18 = arith.cmpi eq, %arg0, %c1_i32 : i32
    %19 = arith.extui %18 : i1 to i32
    %c0_i32_18 = arith.constant 0 : i32
    %20 = arith.cmpi ne, %19, %c0_i32_18 : i32
    scf.if %20 {
      %c0_19 = arith.constant 0 : index
      %c0_20 = arith.constant 0 : index
      %21 = vector.load %arg10[%c0_19, %c0_20] : memref<512x128xf32, #tpu.memory_space<vmem>>, vector<512x128xf32>
      %cst_21 = arith.constant 5.000000e-01 : f32
      %22 = vector.broadcast %cst_21 : f32 to vector<512x128xf32>
      %23 = arith.mulf %21, %22 : vector<512x128xf32>
      %24 = arith.truncf %23 : vector<512x128xf32> to vector<512x128xbf16>
      %c0_22 = arith.constant 0 : index
      %c0_23 = arith.constant 0 : index
      %25 = vector.load %arg8[%c0_22, %c0_23] : memref<512x128xbf16, #tpu.memory_space<vmem>>, vector<512x128xbf16>
      tpu.vector_store %arg8[%c0_22, %c0_23], %24 {strides = array<i32>} : memref<512x128xbf16, #tpu.memory_space<vmem>>, vector<512x128xbf16>,
      %c0_24 = arith.constant 0 : index
      %c0_25 = arith.constant 0 : index
      %26 = vector.load %arg5[%c0_24, %c0_25] : memref<512x128xf32, #tpu.memory_space<vmem>>, vector<512x128xf32>
      %cst_26 = arith.constant 0.166666672 : f32
      %27 = vector.broadcast %cst_26 : f32 to vector<512x128xf32>
      %28 = arith.mulf %27, %21 : vector<512x128xf32>
      %29 = arith.addf %26, %28 : vector<512x128xf32>
      %c0_27 = arith.constant 0 : index
      %c0_28 = arith.constant 0 : index
      %30 = vector.load %arg9[%c0_27, %c0_28] : memref<512x128xf32, #tpu.memory_space<vmem>>, vector<512x128xf32>
      tpu.vector_store %arg9[%c0_27, %c0_28], %29 {strides = array<i32>} : memref<512x128xf32, #tpu.memory_space<vmem>>, vector<512x128xf32>,
    } else {
    }
    return
  }
  func.func @transform_0(%arg0: i32) -> (i32, i32) {
    %c0_i32 = arith.constant 0 : i32
    %c0_i32_0 = arith.constant 0 : i32
    return %arg0, %c0_i32 : i32, i32
  }
  func.func @transform_1(%arg0: i32) -> (i32, i32) {
    %c0_i32 = arith.constant 0 : i32
    %c0_i32_0 = arith.constant 0 : i32
    %c0_i32_1 = arith.constant 0 : i32
    return %c0_i32, %c0_i32_0 : i32, i32
  }
  func.func @transform_2(%arg0: i32) -> (i32, i32) {
    %c0_i32 = arith.constant 0 : i32
    %c0_i32_0 = arith.constant 0 : i32
    return %arg0, %c0_i32 : i32, i32
  }
  func.func @transform_3(%arg0: i32) -> (i32, i32) {
    %c0_i32 = arith.constant 0 : i32
    %c0_i32_0 = arith.constant 0 : i32
    return %arg0, %c0_i32 : i32, i32
  }
  func.func @transform_4(%arg0: i32) -> (i32, i32) {
    %c0_i32 = arith.constant 0 : i32
    %c0_i32_0 = arith.constant 0 : i32
    %c0_i32_1 = arith.constant 0 : i32
    return %c0_i32, %c0_i32_0 : i32, i32
  }
  func.func @transform_5(%arg0: i32) -> (i32, i32) {
    %c0_i32 = arith.constant 0 : i32
    %c0_i32_0 = arith.constant 0 : i32
    return %arg0, %c0_i32 : i32, i32
  }
  func.func @transform_6(%arg0: i32) -> (i32, i32) {
    %c0_i32 = arith.constant 0 : i32
    %c0_i32_0 = arith.constant 0 : i32
    return %arg0, %c0_i32 : i32, i32
  }
  func.func @transform_7(%arg0: i32) -> (i32, i32) {
    %c0_i32 = arith.constant 0 : i32
    %c0_i32_0 = arith.constant 0 : i32
    %c0_i32_1 = arith.constant 0 : i32
    return %c0_i32, %c0_i32_0 : i32, i32
  }
  func.func @transform_8(%arg0: i32) -> (i32, i32) {
    %c0_i32 = arith.constant 0 : i32
    %c0_i32_0 = arith.constant 0 : i32
    %c0_i32_1 = arith.constant 0 : i32
    return %c0_i32, %c0_i32_0 : i32, i32
  }
}

</mosaic_0001>

<llo_original>
// kernel: tpu_custom_call.1
$region0: #{tpu_custom_call.1}
  #allocation0 [shape = 'u32[]', space=smem, size = 0x4, offset = 0x4, fixed_abs, tag = 'smem constant byte address 0x4 - core index']
  #allocation1 [shape = 'u32[144,128]{1,0:T(1,128)}', space=vmem, size = 0x12000, scoped, tag = 'internal scratch']
  #allocation2 [shape = 'f32[512,128]{1,0:T(8,128)}', space=vmem, size = 0x40000, scoped, tag = 'scratch operand']
  %s0 = inlined_call_operand.hbm [shape: bf16[1024,512], index: 0, kind: input, shape index: {}]
  %s1 = inlined_call_operand.hbm [shape: bf16[512,128], index: 1, kind: input, shape index: {}]
  %s2 = inlined_call_operand.hbm [shape: bf16[1024,128], index: 2, kind: input, shape index: {}]
  %s3 = inlined_call_operand.hbm [shape: f32[1024,128], index: 3, kind: input, shape index: {}]
  %s4 = inlined_call_operand.hbm [shape: f32[512,128], index: 4, kind: input, shape index: {}]
  %s5 = inlined_call_operand.hbm [shape: bf16[1024,128], index: 5, kind: output, shape index: {0}]
  %s6 = inlined_call_operand.hbm [shape: f32[1024,128], index: 6, kind: output, shape index: {1}]
  %s7 = inlined_call_operand.hbm [shape: bf16[512,128], index: 7, kind: output, shape index: {2}]
  %s8 = inlined_call_operand.hbm [shape: f32[512,128], index: 8, kind: output, shape index: {3}]
  %9 = xla_tuple %s5, %s6, %s7, %s8
  %s10 = sld [smem:[#allocation0]]
  $region105: #{tpu_custom_call.1} parent=0
    _
  %s12 = ssub.s32 1, %s10
  %s13 = scalar_select 0, %s12, %s10
  $region1: #{tpu_custom_call.1} parent=0
    #allocation3 [shape = 'u8[1048576]{0}', space=vmem, size = 0x100000, scoped, tag = 'input window, operand 0']
    #allocation4 [shape = 's32[2]{0}', space=sflag, size = 0x8, scoped, tag = 'scoped memory for tpu_custom_call.1']
    #allocation5 [shape = 's32[2]{0}', space=sflag, size = 0x8, scoped, tag = 'scoped memory for tpu_custom_call.1']
    #allocation6 [shape = 'u8[131072]{0}', space=vmem, size = 0x20000, scoped, tag = 'input window, operand 1, single buffered']
    #allocation7 [shape = 's32[1]{0}', space=sflag, size = 0x4, scoped, tag = 'scoped memory for tpu_custom_call.1']
    #allocation8 [shape = 'u8[262144]{0}', space=vmem, size = 0x40000, scoped, tag = 'input window, operand 2']
    #allocation9 [shape = 'u8[524288]{0}', space=vmem, size = 0x80000, scoped, tag = 'input window, operand 3']
    #allocation10 [shape = 'u8[262144]{0}', space=vmem, size = 0x40000, scoped, tag = 'input window, operand 4, single buffered']
    #allocation11 [shape = 'u8[262144]{0}', space=vmem, size = 0x40000, scoped, tag = 'output window, operand 0']
    #allocation12 [shape = 'u8[524288]{0}', space=vmem, size = 0x80000, scoped, tag = 'output window, operand 1']
    #allocation13 [shape = 's32[2]{0}', space=sflag, size = 0x8, scoped, tag = 'scoped memory for tpu_custom_call.1']
    #allocation14 [shape = 'u8[131072]{0}', space=vmem, size = 0x20000, scoped, tag = 'output window, operand 2, single buffered']
    #allocation15 [shape = 'u8[262144]{0}', space=vmem, size = 0x40000, scoped, tag = 'output window, operand 3, single buffered']
    #allocation16 [shape = 's32[1]{0}', space=sflag, size = 0x4, scoped, tag = 'scoped memory for tpu_custom_call.1']
    %14 = vsyncpa [#allocation4], 0
    %s15 = scalar_lea.sflag [#allocation4], 1
    %16 = vsyncpa %s15, 0
    %17 = vsyncpa [#allocation7], 0
    %18 = vsyncpa [#allocation5], 0
    %s19 = scalar_lea.sflag [#allocation5], 1
    %20 = vsyncpa %s19, 0
    %21 = vsyncpa [#allocation13], 0
    %s22 = scalar_lea.sflag [#allocation13], 1
    %23 = vsyncpa %s22, 0
    %24 = vsyncpa [#allocation16], 0
    loop: start=0, step=1, limit=4
    $region2: #{tpu_custom_call.1} parent=1 // loop_pre_header
      _
    $region3: #{tpu_custom_call.1} parent=1 // loop_header
      %s26 = sphi 0, %s30
      %p27 = scmp.ge.s32.totalorder %s26, 4
      %s36 = sphi 0, %s38
      %s39 = sphi 0, %s36
      %s40 = sphi 0, %s39
      %s56 = sphi 0, %s40
      %s60 = sphi 0, %s60
      %s62 = sphi 0, %s60
      %s63 = sphi 0, %s62
      %s77 = sphi 0, %s63
      %s83 = sphi 0, %s85
      %s86 = sphi 0, %s83
      %s87 = sphi 0, %s86
      %s103 = sphi 0, %s87
      %s109 = sphi 0, %s111
      %s112 = sphi 0, %s109
      %s113 = sphi 0, %s112
      %s129 = sphi 0, %s113
      %s133 = sphi 0, %s133
      %s135 = sphi 0, %s133
      %s136 = sphi 0, %s135
      %s150 = sphi 0, %s136
      %s156 = sphi 0, %s158
      %s159 = sphi 0, %s156
      %s160 = sphi 0, %s159
      %s176 = sphi 0, %s160
      %s182 = sphi 0, %s184
      %s185 = sphi 0, %s182
      %s186 = sphi 0, %s185
      %s202 = sphi 0, %s186
      %s206 = sphi 0, %s206
      %s208 = sphi 0, %s206
      %s209 = sphi 0, %s208
      %s223 = sphi 0, %s209
      %s227 = sphi 0, %s227
      %s229 = sphi 0, %s227
      %s230 = sphi 0, %s229
      %s244 = sphi 0, %s230
    $region4: #{tpu_custom_call.1} parent=1 // loop_header_branch
      %29 = sbr.rel (%p27) target = $region8
    $region5: #{tpu_custom_call.1} parent=1 // loop_body
      %s31 = ssub.s32 %s26, 1
      %s32 = ssub.s32 %s26, 2
      %s33 = sadd.s32 %s26, 1
      %s34 = ssub.s32 %s26, %s33
      %p35 = scmp.eq.s32.totalorder %s34, 0
      %s37 = sadd.s32 %s36, 1
      %s38 = scalar_select %p35, %s36, %s37
      %p41 = pneg %p35
      %p42 = scmp.eq.s32.totalorder %s26, 1
      %p43 = por %p41, %p42
      %p44 = scmp.ne.s32.totalorder %s36, %s39
      %p45 = scmp.eq.s32.totalorder %s26, 0
      %p46 = por %p44, %p45
      %p47 = scmp.ne.s32.totalorder %s36, %s39
      %p48 = scmp.eq.s32.totalorder %s31, 1
      %p49 = por %p47, %p48
      %p50 = scmp.ne.s32.totalorder %s39, %s40
      %p51 = scmp.eq.s32.totalorder %s31, 0
      %p52 = por %p50, %p51
      %p53 = scmp.ne.s32.totalorder %s39, %s40
      %p54 = scmp.eq.s32.totalorder %s32, 1
      %p55 = por %p53, %p54
      %p57 = scmp.ne.s32.totalorder %s40, %s56
      %p58 = scmp.eq.s32.totalorder %s32, 0
      %p59 = por %p57, %p58
      %s61 = sadd.s32 %s60, 1
      %p64 = scmp.eq.s32.totalorder %s26, 1
      %p65 = scmp.ne.s32.totalorder %s60, %s62
      %p66 = scmp.eq.s32.totalorder %s26, 0
      %p67 = por %p65, %p66
      %p68 = scmp.ne.s32.totalorder %s60, %s62
      %p69 = scmp.eq.s32.totalorder %s31, 1
      %p70 = por %p68, %p69
      %p71 = scmp.ne.s32.totalorder %s62, %s63
      %p72 = scmp.eq.s32.totalorder %s31, 0
      %p73 = por %p71, %p72
      %p74 = scmp.ne.s32.totalorder %s62, %s63
      %p75 = scmp.eq.s32.totalorder %s32, 1
      %p76 = por %p74, %p75
      %p78 = scmp.ne.s32.totalorder %s63, %s77
      %p79 = scmp.eq.s32.totalorder %s32, 0
      %p80 = por %p78, %p79
      %s81 = ssub.s32 %s26, %s33
      %p82 = scmp.eq.s32.totalorder %s81, 0
      %s84 = sadd.s32 %s83, 1
      %s85 = scalar_select %p82, %s83, %s84
      %p88 = pneg %p82
      %p89 = scmp.eq.s32.totalorder %s26, 1
      %p90 = por %p88, %p89
      %p91 = scmp.ne.s32.totalorder %s83, %s86
      %p92 = scmp.eq.s32.totalorder %s26, 0
      %p93 = por %p91, %p92
      %p94 = scmp.ne.s32.totalorder %s83, %s86
      %p95 = scmp.eq.s32.totalorder %s31, 1
      %p96 = por %p94, %p95
      %p97 = scmp.ne.s32.totalorder %s86, %s87
      %p98 = scmp.eq.s32.totalorder %s31, 0
      %p99 = por %p97, %p98
      %p100 = scmp.ne.s32.totalorder %s86, %s87
      %p101 = scmp.eq.s32.totalorder %s32, 1
      %p102 = por %p100, %p101
      %p104 = scmp.ne.s32.totalorder %s87, %s103
      %p105 = scmp.eq.s32.totalorder %s32, 0
      %p106 = por %p104, %p105
      %s107 = ssub.s32 %s26, %s33
      %p108 = scmp.eq.s32.totalorder %s107, 0
      %s110 = sadd.s32 %s109, 1
      %s111 = scalar_select %p108, %s109, %s110
      %p114 = pneg %p108
      %p115 = scmp.eq.s32.totalorder %s26, 1
      %p116 = por %p114, %p115
      %p117 = scmp.ne.s32.totalorder %s109, %s112
      %p118 = scmp.eq.s32.totalorder %s26, 0
      %p119 = por %p117, %p118
      %p120 = scmp.ne.s32.totalorder %s109, %s112
      %p121 = scmp.eq.s32.totalorder %s31, 1
      %p122 = por %p120, %p121
      %p123 = scmp.ne.s32.totalorder %s112, %s113
      %p124 = scmp.eq.s32.totalorder %s31, 0
      %p125 = por %p123, %p124
      %p126 = scmp.ne.s32.totalorder %s112, %s113
      %p127 = scmp.eq.s32.totalorder %s32, 1
      %p128 = por %p126, %p127
      %p130 = scmp.ne.s32.totalorder %s113, %s129
      %p131 = scmp.eq.s32.totalorder %s32, 0
      %p132 = por %p130, %p131
      %s134 = sadd.s32 %s133, 1
      %p137 = scmp.eq.s32.totalorder %s26, 1
      %p138 = scmp.ne.s32.totalorder %s133, %s135
      %p139 = scmp.eq.s32.totalorder %s26, 0
      %p140 = por %p138, %p139
      %p141 = scmp.ne.s32.totalorder %s133, %s135
      %p142 = scmp.eq.s32.totalorder %s31, 1
      %p143 = por %p141, %p142
      %p144 = scmp.ne.s32.totalorder %s135, %s136
      %p145 = scmp.eq.s32.totalorder %s31, 0
      %p146 = por %p144, %p145
      %p147 = scmp.ne.s32.totalorder %s135, %s136
      %p148 = scmp.eq.s32.totalorder %s32, 1
      %p149 = por %p147, %p148
      %p151 = scmp.ne.s32.totalorder %s136, %s150
      %p152 = scmp.eq.s32.totalorder %s32, 0
      %p153 = por %p151, %p152
      %s154 = ssub.s32 %s26, %s33
      %p155 = scmp.eq.s32.totalorder %s154, 0
      %s157 = sadd.s32 %s156, 1
      %s158 = scalar_select %p155, %s156, %s157
      %p161 = pneg %p155
      %p162 = scmp.eq.s32.totalorder %s26, 1
      %p163 = por %p161, %p162
      %p164 = scmp.ne.s32.totalorder %s156, %s159
      %p165 = scmp.eq.s32.totalorder %s26, 0
      %p166 = por %p164, %p165
      %p167 = scmp.ne.s32.totalorder %s156, %s159
      %p168 = scmp.eq.s32.totalorder %s31, 1
      %p169 = por %p167, %p168
      %p170 = scmp.ne.s32.totalorder %s159, %s160
      %p171 = scmp.eq.s32.totalorder %s31, 0
      %p172 = por %p170, %p171
      %p173 = scmp.ne.s32.totalorder %s159, %s160
      %p174 = scmp.eq.s32.totalorder %s32, 1
      %p175 = por %p173, %p174
      %p177 = scmp.ne.s32.totalorder %s160, %s176
      %p178 = scmp.eq.s32.totalorder %s32, 0
      %p179 = por %p177, %p178
      %s180 = ssub.s32 %s26, %s33
      %p181 = scmp.eq.s32.totalorder %s180, 0
      %s183 = sadd.s32 %s182, 1
      %s184 = scalar_select %p181, %s182, %s183
      %p187 = pneg %p181
      %p188 = scmp.eq.s32.totalorder %s26, 1
      %p189 = por %p187, %p188
      %p190 = scmp.ne.s32.totalorder %s182, %s185
      %p191 = scmp.eq.s32.totalorder %s26, 0
      %p192 = por %p190, %p191
      %p193 = scmp.ne.s32.totalorder %s182, %s185
      %p194 = scmp.eq.s32.totalorder %s31, 1
      %p195 = por %p193, %p194
      %p196 = scmp.ne.s32.totalorder %s185, %s186
      %p197 = scmp.eq.s32.totalorder %s31, 0
      %p198 = por %p196, %p197
      %p199 = scmp.ne.s32.totalorder %s185, %s186
      %p200 = scmp.eq.s32.totalorder %s32, 1
      %p201 = por %p199, %p200
      %p203 = scmp.ne.s32.totalorder %s186, %s202
      %p204 = scmp.eq.s32.totalorder %s32, 0
      %p205 = por %p203, %p204
      %s207 = sadd.s32 %s206, 1
      %p210 = scmp.eq.s32.totalorder %s26, 1
      %p211 = scmp.ne.s32.totalorder %s206, %s208
      %p212 = scmp.eq.s32.totalorder %s26, 0
      %p213 = por %p211, %p212
      %p214 = scmp.ne.s32.totalorder %s206, %s208
      %p215 = scmp.eq.s32.totalorder %s31, 1
      %p216 = por %p214, %p215
      %p217 = scmp.ne.s32.totalorder %s208, %s209
      %p218 = scmp.eq.s32.totalorder %s31, 0
      %p219 = por %p217, %p218
      %p220 = scmp.ne.s32.totalorder %s208, %s209
      %p221 = scmp.eq.s32.totalorder %s32, 1
      %p222 = por %p220, %p221
      %p224 = scmp.ne.s32.totalorder %s209, %s223
      %p225 = scmp.eq.s32.totalorder %s32, 0
      %p226 = por %p224, %p225
      %s228 = sadd.s32 %s227, 1
      %p231 = scmp.eq.s32.totalorder %s26, 1
      %p232 = scmp.ne.s32.totalorder %s227, %s229
      %p233 = scmp.eq.s32.totalorder %s26, 0
      %p234 = por %p232, %p233
      %p235 = scmp.ne.s32.totalorder %s227, %s229
      %p236 = scmp.eq.s32.totalorder %s31, 1
      %p237 = por %p235, %p236
      %p238 = scmp.ne.s32.totalorder %s229, %s230
      %p239 = scmp.eq.s32.totalorder %s31, 0
      %p240 = por %p238, %p239
      %p241 = scmp.ne.s32.totalorder %s229, %s230
      %p242 = scmp.eq.s32.totalorder %s32, 1
      %p243 = por %p241, %p242
      %p245 = scmp.ne.s32.totalorder %s230, %s244
      %p246 = scmp.eq.s32.totalorder %s32, 0
      %p247 = por %p245, %p246
      %p248 = scmp.le.s32.totalorder 1, %s26
      %p249 = scmp.lt.s32.totalorder %s26, 3
      %p250 = pnand %p248, %p249
      %p251 = pneg %p250
      // Predicated region
      $region9: #{tpu_custom_call.1} parent=5 // pred_check
        _
      $region10: #{tpu_custom_call.1} parent=5 // pred_check_branch
        %253 = sbr.rel (%p250) target = $region12
      $region11: #{tpu_custom_call.1} parent=5 // pred_region
        %s254 = ssub.s32 %s26, 1
        // Predicated region
        $region13: #{tpu_custom_call.1} parent=11 // pred_check
          %p255 = pneg %p73
        $region14: #{tpu_custom_call.1} parent=11 // pred_check_branch
          %257 = sbr.rel (%p255) target = $region16
        $region15: #{tpu_custom_call.1} parent=11 // pred_region
          %s259 = ssub.s32 4096, 4096
          %260 = vsyncadd [#allocation7], %s259
          %s261 = sshll.u32 [#allocation6], 4
          %s262 = int_to_ptr.vmem [resolvable:$true] %s261
          %267 = dma.hbm_to_vmem [thread:$0]  %s1, 4096, %s262, [#allocation7], 64, 64, 4
        $region16: #{tpu_custom_call.1} parent=11 // pred_fallthru
          _
        // Predicated region
        $region17: #{tpu_custom_call.1} parent=11 // pred_check
          %p268 = pneg %p146
        $region18: #{tpu_custom_call.1} parent=11 // pred_check_branch
          %270 = sbr.rel (%p268) target = $region20
        $region19: #{tpu_custom_call.1} parent=11 // pred_region
          %s272 = ssub.s32 8192, 8192
          %273 = vsyncadd [#allocation7], %s272
          %s274 = sshll.u32 [#allocation10], 4
          %s275 = int_to_ptr.vmem [resolvable:$true] %s274
          %280 = dma.hbm_to_vmem [thread:$0]  %s4, 8192, %s275, [#allocation7], 128, 128, 8
        $region20: #{tpu_custom_call.1} parent=11 // pred_fallthru
          _
      $region12: #{tpu_custom_call.1} parent=5 // pred_fallthru
        _
      %p281 = scmp.lt.s32.totalorder %s26, 2
      // Predicated region
      $region21: #{tpu_custom_call.1} parent=5 // pred_check
        %p282 = pneg %p281
      $region22: #{tpu_custom_call.1} parent=5 // pred_check_branch
        %284 = sbr.rel (%p282) target = $region24
      $region23: #{tpu_custom_call.1} parent=5 // pred_region
        // Predicated region
        $region25: #{tpu_custom_call.1} parent=23 // pred_check
          %p285 = pneg %p46
        $region26: #{tpu_custom_call.1} parent=23 // pred_check_branch
          %287 = sbr.rel (%p285) target = $region28
        $region27: #{tpu_custom_call.1} parent=23 // pred_region
          %s288 = sand.u32 %s26, 1
          %s289 = scalar_lea.sflag [#allocation4], %s288
          %s290 = sand.u32 %s36, 1
          %s291 = smul.addr %s290, 1024
          %s292 = scalar_lea.vmem [#allocation3], %s291
          %s293 = smul.u32 64, %s26
          %s295 = ssub.s32 16384, 16384
          %296 = vsyncadd %s289, %s295
          %s297 = smul.addr %s293, 4
          %s298 = smul.addr %s297, 64
          %s299 = scalar_lea.hbm %s0, %s298
          %s300 = sshll.u32 %s292, 4
          %s301 = int_to_ptr.vmem [resolvable:$true] %s300
          %306 = dma.hbm_to_vmem [thread:$0]  %s299, 16384, %s301, %s289, 256, 256, 16
        $region28: #{tpu_custom_call.1} parent=23 // pred_fallthru
          _
        // Predicated region
        $region29: #{tpu_custom_call.1} parent=23 // pred_check
          %p307 = pneg %p93
        $region30: #{tpu_custom_call.1} parent=23 // pred_check_branch
          %309 = sbr.rel (%p307) target = $region32
        $region31: #{tpu_custom_call.1} parent=23 // pred_region
          %s310 = sand.u32 %s26, 1
          %s311 = scalar_lea.sflag [#allocation4], %s310
          %s312 = sand.u32 %s83, 1
          %s313 = smul.addr %s312, 256
          %s314 = scalar_lea.vmem [#allocation8], %s313
          %s315 = smul.u32 64, %s26
          %s317 = ssub.s32 4096, 4096
          %318 = vsyncadd %s311, %s317
          %s319 = smul.addr %s315, 64
          %s320 = scalar_lea.hbm %s2, %s319
          %s321 = sshll.u32 %s314, 4
          %s322 = int_to_ptr.vmem [resolvable:$true] %s321
          %327 = dma.hbm_to_vmem [thread:$0]  %s320, 4096, %s322, %s311, 64, 64, 4
        $region32: #{tpu_custom_call.1} parent=23 // pred_fallthru
          _
        // Predicated region
        $region33: #{tpu_custom_call.1} parent=23 // pred_check
          %p328 = pneg %p119
        $region34: #{tpu_custom_call.1} parent=23 // pred_check_branch
          %330 = sbr.rel (%p328) target = $region36
        $region35: #{tpu_custom_call.1} parent=23 // pred_region
          %s331 = sand.u32 %s26, 1
          %s332 = scalar_lea.sflag [#allocation4], %s331
          %s333 = sand.u32 %s109, 1
          %s334 = smul.addr %s333, 512
          %s335 = scalar_lea.vmem [#allocation9], %s334
          %s336 = smul.u32 64, %s26
          %s338 = ssub.s32 8192, 8192
          %339 = vsyncadd %s332, %s338
          %s340 = smul.addr %s336, 128
          %s341 = scalar_lea.hbm %s3, %s340
          %s342 = sshll.u32 %s335, 4
          %s343 = int_to_ptr.vmem [resolvable:$true] %s342
          %348 = dma.hbm_to_vmem [thread:$0]  %s341, 8192, %s343, %s332, 128, 128, 8
        $region36: #{tpu_custom_call.1} parent=23 // pred_fallthru
          _
      $region24: #{tpu_custom_call.1} parent=5 // pred_fallthru
        _
      %p349 = scmp.le.s32.totalorder 1, %s26
      %p350 = scmp.lt.s32.totalorder %s26, 3
      %p351 = pnand %p349, %p350
      %p352 = pneg %p351
      // Predicated region
      $region37: #{tpu_custom_call.1} parent=5 // pred_check
        _
      $region38: #{tpu_custom_call.1} parent=5 // pred_check_branch
        %354 = sbr.rel (%p351) target = $region40
      $region39: #{tpu_custom_call.1} parent=5 // pred_region
        %s355 = ssub.s32 %s26, 1
        %s356 = sand.u32 %s31, 1
        %s357 = scalar_lea.sflag [#allocation4], %s356
        %s358 = sand.u32 %s39, 1
        %s359 = smul.addr %s358, 1024
        %s360 = scalar_lea.vmem [#allocation3], %s359
        // Predicated region
        $region41: #{tpu_custom_call.1} parent=39 // pred_check
          %p361 = pneg %p52
        $region42: #{tpu_custom_call.1} parent=39 // pred_check_branch
          %363 = sbr.rel (%p361) target = $region44
        $region43: #{tpu_custom_call.1} parent=39 // pred_region
          %364 = dma.done %s357, 16384
        $region44: #{tpu_custom_call.1} parent=39 // pred_fallthru
          _
        // Predicated region
        $region45: #{tpu_custom_call.1} parent=39 // pred_check
          %p365 = pneg %p73
        $region46: #{tpu_custom_call.1} parent=39 // pred_check_branch
          %367 = sbr.rel (%p365) target = $region48
        $region47: #{tpu_custom_call.1} parent=39 // pred_region
          %368 = dma.done [#allocation7], 4096
        $region48: #{tpu_custom_call.1} parent=39 // pred_fallthru
          _
        %s369 = sand.u32 %s31, 1
        %s370 = scalar_lea.sflag [#allocation4], %s369
        %s371 = sand.u32 %s86, 1
        %s372 = smul.addr %s371, 256
        %s373 = scalar_lea.vmem [#allocation8], %s372
        // Predicated region
        $region49: #{tpu_custom_call.1} parent=39 // pred_check
          %p374 = pneg %p99
        $region50: #{tpu_custom_call.1} parent=39 // pred_check_branch
          %376 = sbr.rel (%p374) target = $region52
        $region51: #{tpu_custom_call.1} parent=39 // pred_region
          %377 = dma.done %s370, 4096
        $region52: #{tpu_custom_call.1} parent=39 // pred_fallthru
          _
        %s378 = sand.u32 %s31, 1
        %s379 = scalar_lea.sflag [#allocation4], %s378
        %s380 = sand.u32 %s112, 1
        %s381 = smul.addr %s380, 512
        %s382 = scalar_lea.vmem [#allocation9], %s381
        // Predicated region
        $region53: #{tpu_custom_call.1} parent=39 // pred_check
          %p383 = pneg %p125
        $region54: #{tpu_custom_call.1} parent=39 // pred_check_branch
          %385 = sbr.rel (%p383) target = $region56
        $region55: #{tpu_custom_call.1} parent=39 // pred_region
          %386 = dma.done %s379, 8192
        $region56: #{tpu_custom_call.1} parent=39 // pred_fallthru
          _
        // Predicated region
        $region57: #{tpu_custom_call.1} parent=39 // pred_check
          %p387 = pneg %p146
        $region58: #{tpu_custom_call.1} parent=39 // pred_check_branch
          %389 = sbr.rel (%p387) target = $region60
        $region59: #{tpu_custom_call.1} parent=39 // pred_region
          %390 = dma.done [#allocation7], 8192
        $region60: #{tpu_custom_call.1} parent=39 // pred_fallthru
          _
        %s391 = sand.u32 %s31, 1
        %s392 = scalar_lea.sflag [#allocation4], %s391
        %s393 = sand.u32 %s39, 1
        %s394 = smul.addr %s393, 1024
        %s395 = scalar_lea.vmem [#allocation3], %s394
        %p396 = pneg %p52
        %p397 = pneg %p49
        %p398 = pneg %p73
        %p399 = pneg %p70
        %s400 = sand.u32 %s31, 1
        %s401 = scalar_lea.sflag [#allocation4], %s400
        %s402 = sand.u32 %s86, 1
        %s403 = smul.addr %s402, 256
        %s404 = scalar_lea.vmem [#allocation8], %s403
        %p405 = pneg %p99
        %p406 = pneg %p96
        %s407 = sand.u32 %s31, 1
        %s408 = scalar_lea.sflag [#allocation4], %s407
        %s409 = sand.u32 %s112, 1
        %s410 = smul.addr %s409, 512
        %s411 = scalar_lea.vmem [#allocation9], %s410
        %p412 = pneg %p125
        %p413 = pneg %p122
        %p414 = pneg %p146
        %p415 = pneg %p143
        %p416 = pneg %p172
        %p417 = pneg %p169
        %s418 = sand.u32 %s159, 1
        %s419 = scalar_lea.sflag [#allocation5], %s418
        %s420 = sand.u32 %s159, 1
        %s421 = smul.addr %s420, 256
        %s422 = scalar_lea.vmem [#allocation11], %s421
        %p423 = pneg %p198
        %p424 = pneg %p195
        %s425 = sand.u32 %s31, 1
        %s426 = scalar_lea.sflag [#allocation13], %s425
        %s427 = sand.u32 %s185, 1
        %s428 = smul.addr %s427, 512
        %s429 = scalar_lea.vmem [#allocation12], %s428
        %p430 = pneg %p219
        %p431 = pneg %p216
        %p432 = pneg %p240
        %p433 = pneg %p237
        %s434 = smul.u32 64, %s31
        %s435 = smul.u32 64, %s31
        %s436 = smul.u32 64, %s31
        %s437 = smul.u32 64, %s31
        %s438 = smul.u32 64, %s31
        %p440 = scmp.eq.s32.totalorder %s31, 0
        // Predicated region
        $region61: #{tpu_custom_call.1} parent=39 // pred_check
          %p441 = pneg %p440
        $region62: #{tpu_custom_call.1} parent=39 // pred_check_branch
          %443 = sbr.rel (%p441) target = $region64
        $region63: #{tpu_custom_call.1} parent=39 // pred_region
          %444 = vst [vmem:[#allocation2] sm:$0xff] 0.0
          %445 = vst [vmem:[#allocation2 + $0x8] sm:$0xff] 0.0
          %446 = vst [vmem:[#allocation2 + $0x10] sm:$0xff] 0.0
          %447 = vst [vmem:[#allocation2 + $0x18] sm:$0xff] 0.0
          %448 = vst [vmem:[#allocation2 + $0x20] sm:$0xff] 0.0
          %449 = vst [vmem:[#allocation2 + $0x28] sm:$0xff] 0.0
          %450 = vst [vmem:[#allocation2 + $0x30] sm:$0xff] 0.0
          %451 = vst [vmem:[#allocation2 + $0x38] sm:$0xff] 0.0
          %452 = vst [vmem:[#allocation2 + $0x40] sm:$0xff] 0.0
          %453 = vst [vmem:[#allocation2 + $0x48] sm:$0xff] 0.0
          %454 = vst [vmem:[#allocation2 + $0x50] sm:$0xff] 0.0
          %455 = vst [vmem:[#allocation2 + $0x58] sm:$0xff] 0.0
          %456 = vst [vmem:[#allocation2 + $0x60] sm:$0xff] 0.0
          %457 = vst [vmem:[#allocation2 + $0x68] sm:$0xff] 0.0
          %458 = vst [vmem:[#allocation2 + $0x70] sm:$0xff] 0.0
          %459 = vst [vmem:[#allocation2 + $0x78] sm:$0xff] 0.0
          %460 = vst [vmem:[#allocation2 + $0x80] sm:$0xff] 0.0
          %461 = vst [vmem:[#allocation2 + $0x88] sm:$0xff] 0.0
          %462 = vst [vmem:[#allocation2 + $0x90] sm:$0xff] 0.0
          %463 = vst [vmem:[#allocation2 + $0x98] sm:$0xff] 0.0
          %464 = vst [vmem:[#allocation2 + $0xa0] sm:$0xff] 0.0
          %465 = vst [vmem:[#allocation2 + $0xa8] sm:$0xff] 0.0
          %466 = vst [vmem:[#allocation2 + $0xb0] sm:$0xff] 0.0
          %467 = vst [vmem:[#allocation2 + $0xb8] sm:$0xff] 0.0
          %468 = vst [vmem:[#allocation2 + $0xc0] sm:$0xff] 0.0
          %469 = vst [vmem:[#allocation2 + $0xc8] sm:$0xff] 0.0
          %470 = vst [vmem:[#allocation2 + $0xd0] sm:$0xff] 0.0
          %471 = vst [vmem:[#allocation2 + $0xd8] sm:$0xff] 0.0
          %472 = vst [vmem:[#allocation2 + $0xe0] sm:$0xff] 0.0
          %473 = vst [vmem:[#allocation2 + $0xe8] sm:$0xff] 0.0
          %474 = vst [vmem:[#allocation2 + $0xf0] sm:$0xff] 0.0
          %475 = vst [vmem:[#allocation2 + $0xf8] sm:$0xff] 0.0
          %476 = vst [vmem:[#allocation2 + $0x100] sm:$0xff] 0.0
          %477 = vst [vmem:[#allocation2 + $0x108] sm:$0xff] 0.0
          %478 = vst [vmem:[#allocation2 + $0x110] sm:$0xff] 0.0
          %479 = vst [vmem:[#allocation2 + $0x118] sm:$0xff] 0.0
          %480 = vst [vmem:[#allocation2 + $0x120] sm:$0xff] 0.0
          %481 = vst [vmem:[#allocation2 + $0x128] sm:$0xff] 0.0
          %482 = vst [vmem:[#allocation2 + $0x130] sm:$0xff] 0.0
          %483 = vst [vmem:[#allocation2 + $0x138] sm:$0xff] 0.0
          %484 = vst [vmem:[#allocation2 + $0x140] sm:$0xff] 0.0
          %485 = vst [vmem:[#allocation2 + $0x148] sm:$0xff] 0.0
          %486 = vst [vmem:[#allocation2 + $0x150] sm:$0xff] 0.0
          %487 = vst [vmem:[#allocation2 + $0x158] sm:$0xff] 0.0
          %488 = vst [vmem:[#allocation2 + $0x160] sm:$0xff] 0.0
          %489 = vst [vmem:[#allocation2 + $0x168] sm:$0xff] 0.0
          %490 = vst [vmem:[#allocation2 + $0x170] sm:$0xff] 0.0
          %491 = vst [vmem:[#allocation2 + $0x178] sm:$0xff] 0.0
          %492 = vst [vmem:[#allocation2 + $0x180] sm:$0xff] 0.0
          %493 = vst [vmem:[#allocation2 + $0x188] sm:$0xff] 0.0
          %494 = vst [vmem:[#allocation2 + $0x190] sm:$0xff] 0.0
          %495 = vst [vmem:[#allocation2 + $0x198] sm:$0xff] 0.0
          %496 = vst [vmem:[#allocation2 + $0x1a0] sm:$0xff] 0.0
          %497 = vst [vmem:[#allocation2 + $0x1a8] sm:$0xff] 0.0
          %498 = vst [vmem:[#allocation2 + $0x1b0] sm:$0xff] 0.0
          %499 = vst [vmem:[#allocation2 + $0x1b8] sm:$0xff] 0.0
          %500 = vst [vmem:[#allocation2 + $0x1c0] sm:$0xff] 0.0
          %501 = vst [vmem:[#allocation2 + $0x1c8] sm:$0xff] 0.0
          %502 = vst [vmem:[#allocation2 + $0x1d0] sm:$0xff] 0.0
          %503 = vst [vmem:[#allocation2 + $0x1d8] sm:$0xff] 0.0
          %504 = vst [vmem:[#allocation2 + $0x1e0] sm:$0xff] 0.0
          %505 = vst [vmem:[#allocation2 + $0x1e8] sm:$0xff] 0.0
          %506 = vst [vmem:[#allocation2 + $0x1f0] sm:$0xff] 0.0
          %507 = vst [vmem:[#allocation2 + $0x1f8] sm:$0xff] 0.0
        $region64: #{tpu_custom_call.1} parent=39 // pred_fallthru
          _
        %v508 = vld [vmem:[%s360] sm:$0xff]
        %v509 = vld [vmem:[%s360 + $0x8] sm:$0xff]
        %v510 = vld [vmem:[%s360 + $0x10] sm:$0xff]
        %v511 = vld [vmem:[%s360 + $0x18] sm:$0xff]
        %v512 = vld [vmem:[%s360 + $0x20] sm:$0xff]
        %v513 = vld [vmem:[%s360 + $0x28] sm:$0xff]
        %v514 = vld [vmem:[%s360 + $0x30] sm:$0xff]
        %v515 = vld [vmem:[%s360 + $0x38] sm:$0xff]
        %v516 = vld [vmem:[%s360 + $0x40] sm:$0xff]
        %v517 = vld [vmem:[%s360 + $0x48] sm:$0xff]
        %v518 = vld [vmem:[%s360 + $0x50] sm:$0xff]
        %v519 = vld [vmem:[%s360 + $0x58] sm:$0xff]
        %v520 = vld [vmem:[%s360 + $0x60] sm:$0xff]
        %v521 = vld [vmem:[%s360 + $0x68] sm:$0xff]
        %v522 = vld [vmem:[%s360 + $0x70] sm:$0xff]
        %v523 = vld [vmem:[%s360 + $0x78] sm:$0xff]
        %v524 = vld [vmem:[%s360 + $0x80] sm:$0xff]
        %v525 = vld [vmem:[%s360 + $0x88] sm:$0xff]
        %v526 = vld [vmem:[%s360 + $0x90] sm:$0xff]
        %v527 = vld [vmem:[%s360 + $0x98] sm:$0xff]
        %v528 = vld [vmem:[%s360 + $0xa0] sm:$0xff]
        %v529 = vld [vmem:[%s360 + $0xa8] sm:$0xff]
        %v530 = vld [vmem:[%s360 + $0xb0] sm:$0xff]
        %v531 = vld [vmem:[%s360 + $0xb8] sm:$0xff]
        %v532 = vld [vmem:[%s360 + $0xc0] sm:$0xff]
        %v533 = vld [vmem:[%s360 + $0xc8] sm:$0xff]
        %v534 = vld [vmem:[%s360 + $0xd0] sm:$0xff]
        %v535 = vld [vmem:[%s360 + $0xd8] sm:$0xff]
        %v536 = vld [vmem:[%s360 + $0xe0] sm:$0xff]
        %v537 = vld [vmem:[%s360 + $0xe8] sm:$0xff]
        %v538 = vld [vmem:[%s360 + $0xf0] sm:$0xff]
        %v539 = vld [vmem:[%s360 + $0xf8] sm:$0xff]
        %v540 = vld [vmem:[%s360 + $0x100] sm:$0xff]
        %v541 = vld [vmem:[%s360 + $0x108] sm:$0xff]
        %v542 = vld [vmem:[%s360 + $0x110] sm:$0xff]
        %v543 = vld [vmem:[%s360 + $0x118] sm:$0xff]
        %v544 = vld [vmem:[%s360 + $0x120] sm:$0xff]
        %v545 = vld [vmem:[%s360 + $0x128] sm:$0xff]
        %v546 = vld [vmem:[%s360 + $0x130] sm:$0xff]
        %v547 = vld [vmem:[%s360 + $0x138] sm:$0xff]
        %v548 = vld [vmem:[%s360 + $0x140] sm:$0xff]
        %v549 = vld [vmem:[%s360 + $0x148] sm:$0xff]
        %v550 = vld [vmem:[%s360 + $0x150] sm:$0xff]
        %v551 = vld [vmem:[%s360 + $0x158] sm:$0xff]
        %v552 = vld [vmem:[%s360 + $0x160] sm:$0xff]
        %v553 = vld [vmem:[%s360 + $0x168] sm:$0xff]
        %v554 = vld [vmem:[%s360 + $0x170] sm:$0xff]
        %v555 = vld [vmem:[%s360 + $0x178] sm:$0xff]
        %v556 = vld [vmem:[%s360 + $0x180] sm:$0xff]
        %v557 = vld [vmem:[%s360 + $0x188] sm:$0xff]
        %v558 = vld [vmem:[%s360 + $0x190] sm:$0xff]
        %v559 = vld [vmem:[%s360 + $0x198] sm:$0xff]
        %v560 = vld [vmem:[%s360 + $0x1a0] sm:$0xff]
        %v561 = vld [vmem:[%s360 + $0x1a8] sm:$0xff]
        %v562 = vld [vmem:[%s360 + $0x1b0] sm:$0xff]
        %v563 = vld [vmem:[%s360 + $0x1b8] sm:$0xff]
        %v564 = vld [vmem:[%s360 + $0x1c0] sm:$0xff]
        %v565 = vld [vmem:[%s360 + $0x1c8] sm:$0xff]
        %v566 = vld [vmem:[%s360 + $0x1d0] sm:$0xff]
        %v567 = vld [vmem:[%s360 + $0x1d8] sm:$0xff]
        %v568 = vld [vmem:[%s360 + $0x1e0] sm:$0xff]
        %v569 = vld [vmem:[%s360 + $0x1e8] sm:$0xff]
        %v570 = vld [vmem:[%s360 + $0x1f0] sm:$0xff]
        %v571 = vld [vmem:[%s360 + $0x1f8] sm:$0xff]
        %v572 = vld [vmem:[%s360 + $0x200] sm:$0xff]
        %v573 = vld [vmem:[%s360 + $0x208] sm:$0xff]
        %v574 = vld [vmem:[%s360 + $0x210] sm:$0xff]
        %v575 = vld [vmem:[%s360 + $0x218] sm:$0xff]
        %v576 = vld [vmem:[%s360 + $0x220] sm:$0xff]
        %v577 = vld [vmem:[%s360 + $0x228] sm:$0xff]
        %v578 = vld [vmem:[%s360 + $0x230] sm:$0xff]
        %v579 = vld [vmem:[%s360 + $0x238] sm:$0xff]
        %v580 = vld [vmem:[%s360 + $0x240] sm:$0xff]
        %v581 = vld [vmem:[%s360 + $0x248] sm:$0xff]
        %v582 = vld [vmem:[%s360 + $0x250] sm:$0xff]
        %v583 = vld [vmem:[%s360 + $0x258] sm:$0xff]
        %v584 = vld [vmem:[%s360 + $0x260] sm:$0xff]
        %v585 = vld [vmem:[%s360 + $0x268] sm:$0xff]
        %v586 = vld [vmem:[%s360 + $0x270] sm:$0xff]
        %v587 = vld [vmem:[%s360 + $0x278] sm:$0xff]
        %v588 = vld [vmem:[%s360 + $0x280] sm:$0xff]
        %v589 = vld [vmem:[%s360 + $0x288] sm:$0xff]
        %v590 = vld [vmem:[%s360 + $0x290] sm:$0xff]
        %v591 = vld [vmem:[%s360 + $0x298] sm:$0xff]
        %v592 = vld [vmem:[%s360 + $0x2a0] sm:$0xff]
        %v593 = vld [vmem:[%s360 + $0x2a8] sm:$0xff]
        %v594 = vld [vmem:[%s360 + $0x2b0] sm:$0xff]
        %v595 = vld [vmem:[%s360 + $0x2b8] sm:$0xff]
        %v596 = vld [vmem:[%s360 + $0x2c0] sm:$0xff]
        %v597 = vld [vmem:[%s360 + $0x2c8] sm:$0xff]
        %v598 = vld [vmem:[%s360 + $0x2d0] sm:$0xff]
        %v599 = vld [vmem:[%s360 + $0x2d8] sm:$0xff]
        %v600 = vld [vmem:[%s360 + $0x2e0] sm:$0xff]
        %v601 = vld [vmem:[%s360 + $0x2e8] sm:$0xff]
        %v602 = vld [vmem:[%s360 + $0x2f0] sm:$0xff]
        %v603 = vld [vmem:[%s360 + $0x2f8] sm:$0xff]
        %v604 = vld [vmem:[%s360 + $0x300] sm:$0xff]
        %v605 = vld [vmem:[%s360 + $0x308] sm:$0xff]
        %v606 = vld [vmem:[%s360 + $0x310] sm:$0xff]
        %v607 = vld [vmem:[%s360 + $0x318] sm:$0xff]
        %v608 = vld [vmem:[%s360 + $0x320] sm:$0xff]
        %v609 = vld [vmem:[%s360 + $0x328] sm:$0xff]
        %v610 = vld [vmem:[%s360 + $0x330] sm:$0xff]
        %v611 = vld [vmem:[%s360 + $0x338] sm:$0xff]
        %v612 = vld [vmem:[%s360 + $0x340] sm:$0xff]
        %v613 = vld [vmem:[%s360 + $0x348] sm:$0xff]
        %v614 = vld [vmem:[%s360 + $0x350] sm:$0xff]
        %v615 = vld [vmem:[%s360 + $0x358] sm:$0xff]
        %v616 = vld [vmem:[%s360 + $0x360] sm:$0xff]
        %v617 = vld [vmem:[%s360 + $0x368] sm:$0xff]
        %v618 = vld [vmem:[%s360 + $0x370] sm:$0xff]
        %v619 = vld [vmem:[%s360 + $0x378] sm:$0xff]
        %v620 = vld [vmem:[%s360 + $0x380] sm:$0xff]
        %v621 = vld [vmem:[%s360 + $0x388] sm:$0xff]
        %v622 = vld [vmem:[%s360 + $0x390] sm:$0xff]
        %v623 = vld [vmem:[%s360 + $0x398] sm:$0xff]
        %v624 = vld [vmem:[%s360 + $0x3a0] sm:$0xff]
        %v625 = vld [vmem:[%s360 + $0x3a8] sm:$0xff]
        %v626 = vld [vmem:[%s360 + $0x3b0] sm:$0xff]
        %v627 = vld [vmem:[%s360 + $0x3b8] sm:$0xff]
        %v628 = vld [vmem:[%s360 + $0x3c0] sm:$0xff]
        %v629 = vld [vmem:[%s360 + $0x3c8] sm:$0xff]
        %v630 = vld [vmem:[%s360 + $0x3d0] sm:$0xff]
        %v631 = vld [vmem:[%s360 + $0x3d8] sm:$0xff]
        %v632 = vld [vmem:[%s360 + $0x3e0] sm:$0xff]
        %v633 = vld [vmem:[%s360 + $0x3e8] sm:$0xff]
        %v634 = vld [vmem:[%s360 + $0x3f0] sm:$0xff]
        %v635 = vld [vmem:[%s360 + $0x3f8] sm:$0xff]
        %v636 = vld [vmem:[#allocation6] sm:$0xf]
        %v637 = vld [vmem:[#allocation6 + $0x4] sm:$0xf]
        %v638 = vld [vmem:[#allocation6 + $0x8] sm:$0xf]
        %v639 = vld [vmem:[#allocation6 + $0xc] sm:$0xf]
        %v640 = vld [vmem:[#allocation6 + $0x10] sm:$0xf]
        %v641 = vld [vmem:[#allocation6 + $0x14] sm:$0xf]
        %v642 = vld [vmem:[#allocation6 + $0x18] sm:$0xf]
        %v643 = vld [vmem:[#allocation6 + $0x1c] sm:$0xf]
        %v644 = vld [vmem:[#allocation6 + $0x20] sm:$0xf]
        %v645 = vld [vmem:[#allocation6 + $0x24] sm:$0xf]
        %v646 = vld [vmem:[#allocation6 + $0x28] sm:$0xf]
        %v647 = vld [vmem:[#allocation6 + $0x2c] sm:$0xf]
        %v648 = vld [vmem:[#allocation6 + $0x30] sm:$0xf]
        %v649 = vld [vmem:[#allocation6 + $0x34] sm:$0xf]
        %v650 = vld [vmem:[#allocation6 + $0x38] sm:$0xf]
        %v651 = vld [vmem:[#allocation6 + $0x3c] sm:$0xf]
        %v652 = vld [vmem:[#allocation6 + $0x40] sm:$0xf]
        %v653 = vld [vmem:[#allocation6 + $0x44] sm:$0xf]
        %v654 = vld [vmem:[#allocation6 + $0x48] sm:$0xf]
        %v655 = vld [vmem:[#allocation6 + $0x4c] sm:$0xf]
        %v656 = vld [vmem:[#allocation6 + $0x50] sm:$0xf]
        %v657 = vld [vmem:[#allocation6 + $0x54] sm:$0xf]
        %v658 = vld [vmem:[#allocation6 + $0x58] sm:$0xf]
        %v659 = vld [vmem:[#allocation6 + $0x5c] sm:$0xf]
        %v660 = vld [vmem:[#allocation6 + $0x60] sm:$0xf]
        %v661 = vld [vmem:[#allocation6 + $0x64] sm:$0xf]
        %v662 = vld [vmem:[#allocation6 + $0x68] sm:$0xf]
        %v663 = vld [vmem:[#allocation6 + $0x6c] sm:$0xf]
        %v664 = vld [vmem:[#allocation6 + $0x70] sm:$0xf]
        %v665 = vld [vmem:[#allocation6 + $0x74] sm:$0xf]
        %v666 = vld [vmem:[#allocation6 + $0x78] sm:$0xf]
        %v667 = vld [vmem:[#allocation6 + $0x7c] sm:$0xf]
        %v668 = vld [vmem:[#allocation6 + $0x80] sm:$0xf]
        %v669 = vld [vmem:[#allocation6 + $0x84] sm:$0xf]
        %v670 = vld [vmem:[#allocation6 + $0x88] sm:$0xf]
        %v671 = vld [vmem:[#allocation6 + $0x8c] sm:$0xf]
        %v672 = vld [vmem:[#allocation6 + $0x90] sm:$0xf]
        %v673 = vld [vmem:[#allocation6 + $0x94] sm:$0xf]
        %v674 = vld [vmem:[#allocation6 + $0x98] sm:$0xf]
        %v675 = vld [vmem:[#allocation6 + $0x9c] sm:$0xf]
        %v676 = vld [vmem:[#allocation6 + $0xa0] sm:$0xf]
        %v677 = vld [vmem:[#allocation6 + $0xa4] sm:$0xf]
        %v678 = vld [vmem:[#allocation6 + $0xa8] sm:$0xf]
        %v679 = vld [vmem:[#allocation6 + $0xac] sm:$0xf]
        %v680 = vld [vmem:[#allocation6 + $0xb0] sm:$0xf]
        %v681 = vld [vmem:[#allocation6 + $0xb4] sm:$0xf]
        %v682 = vld [vmem:[#allocation6 + $0xb8] sm:$0xf]
        %v683 = vld [vmem:[#allocation6 + $0xbc] sm:$0xf]
        %v684 = vld [vmem:[#allocation6 + $0xc0] sm:$0xf]
        %v685 = vld [vmem:[#allocation6 + $0xc4] sm:$0xf]
        %v686 = vld [vmem:[#allocation6 + $0xc8] sm:$0xf]
        %v687 = vld [vmem:[#allocation6 + $0xcc] sm:$0xf]
        %v688 = vld [vmem:[#allocation6 + $0xd0] sm:$0xf]
        %v689 = vld [vmem:[#allocation6 + $0xd4] sm:$0xf]
        %v690 = vld [vmem:[#allocation6 + $0xd8] sm:$0xf]
        %v691 = vld [vmem:[#allocation6 + $0xdc] sm:$0xf]
        %v692 = vld [vmem:[#allocation6 + $0xe0] sm:$0xf]
        %v693 = vld [vmem:[#allocation6 + $0xe4] sm:$0xf]
        %v694 = vld [vmem:[#allocation6 + $0xe8] sm:$0xf]
        %v695 = vld [vmem:[#allocation6 + $0xec] sm:$0xf]
        %v696 = vld [vmem:[#allocation6 + $0xf0] sm:$0xf]
        %v697 = vld [vmem:[#allocation6 + $0xf4] sm:$0xf]
        %v698 = vld [vmem:[#allocation6 + $0xf8] sm:$0xf]
        %v699 = vld [vmem:[#allocation6 + $0xfc] sm:$0xf]
        %v828 = vunpack.c.l.b16 %v508
        %v829 = vunpack.c.h.b16 %v508
        %v830 = vunpack.c.l.b16 %v509
        %v831 = vunpack.c.h.b16 %v509
        %v832 = vunpack.c.l.b16 %v510
        %v833 = vunpack.c.h.b16 %v510
        %v834 = vunpack.c.l.b16 %v511
        %v835 = vunpack.c.h.b16 %v511
        %v836 = vunpack.c.l.b16 %v512
        %v837 = vunpack.c.h.b16 %v512
        %v838 = vunpack.c.l.b16 %v513
        %v839 = vunpack.c.h.b16 %v513
        %v840 = vunpack.c.l.b16 %v514
        %v841 = vunpack.c.h.b16 %v514
        %v842 = vunpack.c.l.b16 %v515
        %v843 = vunpack.c.h.b16 %v515
        %v844 = vunpack.c.l.b16 %v516
        %v845 = vunpack.c.h.b16 %v516
        %v846 = vunpack.c.l.b16 %v517
        %v847 = vunpack.c.h.b16 %v517
        %v848 = vunpack.c.l.b16 %v518
        %v849 = vunpack.c.h.b16 %v518
        %v850 = vunpack.c.l.b16 %v519
        %v851 = vunpack.c.h.b16 %v519
        %v852 = vunpack.c.l.b16 %v520
        %v853 = vunpack.c.h.b16 %v520
        %v854 = vunpack.c.l.b16 %v521
        %v855 = vunpack.c.h.b16 %v521
        %v856 = vunpack.c.l.b16 %v522
        %v857 = vunpack.c.h.b16 %v522
        %v858 = vunpack.c.l.b16 %v523
        %v859 = vunpack.c.h.b16 %v523
        %v860 = vunpack.c.l.b16 %v524
        %v861 = vunpack.c.h.b16 %v524
        %v862 = vunpack.c.l.b16 %v525
        %v863 = vunpack.c.h.b16 %v525
        %v864 = vunpack.c.l.b16 %v526
        %v865 = vunpack.c.h.b16 %v526
        %v866 = vunpack.c.l.b16 %v527
        %v867 = vunpack.c.h.b16 %v527
        %v868 = vunpack.c.l.b16 %v528
        %v869 = vunpack.c.h.b16 %v528
        %v870 = vunpack.c.l.b16 %v529
        %v871 = vunpack.c.h.b16 %v529
        %v872 = vunpack.c.l.b16 %v530
        %v873 = vunpack.c.h.b16 %v530
        %v874 = vunpack.c.l.b16 %v531
        %v875 = vunpack.c.h.b16 %v531
        %v876 = vunpack.c.l.b16 %v532
        %v877 = vunpack.c.h.b16 %v532
        %v878 = vunpack.c.l.b16 %v533
        %v879 = vunpack.c.h.b16 %v533
        %v880 = vunpack.c.l.b16 %v534
        %v881 = vunpack.c.h.b16 %v534
        %v882 = vunpack.c.l.b16 %v535
        %v883 = vunpack.c.h.b16 %v535
        %v884 = vunpack.c.l.b16 %v536
        %v885 = vunpack.c.h.b16 %v536
        %v886 = vunpack.c.l.b16 %v537
        %v887 = vunpack.c.h.b16 %v537
        %v888 = vunpack.c.l.b16 %v538
        %v889 = vunpack.c.h.b16 %v538
        %v890 = vunpack.c.l.b16 %v539
        %v891 = vunpack.c.h.b16 %v539
        %v892 = vunpack.c.l.b16 %v540
        %v893 = vunpack.c.h.b16 %v540
        %v894 = vunpack.c.l.b16 %v541
        %v895 = vunpack.c.h.b16 %v541
        %v896 = vunpack.c.l.b16 %v542
        %v897 = vunpack.c.h.b16 %v542
        %v898 = vunpack.c.l.b16 %v543
        %v899 = vunpack.c.h.b16 %v543
        %v900 = vunpack.c.l.b16 %v544
        %v901 = vunpack.c.h.b16 %v544
        %v902 = vunpack.c.l.b16 %v545
        %v903 = vunpack.c.h.b16 %v545
        %v904 = vunpack.c.l.b16 %v546
        %v905 = vunpack.c.h.b16 %v546
        %v906 = vunpack.c.l.b16 %v547
        %v907 = vunpack.c.h.b16 %v547
        %v908 = vunpack.c.l.b16 %v548
        %v909 = vunpack.c.h.b16 %v548
        %v910 = vunpack.c.l.b16 %v549
        %v911 = vunpack.c.h.b16 %v549
        %v912 = vunpack.c.l.b16 %v550
        %v913 = vunpack.c.h.b16 %v550
        %v914 = vunpack.c.l.b16 %v551
        %v915 = vunpack.c.h.b16 %v551
        %v916 = vunpack.c.l.b16 %v552
        %v917 = vunpack.c.h.b16 %v552
        %v918 = vunpack.c.l.b16 %v553
        %v919 = vunpack.c.h.b16 %v553
        %v920 = vunpack.c.l.b16 %v554
        %v921 = vunpack.c.h.b16 %v554
        %v922 = vunpack.c.l.b16 %v555
        %v923 = vunpack.c.h.b16 %v555
        %v924 = vunpack.c.l.b16 %v556
        %v925 = vunpack.c.h.b16 %v556
        %v926 = vunpack.c.l.b16 %v557
        %v927 = vunpack.c.h.b16 %v557
        %v928 = vunpack.c.l.b16 %v558
        %v929 = vunpack.c.h.b16 %v558
        %v930 = vunpack.c.l.b16 %v559
        %v931 = vunpack.c.h.b16 %v559
        %v932 = vunpack.c.l.b16 %v560
        %v933 = vunpack.c.h.b16 %v560
        %v934 = vunpack.c.l.b16 %v561
        %v935 = vunpack.c.h.b16 %v561
        %v936 = vunpack.c.l.b16 %v562
        %v937 = vunpack.c.h.b16 %v562
        %v938 = vunpack.c.l.b16 %v563
        %v939 = vunpack.c.h.b16 %v563
        %v940 = vunpack.c.l.b16 %v564
        %v941 = vunpack.c.h.b16 %v564
        %v942 = vunpack.c.l.b16 %v565
        %v943 = vunpack.c.h.b16 %v565
        %v944 = vunpack.c.l.b16 %v566
        %v945 = vunpack.c.h.b16 %v566
        %v946 = vunpack.c.l.b16 %v567
        %v947 = vunpack.c.h.b16 %v567
        %v948 = vunpack.c.l.b16 %v568
        %v949 = vunpack.c.h.b16 %v568
        %v950 = vunpack.c.l.b16 %v569
        %v951 = vunpack.c.h.b16 %v569
        %v952 = vunpack.c.l.b16 %v570
        %v953 = vunpack.c.h.b16 %v570
        %v954 = vunpack.c.l.b16 %v571
        %v955 = vunpack.c.h.b16 %v571
        %v956 = vunpack.c.l.b16 %v572
        %v957 = vunpack.c.h.b16 %v572
        %v958 = vunpack.c.l.b16 %v573
        %v959 = vunpack.c.h.b16 %v573
        %v960 = vunpack.c.l.b16 %v574
        %v961 = vunpack.c.h.b16 %v574
        %v962 = vunpack.c.l.b16 %v575
        %v963 = vunpack.c.h.b16 %v575
        %v964 = vunpack.c.l.b16 %v576
        %v965 = vunpack.c.h.b16 %v576
        %v966 = vunpack.c.l.b16 %v577
        %v967 = vunpack.c.h.b16 %v577
        %v968 = vunpack.c.l.b16 %v578
        %v969 = vunpack.c.h.b16 %v578
        %v970 = vunpack.c.l.b16 %v579
        %v971 = vunpack.c.h.b16 %v579
        %v972 = vunpack.c.l.b16 %v580
        %v973 = vunpack.c.h.b16 %v580
        %v974 = vunpack.c.l.b16 %v581
        %v975 = vunpack.c.h.b16 %v581
        %v976 = vunpack.c.l.b16 %v582
        %v977 = vunpack.c.h.b16 %v582
        %v978 = vunpack.c.l.b16 %v583
        %v979 = vunpack.c.h.b16 %v583
        %v980 = vunpack.c.l.b16 %v584
        %v981 = vunpack.c.h.b16 %v584
        %v982 = vunpack.c.l.b16 %v585
        %v983 = vunpack.c.h.b16 %v585
        %v984 = vunpack.c.l.b16 %v586
        %v985 = vunpack.c.h.b16 %v586
        %v986 = vunpack.c.l.b16 %v587
        %v987 = vunpack.c.h.b16 %v587
        %v988 = vunpack.c.l.b16 %v588
        %v989 = vunpack.c.h.b16 %v588
        %v990 = vunpack.c.l.b16 %v589
        %v991 = vunpack.c.h.b16 %v589
        %v992 = vunpack.c.l.b16 %v590
        %v993 = vunpack.c.h.b16 %v590
        %v994 = vunpack.c.l.b16 %v591
        %v995 = vunpack.c.h.b16 %v591
        %v996 = vunpack.c.l.b16 %v592
        %v997 = vunpack.c.h.b16 %v592
        %v998 = vunpack.c.l.b16 %v593
        %v999 = vunpack.c.h.b16 %v593
        %v1000 = vunpack.c.l.b16 %v594
        %v1001 = vunpack.c.h.b16 %v594
        %v1002 = vunpack.c.l.b16 %v595
        %v1003 = vunpack.c.h.b16 %v595
        %v1004 = vunpack.c.l.b16 %v596
        %v1005 = vunpack.c.h.b16 %v596
        %v1006 = vunpack.c.l.b16 %v597
        %v1007 = vunpack.c.h.b16 %v597
        %v1008 = vunpack.c.l.b16 %v598
        %v1009 = vunpack.c.h.b16 %v598
        %v1010 = vunpack.c.l.b16 %v599
        %v1011 = vunpack.c.h.b16 %v599
        %v1012 = vunpack.c.l.b16 %v600
        %v1013 = vunpack.c.h.b16 %v600
        %v1014 = vunpack.c.l.b16 %v601
        %v1015 = vunpack.c.h.b16 %v601
        %v1016 = vunpack.c.l.b16 %v602
        %v1017 = vunpack.c.h.b16 %v602
        %v1018 = vunpack.c.l.b16 %v603
        %v1019 = vunpack.c.h.b16 %v603
        %v1020 = vunpack.c.l.b16 %v604
        %v1021 = vunpack.c.h.b16 %v604
        %v1022 = vunpack.c.l.b16 %v605
        %v1023 = vunpack.c.h.b16 %v605
        %v1024 = vunpack.c.l.b16 %v606
        %v1025 = vunpack.c.h.b16 %v606
        %v1026 = vunpack.c.l.b16 %v607
        %v1027 = vunpack.c.h.b16 %v607
        %v1028 = vunpack.c.l.b16 %v608
        %v1029 = vunpack.c.h.b16 %v608
        %v1030 = vunpack.c.l.b16 %v609
        %v1031 = vunpack.c.h.b16 %v609
        %v1032 = vunpack.c.l.b16 %v610
        %v1033 = vunpack.c.h.b16 %v610
        %v1034 = vunpack.c.l.b16 %v611
        %v1035 = vunpack.c.h.b16 %v611
        %v1036 = vunpack.c.l.b16 %v612
        %v1037 = vunpack.c.h.b16 %v612
        %v1038 = vunpack.c.l.b16 %v613
        %v1039 = vunpack.c.h.b16 %v613
        %v1040 = vunpack.c.l.b16 %v614
        %v1041 = vunpack.c.h.b16 %v614
        %v1042 = vunpack.c.l.b16 %v615
        %v1043 = vunpack.c.h.b16 %v615
        %v1044 = vunpack.c.l.b16 %v616
        %v1045 = vunpack.c.h.b16 %v616
        %v1046 = vunpack.c.l.b16 %v617
        %v1047 = vunpack.c.h.b16 %v617
        %v1048 = vunpack.c.l.b16 %v618
        %v1049 = vunpack.c.h.b16 %v618
        %v1050 = vunpack.c.l.b16 %v619
        %v1051 = vunpack.c.h.b16 %v619
        %v1052 = vunpack.c.l.b16 %v620
        %v1053 = vunpack.c.h.b16 %v620
        %v1054 = vunpack.c.l.b16 %v621
        %v1055 = vunpack.c.h.b16 %v621
        %v1056 = vunpack.c.l.b16 %v622
        %v1057 = vunpack.c.h.b16 %v622
        %v1058 = vunpack.c.l.b16 %v623
        %v1059 = vunpack.c.h.b16 %v623
        %v1060 = vunpack.c.l.b16 %v624
        %v1061 = vunpack.c.h.b16 %v624
        %v1062 = vunpack.c.l.b16 %v625
        %v1063 = vunpack.c.h.b16 %v625
        %v1064 = vunpack.c.l.b16 %v626
        %v1065 = vunpack.c.h.b16 %v626
        %v1066 = vunpack.c.l.b16 %v627
        %v1067 = vunpack.c.h.b16 %v627
        %v1068 = vunpack.c.l.b16 %v628
        %v1069 = vunpack.c.h.b16 %v628
        %v1070 = vunpack.c.l.b16 %v629
        %v1071 = vunpack.c.h.b16 %v629
        %v1072 = vunpack.c.l.b16 %v630
        %v1073 = vunpack.c.h.b16 %v630
        %v1074 = vunpack.c.l.b16 %v631
        %v1075 = vunpack.c.h.b16 %v631
        %v1076 = vunpack.c.l.b16 %v632
        %v1077 = vunpack.c.h.b16 %v632
        %v1078 = vunpack.c.l.b16 %v633
        %v1079 = vunpack.c.h.b16 %v633
        %v1080 = vunpack.c.l.b16 %v634
        %v1081 = vunpack.c.h.b16 %v634
        %v1082 = vunpack.c.l.b16 %v635
        %v1083 = vunpack.c.h.b16 %v635
        %v1084 = vpack.c.b16 %v832, %v828
        %v1085 = vpack.c.b16 %v833, %v829
        %v1086 = vpack.c.b16 %v834, %v830
        %v1087 = vpack.c.b16 %v835, %v831
        %v1088 = vpack.c.b16 %v840, %v836
        %v1089 = vpack.c.b16 %v841, %v837
        %v1090 = vpack.c.b16 %v842, %v838
        %v1091 = vpack.c.b16 %v843, %v839
        %v1092 = vpack.c.b16 %v848, %v844
        %v1093 = vpack.c.b16 %v849, %v845
        %v1094 = vpack.c.b16 %v850, %v846
        %v1095 = vpack.c.b16 %v851, %v847
        %v1096 = vpack.c.b16 %v856, %v852
        %v1097 = vpack.c.b16 %v857, %v853
        %v1098 = vpack.c.b16 %v858, %v854
        %v1099 = vpack.c.b16 %v859, %v855
        %v1100 = vpack.c.b16 %v864, %v860
        %v1101 = vpack.c.b16 %v865, %v861
        %v1102 = vpack.c.b16 %v866, %v862
        %v1103 = vpack.c.b16 %v867, %v863
        %v1104 = vpack.c.b16 %v872, %v868
        %v1105 = vpack.c.b16 %v873, %v869
        %v1106 = vpack.c.b16 %v874, %v870
        %v1107 = vpack.c.b16 %v875, %v871
        %v1108 = vpack.c.b16 %v880, %v876
        %v1109 = vpack.c.b16 %v881, %v877
        %v1110 = vpack.c.b16 %v882, %v878
        %v1111 = vpack.c.b16 %v883, %v879
        %v1112 = vpack.c.b16 %v888, %v884
        %v1113 = vpack.c.b16 %v889, %v885
        %v1114 = vpack.c.b16 %v890, %v886
        %v1115 = vpack.c.b16 %v891, %v887
        %v1116 = vpack.c.b16 %v896, %v892
        %v1117 = vpack.c.b16 %v897, %v893
        %v1118 = vpack.c.b16 %v898, %v894
        %v1119 = vpack.c.b16 %v899, %v895
        %v1120 = vpack.c.b16 %v904, %v900
        %v1121 = vpack.c.b16 %v905, %v901
        %v1122 = vpack.c.b16 %v906, %v902
        %v1123 = vpack.c.b16 %v907, %v903
        %v1124 = vpack.c.b16 %v912, %v908
        %v1125 = vpack.c.b16 %v913, %v909
        %v1126 = vpack.c.b16 %v914, %v910
        %v1127 = vpack.c.b16 %v915, %v911
        %v1128 = vpack.c.b16 %v920, %v916
        %v1129 = vpack.c.b16 %v921, %v917
        %v1130 = vpack.c.b16 %v922, %v918
        %v1131 = vpack.c.b16 %v923, %v919
        %v1132 = vpack.c.b16 %v928, %v924
        %v1133 = vpack.c.b16 %v929, %v925
        %v1134 = vpack.c.b16 %v930, %v926
        %v1135 = vpack.c.b16 %v931, %v927
        %v1136 = vpack.c.b16 %v936, %v932
        %v1137 = vpack.c.b16 %v937, %v933
        %v1138 = vpack.c.b16 %v938, %v934
        %v1139 = vpack.c.b16 %v939, %v935
        %v1140 = vpack.c.b16 %v944, %v940
        %v1141 = vpack.c.b16 %v945, %v941
        %v1142 = vpack.c.b16 %v946, %v942
        %v1143 = vpack.c.b16 %v947, %v943
        %v1144 = vpack.c.b16 %v952, %v948
        %v1145 = vpack.c.b16 %v953, %v949
        %v1146 = vpack.c.b16 %v954, %v950
        %v1147 = vpack.c.b16 %v955, %v951
        %v1148 = vpack.c.b16 %v960, %v956
        %v1149 = vpack.c.b16 %v961, %v957
        %v1150 = vpack.c.b16 %v962, %v958
        %v1151 = vpack.c.b16 %v963, %v959
        %v1152 = vpack.c.b16 %v968, %v964
        %v1153 = vpack.c.b16 %v969, %v965
        %v1154 = vpack.c.b16 %v970, %v966
        %v1155 = vpack.c.b16 %v971, %v967
        %v1156 = vpack.c.b16 %v976, %v972
        %v1157 = vpack.c.b16 %v977, %v973
        %v1158 = vpack.c.b16 %v978, %v974
        %v1159 = vpack.c.b16 %v979, %v975
        %v1160 = vpack.c.b16 %v984, %v980
        %v1161 = vpack.c.b16 %v985, %v981
        %v1162 = vpack.c.b16 %v986, %v982
        %v1163 = vpack.c.b16 %v987, %v983
        %v1164 = vpack.c.b16 %v992, %v988
        %v1165 = vpack.c.b16 %v993, %v989
        %v1166 = vpack.c.b16 %v994, %v990
        %v1167 = vpack.c.b16 %v995, %v991
        %v1168 = vpack.c.b16 %v1000, %v996
        %v1169 = vpack.c.b16 %v1001, %v997
        %v1170 = vpack.c.b16 %v1002, %v998
        %v1171 = vpack.c.b16 %v1003, %v999
        %v1172 = vpack.c.b16 %v1008, %v1004
        %v1173 = vpack.c.b16 %v1009, %v1005
        %v1174 = vpack.c.b16 %v1010, %v1006
        %v1175 = vpack.c.b16 %v1011, %v1007
        %v1176 = vpack.c.b16 %v1016, %v1012
        %v1177 = vpack.c.b16 %v1017, %v1013
        %v1178 = vpack.c.b16 %v1018, %v1014
        %v1179 = vpack.c.b16 %v1019, %v1015
        %v1180 = vpack.c.b16 %v1024, %v1020
        %v1181 = vpack.c.b16 %v1025, %v1021
        %v1182 = vpack.c.b16 %v1026, %v1022
        %v1183 = vpack.c.b16 %v1027, %v1023
        %v1184 = vpack.c.b16 %v1032, %v1028
        %v1185 = vpack.c.b16 %v1033, %v1029
        %v1186 = vpack.c.b16 %v1034, %v1030
        %v1187 = vpack.c.b16 %v1035, %v1031
        %v1188 = vpack.c.b16 %v1040, %v1036
        %v1189 = vpack.c.b16 %v1041, %v1037
        %v1190 = vpack.c.b16 %v1042, %v1038
        %v1191 = vpack.c.b16 %v1043, %v1039
        %v1192 = vpack.c.b16 %v1048, %v1044
        %v1193 = vpack.c.b16 %v1049, %v1045
        %v1194 = vpack.c.b16 %v1050, %v1046
        %v1195 = vpack.c.b16 %v1051, %v1047
        %v1196 = vpack.c.b16 %v1056, %v1052
        %v1197 = vpack.c.b16 %v1057, %v1053
        %v1198 = vpack.c.b16 %v1058, %v1054
        %v1199 = vpack.c.b16 %v1059, %v1055
        %v1200 = vpack.c.b16 %v1064, %v1060
        %v1201 = vpack.c.b16 %v1065, %v1061
        %v1202 = vpack.c.b16 %v1066, %v1062
        %v1203 = vpack.c.b16 %v1067, %v1063
        %v1204 = vpack.c.b16 %v1072, %v1068
        %v1205 = vpack.c.b16 %v1073, %v1069
        %v1206 = vpack.c.b16 %v1074, %v1070
        %v1207 = vpack.c.b16 %v1075, %v1071
        %v1208 = vpack.c.b16 %v1080, %v1076
        %v1209 = vpack.c.b16 %v1081, %v1077
        %v1210 = vpack.c.b16 %v1082, %v1078
        %v1211 = vpack.c.b16 %v1083, %v1079
        %v1404 = vunpack.c.l.b16 %v636
        %v1405 = vunpack.c.l.b16 %v637
        %v1406 = vunpack.c.l.b16 %v638
        %v1407 = vunpack.c.l.b16 %v639
        %v1408 = vunpack.c.l.b16 %v640
        %v1409 = vunpack.c.l.b16 %v641
        %v1410 = vunpack.c.l.b16 %v642
        %v1411 = vunpack.c.l.b16 %v643
        %v1412 = vunpack.c.l.b16 %v644
        %v1413 = vunpack.c.l.b16 %v645
        %v1414 = vunpack.c.l.b16 %v646
        %v1415 = vunpack.c.l.b16 %v647
        %v1416 = vunpack.c.l.b16 %v648
        %v1417 = vunpack.c.l.b16 %v649
        %v1418 = vunpack.c.l.b16 %v650
        %v1419 = vunpack.c.l.b16 %v651
        %v1420 = vunpack.c.l.b16 %v652
        %v1421 = vunpack.c.l.b16 %v653
        %v1422 = vunpack.c.l.b16 %v654
        %v1423 = vunpack.c.l.b16 %v655
        %v1424 = vunpack.c.l.b16 %v656
        %v1425 = vunpack.c.l.b16 %v657
        %v1426 = vunpack.c.l.b16 %v658
        %v1427 = vunpack.c.l.b16 %v659
        %v1428 = vunpack.c.l.b16 %v660
        %v1429 = vunpack.c.l.b16 %v661
        %v1430 = vunpack.c.l.b16 %v662
        %v1431 = vunpack.c.l.b16 %v663
        %v1432 = vunpack.c.l.b16 %v664
        %v1433 = vunpack.c.l.b16 %v665
        %v1434 = vunpack.c.l.b16 %v666
        %v1435 = vunpack.c.l.b16 %v667
        %v1436 = vunpack.c.l.b16 %v668
        %v1437 = vunpack.c.l.b16 %v669
        %v1438 = vunpack.c.l.b16 %v670
        %v1439 = vunpack.c.l.b16 %v671
        %v1440 = vunpack.c.l.b16 %v672
        %v1441 = vunpack.c.l.b16 %v673
        %v1442 = vunpack.c.l.b16 %v674
        %v1443 = vunpack.c.l.b16 %v675
        %v1444 = vunpack.c.l.b16 %v676
        %v1445 = vunpack.c.l.b16 %v677
        %v1446 = vunpack.c.l.b16 %v678
        %v1447 = vunpack.c.l.b16 %v679
        %v1448 = vunpack.c.l.b16 %v680
        %v1449 = vunpack.c.l.b16 %v681
        %v1450 = vunpack.c.l.b16 %v682
        %v1451 = vunpack.c.l.b16 %v683
        %v1452 = vunpack.c.l.b16 %v684
        %v1453 = vunpack.c.l.b16 %v685
        %v1454 = vunpack.c.l.b16 %v686
        %v1455 = vunpack.c.l.b16 %v687
        %v1456 = vunpack.c.l.b16 %v688
        %v1457 = vunpack.c.l.b16 %v689
        %v1458 = vunpack.c.l.b16 %v690
        %v1459 = vunpack.c.l.b16 %v691
        %v1460 = vunpack.c.l.b16 %v692
        %v1461 = vunpack.c.l.b16 %v693
        %v1462 = vunpack.c.l.b16 %v694
        %v1463 = vunpack.c.l.b16 %v695
        %v1464 = vunpack.c.l.b16 %v696
        %v1465 = vunpack.c.l.b16 %v697
        %v1466 = vunpack.c.l.b16 %v698
        %v1467 = vunpack.c.l.b16 %v699
        %v1468 = vpack.c.b16 %v1405, %v1404
        %v1469 = vpack.c.b16 %v1407, %v1406
        %v1470 = vpack.c.b16 %v1409, %v1408
        %v1471 = vpack.c.b16 %v1411, %v1410
        %v1472 = vpack.c.b16 %v1413, %v1412
        %v1473 = vpack.c.b16 %v1415, %v1414
        %v1474 = vpack.c.b16 %v1417, %v1416
        %v1475 = vpack.c.b16 %v1419, %v1418
        %v1476 = vpack.c.b16 %v1421, %v1420
        %v1477 = vpack.c.b16 %v1423, %v1422
        %v1478 = vpack.c.b16 %v1425, %v1424
        %v1479 = vpack.c.b16 %v1427, %v1426
        %v1480 = vpack.c.b16 %v1429, %v1428
        %v1481 = vpack.c.b16 %v1431, %v1430
        %v1482 = vpack.c.b16 %v1433, %v1432
        %v1483 = vpack.c.b16 %v1435, %v1434
        %v1484 = vpack.c.b16 %v1437, %v1436
        %v1485 = vpack.c.b16 %v1439, %v1438
        %v1486 = vpack.c.b16 %v1441, %v1440
        %v1487 = vpack.c.b16 %v1443, %v1442
        %v1488 = vpack.c.b16 %v1445, %v1444
        %v1489 = vpack.c.b16 %v1447, %v1446
        %v1490 = vpack.c.b16 %v1449, %v1448
        %v1491 = vpack.c.b16 %v1451, %v1450
        %v1492 = vpack.c.b16 %v1453, %v1452
        %v1493 = vpack.c.b16 %v1455, %v1454
        %v1494 = vpack.c.b16 %v1457, %v1456
        %v1495 = vpack.c.b16 %v1459, %v1458
        %v1496 = vpack.c.b16 %v1461, %v1460
        %v1497 = vpack.c.b16 %v1463, %v1462
        %v1498 = vpack.c.b16 %v1465, %v1464
        %v1499 = vpack.c.b16 %v1467, %v1466
        %1532 = vmatprep.subr.bf16.mxu0 0
        %1533 = vmatpush1.bf16.msra.mxu0 %v1468
        %1534 = vmatprep.subr.bf16.mxu0 0
        %1535 = vmatpush1.bf16.msra.mxu0 %v1469
        %1536 = vmatprep.subr.bf16.mxu0 0
        %1537 = vmatpush1.bf16.msra.mxu0 %v1470
        %1538 = vmatprep.subr.bf16.mxu0 0
        %1539 = vmatpush1.bf16.msra.mxu0 %v1471
        %1540 = vmatprep.subr.bf16.mxu0 0
        %1541 = vmatpush1.bf16.msra.mxu0 %v1472
        %1542 = vmatprep.subr.bf16.mxu0 0
        %1543 = vmatpush1.bf16.msra.mxu0 %v1473
        %1544 = vmatprep.subr.bf16.mxu0 0
        %1545 = vmatpush1.bf16.msra.mxu0 %v1474
        %1546 = vmatprep.subr.bf16.mxu0 0
        %1547 = vmatpush1.bf16.msra.mxu0 %v1475
        %1548 = vmatprep.subr.bf16.mxu0 0
        %1549 = vmatpush1.bf16.msra.mxu0 %v1476
        %1550 = vmatprep.subr.bf16.mxu0 0
        %1551 = vmatpush1.bf16.msra.mxu0 %v1477
        %1552 = vmatprep.subr.bf16.mxu0 0
        %1553 = vmatpush1.bf16.msra.mxu0 %v1478
        %1554 = vmatprep.subr.bf16.mxu0 0
        %1555 = vmatpush1.bf16.msra.mxu0 %v1479
        %1556 = vmatprep.subr.bf16.mxu0 0
        %1557 = vmatpush1.bf16.msra.mxu0 %v1480
        %1558 = vmatprep.subr.bf16.mxu0 0
        %1559 = vmatpush1.bf16.msra.mxu0 %v1481
        %1560 = vmatprep.subr.bf16.mxu0 0
        %1561 = vmatpush1.bf16.msra.mxu0 %v1482
        %1562 = vmatprep.subr.bf16.mxu0 0
        %1563 = vmatpush1.bf16.msra.mxu0 %v1483
        %1564 = vmatprep.mubr.bf16.mxu0 %v1085
        %1565 = vmatmul.mubr.bf16.gmra.mrb[0].mxu0 %v1084
        %v1566 = vpop.f32.mrb[0].mxu0
        %v1567 = vadd.f32 0.0, %v1566
        %v1568 = vpop.f32.mrb[0].mxu0
        %v1569 = vpop.f32.mrb[0].mxu0
        %v1570 = vadd.f32 0.0, %v1569
        %v1571 = vpop.f32.mrb[0].mxu0
        %1572 = vmatprep.mubr.bf16.mxu0 %v1089
        %1573 = vmatmul.mubr.bf16.gmra.mrb[0].mxu0 %v1088
        %v1574 = vpop.f32.mrb[0].mxu0
        %v1575 = vadd.f32 0.0, %v1574
        %v1576 = vpop.f32.mrb[0].mxu0
        %v1577 = vpop.f32.mrb[0].mxu0
        %v1578 = vadd.f32 0.0, %v1577
        %v1579 = vpop.f32.mrb[0].mxu0
        %1580 = vmatprep.mubr.bf16.mxu0 %v1093
        %1581 = vmatmul.mubr.bf16.gmra.mrb[0].mxu0 %v1092
        %v1582 = vpop.f32.mrb[0].mxu0
        %v1583 = vadd.f32 0.0, %v1582
        %v1584 = vpop.f32.mrb[0].mxu0
        %v1585 = vpop.f32.mrb[0].mxu0
        %v1586 = vadd.f32 0.0, %v1585
        %v1587 = vpop.f32.mrb[0].mxu0
        %1588 = vmatprep.mubr.bf16.mxu0 %v1097
        %1589 = vmatmul.mubr.bf16.gmra.mrb[0].mxu0 %v1096
        %v1590 = vpop.f32.mrb[0].mxu0
        %v1591 = vadd.f32 0.0, %v1590
        %v1592 = vpop.f32.mrb[0].mxu0
        %v1593 = vpop.f32.mrb[0].mxu0
        %v1594 = vadd.f32 0.0, %v1593
        %v1595 = vpop.f32.mrb[0].mxu0
        %1596 = vmatprep.mubr.bf16.mxu0 %v1101
        %1597 = vmatmul.mubr.bf16.gmra.mrb[0].mxu0 %v1100
        %v1598 = vpop.f32.mrb[0].mxu0
        %v1599 = vadd.f32 0.0, %v1598
        %v1600 = vpop.f32.mrb[0].mxu0
        %v1601 = vpop.f32.mrb[0].mxu0
        %v1602 = vadd.f32 0.0, %v1601
        %v1603 = vpop.f32.mrb[0].mxu0
        %1604 = vmatprep.mubr.bf16.mxu0 %v1105
        %1605 = vmatmul.mubr.bf16.gmra.mrb[0].mxu0 %v1104
        %v1606 = vpop.f32.mrb[0].mxu0
        %v1607 = vadd.f32 0.0, %v1606
        %v1608 = vpop.f32.mrb[0].mxu0
        %v1609 = vpop.f32.mrb[0].mxu0
        %v1610 = vadd.f32 0.0, %v1609
        %v1611 = vpop.f32.mrb[0].mxu0
        %1612 = vmatprep.mubr.bf16.mxu0 %v1109
        %1613 = vmatmul.mubr.bf16.gmra.mrb[0].mxu0 %v1108
        %v1614 = vpop.f32.mrb[0].mxu0
        %v1615 = vadd.f32 0.0, %v1614
        %v1616 = vpop.f32.mrb[0].mxu0
        %v1617 = vpop.f32.mrb[0].mxu0
        %v1618 = vadd.f32 0.0, %v1617
        %v1619 = vpop.f32.mrb[0].mxu0
        %1620 = vmatprep.mubr.bf16.mxu0 %v1113
        %1621 = vmatmul.mubr.bf16.gmra.mrb[0].mxu0 %v1112
        %v1622 = vpop.f32.mrb[0].mxu0
        %v1623 = vadd.f32 0.0, %v1622
        %v1624 = vpop.f32.mrb[0].mxu0
        %v1625 = vpop.f32.mrb[0].mxu0
        %v1626 = vadd.f32 0.0, %v1625
        %v1627 = vpop.f32.mrb[0].mxu0
        %1628 = vmatprep.mubr.bf16.mxu0 %v1117
        %1629 = vmatmul.mubr.bf16.gmra.mrb[0].mxu0 %v1116
        %v1630 = vpop.f32.mrb[0].mxu0
        %v1631 = vadd.f32 0.0, %v1630
        %v1632 = vpop.f32.mrb[0].mxu0
        %v1633 = vpop.f32.mrb[0].mxu0
        %v1634 = vadd.f32 0.0, %v1633
        %v1635 = vpop.f32.mrb[0].mxu0
        %1636 = vmatprep.mubr.bf16.mxu0 %v1121
        %1637 = vmatmul.mubr.bf16.gmra.mrb[0].mxu0 %v1120
        %v1638 = vpop.f32.mrb[0].mxu0
        %v1639 = vadd.f32 0.0, %v1638
        %v1640 = vpop.f32.mrb[0].mxu0
        %v1641 = vpop.f32.mrb[0].mxu0
        %v1642 = vadd.f32 0.0, %v1641
        %v1643 = vpop.f32.mrb[0].mxu0
        %1644 = vmatprep.mubr.bf16.mxu0 %v1125
        %1645 = vmatmul.mubr.bf16.gmra.mrb[0].mxu0 %v1124
        %v1646 = vpop.f32.mrb[0].mxu0
        %v1647 = vadd.f32 0.0, %v1646
        %v1648 = vpop.f32.mrb[0].mxu0
        %v1649 = vpop.f32.mrb[0].mxu0
        %v1650 = vadd.f32 0.0, %v1649
        %v1651 = vpop.f32.mrb[0].mxu0
        %1652 = vmatprep.mubr.bf16.mxu0 %v1129
        %1653 = vmatmul.mubr.bf16.gmra.mrb[0].mxu0 %v1128
        %v1654 = vpop.f32.mrb[0].mxu0
        %v1655 = vadd.f32 0.0, %v1654
        %v1656 = vpop.f32.mrb[0].mxu0
        %v1657 = vpop.f32.mrb[0].mxu0
        %v1658 = vadd.f32 0.0, %v1657
        %v1659 = vpop.f32.mrb[0].mxu0
        %1660 = vmatprep.mubr.bf16.mxu0 %v1133
        %1661 = vmatmul.mubr.bf16.gmra.mrb[0].mxu0 %v1132
        %v1662 = vpop.f32.mrb[0].mxu0
        %v1663 = vadd.f32 0.0, %v1662
        %v1664 = vpop.f32.mrb[0].mxu0
        %v1665 = vpop.f32.mrb[0].mxu0
        %v1666 = vadd.f32 0.0, %v1665
        %v1667 = vpop.f32.mrb[0].mxu0
        %1668 = vmatprep.mubr.bf16.mxu0 %v1137
        %1669 = vmatmul.mubr.bf16.gmra.mrb[0].mxu0 %v1136
        %v1670 = vpop.f32.mrb[0].mxu0
        %v1671 = vadd.f32 0.0, %v1670
        %v1672 = vpop.f32.mrb[0].mxu0
        %v1673 = vpop.f32.mrb[0].mxu0
        %v1674 = vadd.f32 0.0, %v1673
        %v1675 = vpop.f32.mrb[0].mxu0
        %1676 = vmatprep.mubr.bf16.mxu0 %v1141
        %1677 = vmatmul.mubr.bf16.gmra.mrb[0].mxu0 %v1140
        %v1678 = vpop.f32.mrb[0].mxu0
        %v1679 = vadd.f32 0.0, %v1678
        %v1680 = vpop.f32.mrb[0].mxu0
        %v1681 = vpop.f32.mrb[0].mxu0
        %v1682 = vadd.f32 0.0, %v1681
        %v1683 = vpop.f32.mrb[0].mxu0
        %1684 = vmatprep.mubr.bf16.mxu0 %v1145
        %1685 = vmatmul.mubr.bf16.gmra.mrb[0].mxu0 %v1144
        %v1686 = vpop.f32.mrb[0].mxu0
        %v1687 = vadd.f32 0.0, %v1686
        %v1688 = vpop.f32.mrb[0].mxu0
        %v1689 = vpop.f32.mrb[0].mxu0
        %v1690 = vadd.f32 0.0, %v1689
        %v1691 = vpop.f32.mrb[0].mxu0
        %1692 = vmatprep.mubr.bf16.mxu0 %v1149
        %1693 = vmatmul.mubr.bf16.gmra.mrb[0].mxu0 %v1148
        %v1694 = vpop.f32.mrb[0].mxu0
        %v1695 = vadd.f32 0.0, %v1694
        %v1696 = vpop.f32.mrb[0].mxu0
        %v1697 = vpop.f32.mrb[0].mxu0
        %v1698 = vadd.f32 0.0, %v1697
        %v1699 = vpop.f32.mrb[0].mxu0
        %1700 = vmatprep.mubr.bf16.mxu0 %v1153
        %1701 = vmatmul.mubr.bf16.gmra.mrb[0].mxu0 %v1152
        %v1702 = vpop.f32.mrb[0].mxu0
        %v1703 = vadd.f32 0.0, %v1702
        %v1704 = vpop.f32.mrb[0].mxu0
        %v1705 = vpop.f32.mrb[0].mxu0
        %v1706 = vadd.f32 0.0, %v1705
        %v1707 = vpop.f32.mrb[0].mxu0
        %1708 = vmatprep.mubr.bf16.mxu0 %v1157
        %1709 = vmatmul.mubr.bf16.gmra.mrb[0].mxu0 %v1156
        %v1710 = vpop.f32.mrb[0].mxu0
        %v1711 = vadd.f32 0.0, %v1710
        %v1712 = vpop.f32.mrb[0].mxu0
        %v1713 = vpop.f32.mrb[0].mxu0
        %v1714 = vadd.f32 0.0, %v1713
        %v1715 = vpop.f32.mrb[0].mxu0
        %1716 = vmatprep.mubr.bf16.mxu0 %v1161
        %1717 = vmatmul.mubr.bf16.gmra.mrb[0].mxu0 %v1160
        %v1718 = vpop.f32.mrb[0].mxu0
        %v1719 = vadd.f32 0.0, %v1718
        %v1720 = vpop.f32.mrb[0].mxu0
        %v1721 = vpop.f32.mrb[0].mxu0
        %v1722 = vadd.f32 0.0, %v1721
        %v1723 = vpop.f32.mrb[0].mxu0
        %1724 = vmatprep.mubr.bf16.mxu0 %v1165
        %1725 = vmatmul.mubr.bf16.gmra.mrb[0].mxu0 %v1164
        %v1726 = vpop.f32.mrb[0].mxu0
        %v1727 = vadd.f32 0.0, %v1726
        %v1728 = vpop.f32.mrb[0].mxu0
        %v1729 = vpop.f32.mrb[0].mxu0
        %v1730 = vadd.f32 0.0, %v1729
        %v1731 = vpop.f32.mrb[0].mxu0
        %1732 = vmatprep.mubr.bf16.mxu0 %v1169
        %1733 = vmatmul.mubr.bf16.gmra.mrb[0].mxu0 %v1168
        %v1734 = vpop.f32.mrb[0].mxu0
        %v1735 = vadd.f32 0.0, %v1734
        %v1736 = vpop.f32.mrb[0].mxu0
        %v1737 = vpop.f32.mrb[0].mxu0
        %v1738 = vadd.f32 0.0, %v1737
        %v1739 = vpop.f32.mrb[0].mxu0
        %1740 = vmatprep.mubr.bf16.mxu0 %v1173
        %1741 = vmatmul.mubr.bf16.gmra.mrb[0].mxu0 %v1172
        %v1742 = vpop.f32.mrb[0].mxu0
        %v1743 = vadd.f32 0.0, %v1742
        %v1744 = vpop.f32.mrb[0].mxu0
        %v1745 = vpop.f32.mrb[0].mxu0
        %v1746 = vadd.f32 0.0, %v1745
        %v1747 = vpop.f32.mrb[0].mxu0
        %1748 = vmatprep.mubr.bf16.mxu0 %v1177
        %1749 = vmatmul.mubr.bf16.gmra.mrb[0].mxu0 %v1176
        %v1750 = vpop.f32.mrb[0].mxu0
        %v1751 = vadd.f32 0.0, %v1750
        %v1752 = vpop.f32.mrb[0].mxu0
        %v1753 = vpop.f32.mrb[0].mxu0
        %v1754 = vadd.f32 0.0, %v1753
        %v1755 = vpop.f32.mrb[0].mxu0
        %1756 = vmatprep.mubr.bf16.mxu0 %v1181
        %1757 = vmatmul.mubr.bf16.gmra.mrb[0].mxu0 %v1180
        %v1758 = vpop.f32.mrb[0].mxu0
        %v1759 = vadd.f32 0.0, %v1758
        %v1760 = vpop.f32.mrb[0].mxu0
        %v1761 = vpop.f32.mrb[0].mxu0
        %v1762 = vadd.f32 0.0, %v1761
        %v1763 = vpop.f32.mrb[0].mxu0
        %1764 = vmatprep.mubr.bf16.mxu0 %v1185
        %1765 = vmatmul.mubr.bf16.gmra.mrb[0].mxu0 %v1184
        %v1766 = vpop.f32.mrb[0].mxu0
        %v1767 = vadd.f32 0.0, %v1766
        %v1768 = vpop.f32.mrb[0].mxu0
        %v1769 = vpop.f32.mrb[0].mxu0
        %v1770 = vadd.f32 0.0, %v1769
        %v1771 = vpop.f32.mrb[0].mxu0
        %1772 = vmatprep.mubr.bf16.mxu0 %v1189
        %1773 = vmatmul.mubr.bf16.gmra.mrb[0].mxu0 %v1188
        %v1774 = vpop.f32.mrb[0].mxu0
        %v1775 = vadd.f32 0.0, %v1774
        %v1776 = vpop.f32.mrb[0].mxu0
        %v1777 = vpop.f32.mrb[0].mxu0
        %v1778 = vadd.f32 0.0, %v1777
        %v1779 = vpop.f32.mrb[0].mxu0
        %1780 = vmatprep.mubr.bf16.mxu0 %v1193
        %1781 = vmatmul.mubr.bf16.gmra.mrb[0].mxu0 %v1192
        %v1782 = vpop.f32.mrb[0].mxu0
        %v1783 = vadd.f32 0.0, %v1782
        %v1784 = vpop.f32.mrb[0].mxu0
        %v1785 = vpop.f32.mrb[0].mxu0
        %v1786 = vadd.f32 0.0, %v1785
        %v1787 = vpop.f32.mrb[0].mxu0
        %1788 = vmatprep.mubr.bf16.mxu0 %v1197
        %1789 = vmatmul.mubr.bf16.gmra.mrb[0].mxu0 %v1196
        %v1790 = vpop.f32.mrb[0].mxu0
        %v1791 = vadd.f32 0.0, %v1790
        %v1792 = vpop.f32.mrb[0].mxu0
        %v1793 = vpop.f32.mrb[0].mxu0
        %v1794 = vadd.f32 0.0, %v1793
        %v1795 = vpop.f32.mrb[0].mxu0
        %1796 = vmatprep.mubr.bf16.mxu0 %v1201
        %1797 = vmatmul.mubr.bf16.gmra.mrb[0].mxu0 %v1200
        %v1798 = vpop.f32.mrb[0].mxu0
        %v1799 = vadd.f32 0.0, %v1798
        %v1800 = vpop.f32.mrb[0].mxu0
        %v1801 = vpop.f32.mrb[0].mxu0
        %v1802 = vadd.f32 0.0, %v1801
        %v1803 = vpop.f32.mrb[0].mxu0
        %1804 = vmatprep.mubr.bf16.mxu0 %v1205
        %1805 = vmatmul.mubr.bf16.gmra.mrb[0].mxu0 %v1204
        %v1806 = vpop.f32.mrb[0].mxu0
        %v1807 = vadd.f32 0.0, %v1806
        %v1808 = vpop.f32.mrb[0].mxu0
        %v1809 = vpop.f32.mrb[0].mxu0
        %v1810 = vadd.f32 0.0, %v1809
        %v1811 = vpop.f32.mrb[0].mxu0
        %1812 = vmatprep.mubr.bf16.mxu0 %v1209
        %1813 = vmatmul.mubr.bf16.gmra.mrb[0].mxu0 %v1208
        %v1814 = vpop.f32.mrb[0].mxu0
        %v1815 = vadd.f32 0.0, %v1814
        %v1816 = vpop.f32.mrb[0].mxu0
        %v1817 = vpop.f32.mrb[0].mxu0
        %v1818 = vadd.f32 0.0, %v1817
        %v1819 = vpop.f32.mrb[0].mxu0
        %1820 = vdwg.mxu0
        %1821 = vmatprep.subr.bf16.mxu0 0
        %1822 = vmatpush1.bf16.msra.mxu0 %v1484
        %1823 = vmatprep.subr.bf16.mxu0 0
        %1824 = vmatpush1.bf16.msra.mxu0 %v1485
        %1825 = vmatprep.subr.bf16.mxu0 0
        %1826 = vmatpush1.bf16.msra.mxu0 %v1486
        %1827 = vmatprep.subr.bf16.mxu0 0
        %1828 = vmatpush1.bf16.msra.mxu0 %v1487
        %1829 = vmatprep.subr.bf16.mxu0 0
        %1830 = vmatpush1.bf16.msra.mxu0 %v1488
        %1831 = vmatprep.subr.bf16.mxu0 0
        %1832 = vmatpush1.bf16.msra.mxu0 %v1489
        %1833 = vmatprep.subr.bf16.mxu0 0
        %1834 = vmatpush1.bf16.msra.mxu0 %v1490
        %1835 = vmatprep.subr.bf16.mxu0 0
        %1836 = vmatpush1.bf16.msra.mxu0 %v1491
        %1837 = vmatprep.subr.bf16.mxu0 0
        %1838 = vmatpush1.bf16.msra.mxu0 %v1492
        %1839 = vmatprep.subr.bf16.mxu0 0
        %1840 = vmatpush1.bf16.msra.mxu0 %v1493
        %1841 = vmatprep.subr.bf16.mxu0 0
        %1842 = vmatpush1.bf16.msra.mxu0 %v1494
        %1843 = vmatprep.subr.bf16.mxu0 0
        %1844 = vmatpush1.bf16.msra.mxu0 %v1495
        %1845 = vmatprep.subr.bf16.mxu0 0
        %1846 = vmatpush1.bf16.msra.mxu0 %v1496
        %1847 = vmatprep.subr.bf16.mxu0 0
        %1848 = vmatpush1.bf16.msra.mxu0 %v1497
        %1849 = vmatprep.subr.bf16.mxu0 0
        %1850 = vmatpush1.bf16.msra.mxu0 %v1498
        %1851 = vmatprep.subr.bf16.mxu0 0
        %1852 = vmatpush1.bf16.msra.mxu0 %v1499
        %1853 = vmatprep.mubr.bf16.mxu0 %v1087
        %1854 = vmatmul.mubr.bf16.gmra.mrb[0].mxu0 %v1086
        %v1855 = vpop.f32.mrb[0].mxu0
        %v1856 = vadd.f32 %v1567, %v1855
        %v1857 = vpop.f32.mrb[0].mxu0
        %v1858 = vpop.f32.mrb[0].mxu0
        %v1859 = vadd.f32 %v1570, %v1858
        %v1860 = vpop.f32.mrb[0].mxu0
        %1861 = vmatprep.mubr.bf16.mxu0 %v1091
        %1862 = vmatmul.mubr.bf16.gmra.mrb[0].mxu0 %v1090
        %v1863 = vpop.f32.mrb[0].mxu0
        %v1864 = vadd.f32 %v1575, %v1863
        %v1865 = vpop.f32.mrb[0].mxu0
        %v1866 = vpop.f32.mrb[0].mxu0
        %v1867 = vadd.f32 %v1578, %v1866
        %v1868 = vpop.f32.mrb[0].mxu0
        %1869 = vmatprep.mubr.bf16.mxu0 %v1095
        %1870 = vmatmul.mubr.bf16.gmra.mrb[0].mxu0 %v1094
        %v1871 = vpop.f32.mrb[0].mxu0
        %v1872 = vadd.f32 %v1583, %v1871
        %v1873 = vpop.f32.mrb[0].mxu0
        %v1874 = vpop.f32.mrb[0].mxu0
        %v1875 = vadd.f32 %v1586, %v1874
        %v1876 = vpop.f32.mrb[0].mxu0
        %1877 = vmatprep.mubr.bf16.mxu0 %v1099
        %1878 = vmatmul.mubr.bf16.gmra.mrb[0].mxu0 %v1098
        %v1879 = vpop.f32.mrb[0].mxu0
        %v1880 = vadd.f32 %v1591, %v1879
        %v1881 = vpop.f32.mrb[0].mxu0
        %v1882 = vpop.f32.mrb[0].mxu0
        %v1883 = vadd.f32 %v1594, %v1882
        %v1884 = vpop.f32.mrb[0].mxu0
        %1885 = vmatprep.mubr.bf16.mxu0 %v1103
        %1886 = vmatmul.mubr.bf16.gmra.mrb[0].mxu0 %v1102
        %v1887 = vpop.f32.mrb[0].mxu0
        %v1888 = vadd.f32 %v1599, %v1887
        %v1889 = vpop.f32.mrb[0].mxu0
        %v1890 = vpop.f32.mrb[0].mxu0
        %v1891 = vadd.f32 %v1602, %v1890
        %v1892 = vpop.f32.mrb[0].mxu0
        %1893 = vmatprep.mubr.bf16.mxu0 %v1107
        %1894 = vmatmul.mubr.bf16.gmra.mrb[0].mxu0 %v1106
        %v1895 = vpop.f32.mrb[0].mxu0
        %v1896 = vadd.f32 %v1607, %v1895
        %v1897 = vpop.f32.mrb[0].mxu0
        %v1898 = vpop.f32.mrb[0].mxu0
        %v1899 = vadd.f32 %v1610, %v1898
        %v1900 = vpop.f32.mrb[0].mxu0
        %1901 = vmatprep.mubr.bf16.mxu0 %v1111
        %1902 = vmatmul.mubr.bf16.gmra.mrb[0].mxu0 %v1110
        %v1903 = vpop.f32.mrb[0].mxu0
        %v1904 = vadd.f32 %v1615, %v1903
        %v1905 = vpop.f32.mrb[0].mxu0
        %v1906 = vpop.f32.mrb[0].mxu0
        %v1907 = vadd.f32 %v1618, %v1906
        %v1908 = vpop.f32.mrb[0].mxu0
        %1909 = vmatprep.mubr.bf16.mxu0 %v1115
        %1910 = vmatmul.mubr.bf16.gmra.mrb[0].mxu0 %v1114
        %v1911 = vpop.f32.mrb[0].mxu0
        %v1912 = vadd.f32 %v1623, %v1911
        %v1913 = vpop.f32.mrb[0].mxu0
        %v1914 = vpop.f32.mrb[0].mxu0
        %v1915 = vadd.f32 %v1626, %v1914
        %v1916 = vpop.f32.mrb[0].mxu0
        %1917 = vmatprep.mubr.bf16.mxu0 %v1119
        %1918 = vmatmul.mubr.bf16.gmra.mrb[0].mxu0 %v1118
        %v1919 = vpop.f32.mrb[0].mxu0
        %v1920 = vadd.f32 %v1631, %v1919
        %v1921 = vpop.f32.mrb[0].mxu0
        %v1922 = vpop.f32.mrb[0].mxu0
        %v1923 = vadd.f32 %v1634, %v1922
        %v1924 = vpop.f32.mrb[0].mxu0
        %1925 = vmatprep.mubr.bf16.mxu0 %v1123
        %1926 = vmatmul.mubr.bf16.gmra.mrb[0].mxu0 %v1122
        %v1927 = vpop.f32.mrb[0].mxu0
        %v1928 = vadd.f32 %v1639, %v1927
        %v1929 = vpop.f32.mrb[0].mxu0
        %v1930 = vpop.f32.mrb[0].mxu0
        %v1931 = vadd.f32 %v1642, %v1930
        %v1932 = vpop.f32.mrb[0].mxu0
        %1933 = vmatprep.mubr.bf16.mxu0 %v1127
        %1934 = vmatmul.mubr.bf16.gmra.mrb[0].mxu0 %v1126
        %v1935 = vpop.f32.mrb[0].mxu0
        %v1936 = vadd.f32 %v1647, %v1935
        %v1937 = vpop.f32.mrb[0].mxu0
        %v1938 = vpop.f32.mrb[0].mxu0
        %v1939 = vadd.f32 %v1650, %v1938
        %v1940 = vpop.f32.mrb[0].mxu0
        %1941 = vmatprep.mubr.bf16.mxu0 %v1131
        %1942 = vmatmul.mubr.bf16.gmra.mrb[0].mxu0 %v1130
        %v1943 = vpop.f32.mrb[0].mxu0
        %v1944 = vadd.f32 %v1655, %v1943
        %v1945 = vpop.f32.mrb[0].mxu0
        %v1946 = vpop.f32.mrb[0].mxu0
        %v1947 = vadd.f32 %v1658, %v1946
        %v1948 = vpop.f32.mrb[0].mxu0
        %1949 = vmatprep.mubr.bf16.mxu0 %v1135
        %1950 = vmatmul.mubr.bf16.gmra.mrb[0].mxu0 %v1134
        %v1951 = vpop.f32.mrb[0].mxu0
        %v1952 = vadd.f32 %v1663, %v1951
        %v1953 = vpop.f32.mrb[0].mxu0
        %v1954 = vpop.f32.mrb[0].mxu0
        %v1955 = vadd.f32 %v1666, %v1954
        %v1956 = vpop.f32.mrb[0].mxu0
        %1957 = vmatprep.mubr.bf16.mxu0 %v1139
        %1958 = vmatmul.mubr.bf16.gmra.mrb[0].mxu0 %v1138
        %v1959 = vpop.f32.mrb[0].mxu0
        %v1960 = vadd.f32 %v1671, %v1959
        %v1961 = vpop.f32.mrb[0].mxu0
        %v1962 = vpop.f32.mrb[0].mxu0
        %v1963 = vadd.f32 %v1674, %v1962
        %v1964 = vpop.f32.mrb[0].mxu0
        %1965 = vmatprep.mubr.bf16.mxu0 %v1143
        %1966 = vmatmul.mubr.bf16.gmra.mrb[0].mxu0 %v1142
        %v1967 = vpop.f32.mrb[0].mxu0
        %v1968 = vadd.f32 %v1679, %v1967
        %v1969 = vpop.f32.mrb[0].mxu0
        %v1970 = vpop.f32.mrb[0].mxu0
        %v1971 = vadd.f32 %v1682, %v1970
        %v1972 = vpop.f32.mrb[0].mxu0
        %1973 = vmatprep.mubr.bf16.mxu0 %v1147
        %1974 = vmatmul.mubr.bf16.gmra.mrb[0].mxu0 %v1146
        %v1975 = vpop.f32.mrb[0].mxu0
        %v1976 = vadd.f32 %v1687, %v1975
        %v1977 = vpop.f32.mrb[0].mxu0
        %v1978 = vpop.f32.mrb[0].mxu0
        %v1979 = vadd.f32 %v1690, %v1978
        %v1980 = vpop.f32.mrb[0].mxu0
        %1981 = vmatprep.mubr.bf16.mxu0 %v1151
        %1982 = vmatmul.mubr.bf16.gmra.mrb[0].mxu0 %v1150
        %v1983 = vpop.f32.mrb[0].mxu0
        %v1984 = vadd.f32 %v1695, %v1983
        %v1985 = vpop.f32.mrb[0].mxu0
        %v1986 = vpop.f32.mrb[0].mxu0
        %v1987 = vadd.f32 %v1698, %v1986
        %v1988 = vpop.f32.mrb[0].mxu0
        %1989 = vmatprep.mubr.bf16.mxu0 %v1155
        %1990 = vmatmul.mubr.bf16.gmra.mrb[0].mxu0 %v1154
        %v1991 = vpop.f32.mrb[0].mxu0
        %v1992 = vadd.f32 %v1703, %v1991
        %v1993 = vpop.f32.mrb[0].mxu0
        %v1994 = vpop.f32.mrb[0].mxu0
        %v1995 = vadd.f32 %v1706, %v1994
        %v1996 = vpop.f32.mrb[0].mxu0
        %1997 = vmatprep.mubr.bf16.mxu0 %v1159
        %1998 = vmatmul.mubr.bf16.gmra.mrb[0].mxu0 %v1158
        %v1999 = vpop.f32.mrb[0].mxu0
        %v2000 = vadd.f32 %v1711, %v1999
        %v2001 = vpop.f32.mrb[0].mxu0
        %v2002 = vpop.f32.mrb[0].mxu0
        %v2003 = vadd.f32 %v1714, %v2002
        %v2004 = vpop.f32.mrb[0].mxu0
        %2005 = vmatprep.mubr.bf16.mxu0 %v1163
        %2006 = vmatmul.mubr.bf16.gmra.mrb[0].mxu0 %v1162
        %v2007 = vpop.f32.mrb[0].mxu0
        %v2008 = vadd.f32 %v1719, %v2007
        %v2009 = vpop.f32.mrb[0].mxu0
        %v2010 = vpop.f32.mrb[0].mxu0
        %v2011 = vadd.f32 %v1722, %v2010
        %v2012 = vpop.f32.mrb[0].mxu0
        %2013 = vmatprep.mubr.bf16.mxu0 %v1167
        %2014 = vmatmul.mubr.bf16.gmra.mrb[0].mxu0 %v1166
        %v2015 = vpop.f32.mrb[0].mxu0
        %v2016 = vadd.f32 %v1727, %v2015
        %v2017 = vpop.f32.mrb[0].mxu0
        %v2018 = vpop.f32.mrb[0].mxu0
        %v2019 = vadd.f32 %v1730, %v2018
        %v2020 = vpop.f32.mrb[0].mxu0
        %2021 = vmatprep.mubr.bf16.mxu0 %v1171
        %2022 = vmatmul.mubr.bf16.gmra.mrb[0].mxu0 %v1170
        %v2023 = vpop.f32.mrb[0].mxu0
        %v2024 = vadd.f32 %v1735, %v2023
        %v2025 = vpop.f32.mrb[0].mxu0
        %v2026 = vpop.f32.mrb[0].mxu0
        %v2027 = vadd.f32 %v1738, %v2026
        %v2028 = vpop.f32.mrb[0].mxu0
        %2029 = vmatprep.mubr.bf16.mxu0 %v1175
        %2030 = vmatmul.mubr.bf16.gmra.mrb[0].mxu0 %v1174
        %v2031 = vpop.f32.mrb[0].mxu0
        %v2032 = vadd.f32 %v1743, %v2031
        %v2033 = vpop.f32.mrb[0].mxu0
        %v2034 = vpop.f32.mrb[0].mxu0
        %v2035 = vadd.f32 %v1746, %v2034
        %v2036 = vpop.f32.mrb[0].mxu0
        %2037 = vmatprep.mubr.bf16.mxu0 %v1179
        %2038 = vmatmul.mubr.bf16.gmra.mrb[0].mxu0 %v1178
        %v2039 = vpop.f32.mrb[0].mxu0
        %v2040 = vadd.f32 %v1751, %v2039
        %v2041 = vpop.f32.mrb[0].mxu0
        %v2042 = vpop.f32.mrb[0].mxu0
        %v2043 = vadd.f32 %v1754, %v2042
        %v2044 = vpop.f32.mrb[0].mxu0
        %2045 = vmatprep.mubr.bf16.mxu0 %v1183
        %2046 = vmatmul.mubr.bf16.gmra.mrb[0].mxu0 %v1182
        %v2047 = vpop.f32.mrb[0].mxu0
        %v2048 = vadd.f32 %v1759, %v2047
        %v2049 = vpop.f32.mrb[0].mxu0
        %v2050 = vpop.f32.mrb[0].mxu0
        %v2051 = vadd.f32 %v1762, %v2050
        %v2052 = vpop.f32.mrb[0].mxu0
        %2053 = vmatprep.mubr.bf16.mxu0 %v1187
        %2054 = vmatmul.mubr.bf16.gmra.mrb[0].mxu0 %v1186
        %v2055 = vpop.f32.mrb[0].mxu0
        %v2056 = vadd.f32 %v1767, %v2055
        %v2057 = vpop.f32.mrb[0].mxu0
        %v2058 = vpop.f32.mrb[0].mxu0
        %v2059 = vadd.f32 %v1770, %v2058
        %v2060 = vpop.f32.mrb[0].mxu0
        %2061 = vmatprep.mubr.bf16.mxu0 %v1191
        %2062 = vmatmul.mubr.bf16.gmra.mrb[0].mxu0 %v1190
        %v2063 = vpop.f32.mrb[0].mxu0
        %v2064 = vadd.f32 %v1775, %v2063
        %v2065 = vpop.f32.mrb[0].mxu0
        %v2066 = vpop.f32.mrb[0].mxu0
        %v2067 = vadd.f32 %v1778, %v2066
        %v2068 = vpop.f32.mrb[0].mxu0
        %2069 = vmatprep.mubr.bf16.mxu0 %v1195
        %2070 = vmatmul.mubr.bf16.gmra.mrb[0].mxu0 %v1194
        %v2071 = vpop.f32.mrb[0].mxu0
        %v2072 = vadd.f32 %v1783, %v2071
        %v2073 = vpop.f32.mrb[0].mxu0
        %v2074 = vpop.f32.mrb[0].mxu0
        %v2075 = vadd.f32 %v1786, %v2074
        %v2076 = vpop.f32.mrb[0].mxu0
        %2077 = vmatprep.mubr.bf16.mxu0 %v1199
        %2078 = vmatmul.mubr.bf16.gmra.mrb[0].mxu0 %v1198
        %v2079 = vpop.f32.mrb[0].mxu0
        %v2080 = vadd.f32 %v1791, %v2079
        %v2081 = vpop.f32.mrb[0].mxu0
        %v2082 = vpop.f32.mrb[0].mxu0
        %v2083 = vadd.f32 %v1794, %v2082
        %v2084 = vpop.f32.mrb[0].mxu0
        %2085 = vmatprep.mubr.bf16.mxu0 %v1203
        %2086 = vmatmul.mubr.bf16.gmra.mrb[0].mxu0 %v1202
        %v2087 = vpop.f32.mrb[0].mxu0
        %v2088 = vadd.f32 %v1799, %v2087
        %v2089 = vpop.f32.mrb[0].mxu0
        %v2090 = vpop.f32.mrb[0].mxu0
        %v2091 = vadd.f32 %v1802, %v2090
        %v2092 = vpop.f32.mrb[0].mxu0
        %2093 = vmatprep.mubr.bf16.mxu0 %v1207
        %2094 = vmatmul.mubr.bf16.gmra.mrb[0].mxu0 %v1206
        %v2095 = vpop.f32.mrb[0].mxu0
        %v2096 = vadd.f32 %v1807, %v2095
        %v2097 = vpop.f32.mrb[0].mxu0
        %v2098 = vpop.f32.mrb[0].mxu0
        %v2099 = vadd.f32 %v1810, %v2098
        %v2100 = vpop.f32.mrb[0].mxu0
        %2101 = vmatprep.mubr.bf16.mxu0 %v1211
        %2102 = vmatmul.mubr.bf16.gmra.mrb[0].mxu0 %v1210
        %v2103 = vpop.f32.mrb[0].mxu0
        %v2104 = vadd.f32 %v1815, %v2103
        %v2105 = vpop.f32.mrb[0].mxu0
        %v2106 = vpop.f32.mrb[0].mxu0
        %v2107 = vadd.f32 %v1818, %v2106
        %v2108 = vpop.f32.mrb[0].mxu0
        %2109 = vdwg.mxu0
        %v2110 = vpack.c.bf16 %v1859, %v1856
        %v2111 = vpack.c.bf16 %v1867, %v1864
        %v2112 = vpack.c.bf16 %v1875, %v1872
        %v2113 = vpack.c.bf16 %v1883, %v1880
        %v2114 = vpack.c.bf16 %v1891, %v1888
        %v2115 = vpack.c.bf16 %v1899, %v1896
        %v2116 = vpack.c.bf16 %v1907, %v1904
        %v2117 = vpack.c.bf16 %v1915, %v1912
        %v2118 = vpack.c.bf16 %v1923, %v1920
        %v2119 = vpack.c.bf16 %v1931, %v1928
        %v2120 = vpack.c.bf16 %v1939, %v1936
        %v2121 = vpack.c.bf16 %v1947, %v1944
        %v2122 = vpack.c.bf16 %v1955, %v1952
        %v2123 = vpack.c.bf16 %v1963, %v1960
        %v2124 = vpack.c.bf16 %v1971, %v1968
        %v2125 = vpack.c.bf16 %v1979, %v1976
        %v2126 = vpack.c.bf16 %v1987, %v1984
        %v2127 = vpack.c.bf16 %v1995, %v1992
        %v2128 = vpack.c.bf16 %v2003, %v2000
        %v2129 = vpack.c.bf16 %v2011, %v2008
        %v2130 = vpack.c.bf16 %v2019, %v2016
        %v2131 = vpack.c.bf16 %v2027, %v2024
        %v2132 = vpack.c.bf16 %v2035, %v2032
        %v2133 = vpack.c.bf16 %v2043, %v2040
        %v2134 = vpack.c.bf16 %v2051, %v2048
        %v2135 = vpack.c.bf16 %v2059, %v2056
        %v2136 = vpack.c.bf16 %v2067, %v2064
        %v2137 = vpack.c.bf16 %v2075, %v2072
        %v2138 = vpack.c.bf16 %v2083, %v2080
        %v2139 = vpack.c.bf16 %v2091, %v2088
        %v2140 = vpack.c.bf16 %v2099, %v2096
        %v2141 = vpack.c.bf16 %v2107, %v2104
        %v2174 = vunpack.c.l.b16 %v2110
        %v2175 = vunpack.c.h.b16 %v2110
        %v2176 = vunpack.c.l.b16 %v2111
        %v2177 = vunpack.c.h.b16 %v2111
        %v2178 = vunpack.c.l.b16 %v2112
        %v2179 = vunpack.c.h.b16 %v2112
        %v2180 = vunpack.c.l.b16 %v2113
        %v2181 = vunpack.c.h.b16 %v2113
        %v2182 = vunpack.c.l.b16 %v2114
        %v2183 = vunpack.c.h.b16 %v2114
        %v2184 = vunpack.c.l.b16 %v2115
        %v2185 = vunpack.c.h.b16 %v2115
        %v2186 = vunpack.c.l.b16 %v2116
        %v2187 = vunpack.c.h.b16 %v2116
        %v2188 = vunpack.c.l.b16 %v2117
        %v2189 = vunpack.c.h.b16 %v2117
        %v2190 = vunpack.c.l.b16 %v2118
        %v2191 = vunpack.c.h.b16 %v2118
        %v2192 = vunpack.c.l.b16 %v2119
        %v2193 = vunpack.c.h.b16 %v2119
        %v2194 = vunpack.c.l.b16 %v2120
        %v2195 = vunpack.c.h.b16 %v2120
        %v2196 = vunpack.c.l.b16 %v2121
        %v2197 = vunpack.c.h.b16 %v2121
        %v2198 = vunpack.c.l.b16 %v2122
        %v2199 = vunpack.c.h.b16 %v2122
        %v2200 = vunpack.c.l.b16 %v2123
        %v2201 = vunpack.c.h.b16 %v2123
        %v2202 = vunpack.c.l.b16 %v2124
        %v2203 = vunpack.c.h.b16 %v2124
        %v2204 = vunpack.c.l.b16 %v2125
        %v2205 = vunpack.c.h.b16 %v2125
        %v2206 = vunpack.c.l.b16 %v2126
        %v2207 = vunpack.c.h.b16 %v2126
        %v2208 = vunpack.c.l.b16 %v2127
        %v2209 = vunpack.c.h.b16 %v2127
        %v2210 = vunpack.c.l.b16 %v2128
        %v2211 = vunpack.c.h.b16 %v2128
        %v2212 = vunpack.c.l.b16 %v2129
        %v2213 = vunpack.c.h.b16 %v2129
        %v2214 = vunpack.c.l.b16 %v2130
        %v2215 = vunpack.c.h.b16 %v2130
        %v2216 = vunpack.c.l.b16 %v2131
        %v2217 = vunpack.c.h.b16 %v2131
        %v2218 = vunpack.c.l.b16 %v2132
        %v2219 = vunpack.c.h.b16 %v2132
        %v2220 = vunpack.c.l.b16 %v2133
        %v2221 = vunpack.c.h.b16 %v2133
        %v2222 = vunpack.c.l.b16 %v2134
        %v2223 = vunpack.c.h.b16 %v2134
        %v2224 = vunpack.c.l.b16 %v2135
        %v2225 = vunpack.c.h.b16 %v2135
        %v2226 = vunpack.c.l.b16 %v2136
        %v2227 = vunpack.c.h.b16 %v2136
        %v2228 = vunpack.c.l.b16 %v2137
        %v2229 = vunpack.c.h.b16 %v2137
        %v2230 = vunpack.c.l.b16 %v2138
        %v2231 = vunpack.c.h.b16 %v2138
        %v2232 = vunpack.c.l.b16 %v2139
        %v2233 = vunpack.c.h.b16 %v2139
        %v2234 = vunpack.c.l.b16 %v2140
        %v2235 = vunpack.c.h.b16 %v2140
        %v2236 = vunpack.c.l.b16 %v2141
        %v2237 = vunpack.c.h.b16 %v2141
        %v2238 = vpack.c.b16 %v2174, %v2174
        %v2239 = vpack.c.b16 %v2175, %v2175
        %v2240 = vpack.c.b16 %v2176, %v2176
        %v2241 = vpack.c.b16 %v2177, %v2177
        %v2242 = vpack.c.b16 %v2178, %v2178
        %v2243 = vpack.c.b16 %v2179, %v2179
        %v2244 = vpack.c.b16 %v2180, %v2180
        %v2245 = vpack.c.b16 %v2181, %v2181
        %v2246 = vpack.c.b16 %v2182, %v2182
        %v2247 = vpack.c.b16 %v2183, %v2183
        %v2248 = vpack.c.b16 %v2184, %v2184
        %v2249 = vpack.c.b16 %v2185, %v2185
        %v2250 = vpack.c.b16 %v2186, %v2186
        %v2251 = vpack.c.b16 %v2187, %v2187
        %v2252 = vpack.c.b16 %v2188, %v2188
        %v2253 = vpack.c.b16 %v2189, %v2189
        %v2254 = vpack.c.b16 %v2190, %v2190
        %v2255 = vpack.c.b16 %v2191, %v2191
        %v2256 = vpack.c.b16 %v2192, %v2192
        %v2257 = vpack.c.b16 %v2193, %v2193
        %v2258 = vpack.c.b16 %v2194, %v2194
        %v2259 = vpack.c.b16 %v2195, %v2195
        %v2260 = vpack.c.b16 %v2196, %v2196
        %v2261 = vpack.c.b16 %v2197, %v2197
        %v2262 = vpack.c.b16 %v2198, %v2198
        %v2263 = vpack.c.b16 %v2199, %v2199
        %v2264 = vpack.c.b16 %v2200, %v2200
        %v2265 = vpack.c.b16 %v2201, %v2201
        %v2266 = vpack.c.b16 %v2202, %v2202
        %v2267 = vpack.c.b16 %v2203, %v2203
        %v2268 = vpack.c.b16 %v2204, %v2204
        %v2269 = vpack.c.b16 %v2205, %v2205
        %v2270 = vpack.c.b16 %v2206, %v2206
        %v2271 = vpack.c.b16 %v2207, %v2207
        %v2272 = vpack.c.b16 %v2208, %v2208
        %v2273 = vpack.c.b16 %v2209, %v2209
        %v2274 = vpack.c.b16 %v2210, %v2210
        %v2275 = vpack.c.b16 %v2211, %v2211
        %v2276 = vpack.c.b16 %v2212, %v2212
        %v2277 = vpack.c.b16 %v2213, %v2213
        %v2278 = vpack.c.b16 %v2214, %v2214
        %v2279 = vpack.c.b16 %v2215, %v2215
        %v2280 = vpack.c.b16 %v2216, %v2216
        %v2281 = vpack.c.b16 %v2217, %v2217
        %v2282 = vpack.c.b16 %v2218, %v2218
        %v2283 = vpack.c.b16 %v2219, %v2219
        %v2284 = vpack.c.b16 %v2220, %v2220
        %v2285 = vpack.c.b16 %v2221, %v2221
        %v2286 = vpack.c.b16 %v2222, %v2222
        %v2287 = vpack.c.b16 %v2223, %v2223
        %v2288 = vpack.c.b16 %v2224, %v2224
        %v2289 = vpack.c.b16 %v2225, %v2225
        %v2290 = vpack.c.b16 %v2226, %v2226
        %v2291 = vpack.c.b16 %v2227, %v2227
        %v2292 = vpack.c.b16 %v2228, %v2228
        %v2293 = vpack.c.b16 %v2229, %v2229
        %v2294 = vpack.c.b16 %v2230, %v2230
        %v2295 = vpack.c.b16 %v2231, %v2231
        %v2296 = vpack.c.b16 %v2232, %v2232
        %v2297 = vpack.c.b16 %v2233, %v2233
        %v2298 = vpack.c.b16 %v2234, %v2234
        %v2299 = vpack.c.b16 %v2235, %v2235
        %v2300 = vpack.c.b16 %v2236, %v2236
        %v2301 = vpack.c.b16 %v2237, %v2237
        %2366 = vst [vmem:[%s422] sm:$0xf] %v2238
        %2367 = vst [vmem:[%s422 + $0x4] sm:$0xf] %v2239
        %2368 = vst [vmem:[%s422 + $0x8] sm:$0xf] %v2240
        %2369 = vst [vmem:[%s422 + $0xc] sm:$0xf] %v2241
        %2370 = vst [vmem:[%s422 + $0x10] sm:$0xf] %v2242
        %2371 = vst [vmem:[%s422 + $0x14] sm:$0xf] %v2243
        %2372 = vst [vmem:[%s422 + $0x18] sm:$0xf] %v2244
        %2373 = vst [vmem:[%s422 + $0x1c] sm:$0xf] %v2245
        %2374 = vst [vmem:[%s422 + $0x20] sm:$0xf] %v2246
        %2375 = vst [vmem:[%s422 + $0x24] sm:$0xf] %v2247
        %2376 = vst [vmem:[%s422 + $0x28] sm:$0xf] %v2248
        %2377 = vst [vmem:[%s422 + $0x2c] sm:$0xf] %v2249
        %2378 = vst [vmem:[%s422 + $0x30] sm:$0xf] %v2250
        %2379 = vst [vmem:[%s422 + $0x34] sm:$0xf] %v2251
        %2380 = vst [vmem:[%s422 + $0x38] sm:$0xf] %v2252
        %2381 = vst [vmem:[%s422 + $0x3c] sm:$0xf] %v2253
        %2382 = vst [vmem:[%s422 + $0x40] sm:$0xf] %v2254
        %2383 = vst [vmem:[%s422 + $0x44] sm:$0xf] %v2255
        %2384 = vst [vmem:[%s422 + $0x48] sm:$0xf] %v2256
        %2385 = vst [vmem:[%s422 + $0x4c] sm:$0xf] %v2257
        %2386 = vst [vmem:[%s422 + $0x50] sm:$0xf] %v2258
        %2387 = vst [vmem:[%s422 + $0x54] sm:$0xf] %v2259
        %2388 = vst [vmem:[%s422 + $0x58] sm:$0xf] %v2260
        %2389 = vst [vmem:[%s422 + $0x5c] sm:$0xf] %v2261
        %2390 = vst [vmem:[%s422 + $0x60] sm:$0xf] %v2262
        %2391 = vst [vmem:[%s422 + $0x64] sm:$0xf] %v2263
        %2392 = vst [vmem:[%s422 + $0x68] sm:$0xf] %v2264
        %2393 = vst [vmem:[%s422 + $0x6c] sm:$0xf] %v2265
        %2394 = vst [vmem:[%s422 + $0x70] sm:$0xf] %v2266
        %2395 = vst [vmem:[%s422 + $0x74] sm:$0xf] %v2267
        %2396 = vst [vmem:[%s422 + $0x78] sm:$0xf] %v2268
        %2397 = vst [vmem:[%s422 + $0x7c] sm:$0xf] %v2269
        %2398 = vst [vmem:[%s422 + $0x80] sm:$0xf] %v2270
        %2399 = vst [vmem:[%s422 + $0x84] sm:$0xf] %v2271
        %2400 = vst [vmem:[%s422 + $0x88] sm:$0xf] %v2272
        %2401 = vst [vmem:[%s422 + $0x8c] sm:$0xf] %v2273
        %2402 = vst [vmem:[%s422 + $0x90] sm:$0xf] %v2274
        %2403 = vst [vmem:[%s422 + $0x94] sm:$0xf] %v2275
        %2404 = vst [vmem:[%s422 + $0x98] sm:$0xf] %v2276
        %2405 = vst [vmem:[%s422 + $0x9c] sm:$0xf] %v2277
        %2406 = vst [vmem:[%s422 + $0xa0] sm:$0xf] %v2278
        %2407 = vst [vmem:[%s422 + $0xa4] sm:$0xf] %v2279
        %2408 = vst [vmem:[%s422 + $0xa8] sm:$0xf] %v2280
        %2409 = vst [vmem:[%s422 + $0xac] sm:$0xf] %v2281
        %2410 = vst [vmem:[%s422 + $0xb0] sm:$0xf] %v2282
        %2411 = vst [vmem:[%s422 + $0xb4] sm:$0xf] %v2283
        %2412 = vst [vmem:[%s422 + $0xb8] sm:$0xf] %v2284
        %2413 = vst [vmem:[%s422 + $0xbc] sm:$0xf] %v2285
        %2414 = vst [vmem:[%s422 + $0xc0] sm:$0xf] %v2286
        %2415 = vst [vmem:[%s422 + $0xc4] sm:$0xf] %v2287
        %2416 = vst [vmem:[%s422 + $0xc8] sm:$0xf] %v2288
        %2417 = vst [vmem:[%s422 + $0xcc] sm:$0xf] %v2289
        %2418 = vst [vmem:[%s422 + $0xd0] sm:$0xf] %v2290
        %2419 = vst [vmem:[%s422 + $0xd4] sm:$0xf] %v2291
        %2420 = vst [vmem:[%s422 + $0xd8] sm:$0xf] %v2292
        %2421 = vst [vmem:[%s422 + $0xdc] sm:$0xf] %v2293
        %2422 = vst [vmem:[%s422 + $0xe0] sm:$0xf] %v2294
        %2423 = vst [vmem:[%s422 + $0xe4] sm:$0xf] %v2295
        %2424 = vst [vmem:[%s422 + $0xe8] sm:$0xf] %v2296
        %2425 = vst [vmem:[%s422 + $0xec] sm:$0xf] %v2297
        %2426 = vst [vmem:[%s422 + $0xf0] sm:$0xf] %v2298
        %2427 = vst [vmem:[%s422 + $0xf4] sm:$0xf] %v2299
        %2428 = vst [vmem:[%s422 + $0xf8] sm:$0xf] %v2300
        %2429 = vst [vmem:[%s422 + $0xfc] sm:$0xf] %v2301
        %v2430 = vld [vmem:[%s382] sm:$0xff]
        %v2431 = vld [vmem:[%s382 + $0x8] sm:$0xff]
        %v2432 = vld [vmem:[%s382 + $0x10] sm:$0xff]
        %v2433 = vld [vmem:[%s382 + $0x18] sm:$0xff]
        %v2434 = vld [vmem:[%s382 + $0x20] sm:$0xff]
        %v2435 = vld [vmem:[%s382 + $0x28] sm:$0xff]
        %v2436 = vld [vmem:[%s382 + $0x30] sm:$0xff]
        %v2437 = vld [vmem:[%s382 + $0x38] sm:$0xff]
        %v2438 = vld [vmem:[%s382 + $0x40] sm:$0xff]
        %v2439 = vld [vmem:[%s382 + $0x48] sm:$0xff]
        %v2440 = vld [vmem:[%s382 + $0x50] sm:$0xff]
        %v2441 = vld [vmem:[%s382 + $0x58] sm:$0xff]
        %v2442 = vld [vmem:[%s382 + $0x60] sm:$0xff]
        %v2443 = vld [vmem:[%s382 + $0x68] sm:$0xff]
        %v2444 = vld [vmem:[%s382 + $0x70] sm:$0xff]
        %v2445 = vld [vmem:[%s382 + $0x78] sm:$0xff]
        %v2446 = vld [vmem:[%s382 + $0x80] sm:$0xff]
        %v2447 = vld [vmem:[%s382 + $0x88] sm:$0xff]
        %v2448 = vld [vmem:[%s382 + $0x90] sm:$0xff]
        %v2449 = vld [vmem:[%s382 + $0x98] sm:$0xff]
        %v2450 = vld [vmem:[%s382 + $0xa0] sm:$0xff]
        %v2451 = vld [vmem:[%s382 + $0xa8] sm:$0xff]
        %v2452 = vld [vmem:[%s382 + $0xb0] sm:$0xff]
        %v2453 = vld [vmem:[%s382 + $0xb8] sm:$0xff]
        %v2454 = vld [vmem:[%s382 + $0xc0] sm:$0xff]
        %v2455 = vld [vmem:[%s382 + $0xc8] sm:$0xff]
        %v2456 = vld [vmem:[%s382 + $0xd0] sm:$0xff]
        %v2457 = vld [vmem:[%s382 + $0xd8] sm:$0xff]
        %v2458 = vld [vmem:[%s382 + $0xe0] sm:$0xff]
        %v2459 = vld [vmem:[%s382 + $0xe8] sm:$0xff]
        %v2460 = vld [vmem:[%s382 + $0xf0] sm:$0xff]
        %v2461 = vld [vmem:[%s382 + $0xf8] sm:$0xff]
        %v2462 = vld [vmem:[%s382 + $0x100] sm:$0xff]
        %v2463 = vld [vmem:[%s382 + $0x108] sm:$0xff]
        %v2464 = vld [vmem:[%s382 + $0x110] sm:$0xff]
        %v2465 = vld [vmem:[%s382 + $0x118] sm:$0xff]
        %v2466 = vld [vmem:[%s382 + $0x120] sm:$0xff]
        %v2467 = vld [vmem:[%s382 + $0x128] sm:$0xff]
        %v2468 = vld [vmem:[%s382 + $0x130] sm:$0xff]
        %v2469 = vld [vmem:[%s382 + $0x138] sm:$0xff]
        %v2470 = vld [vmem:[%s382 + $0x140] sm:$0xff]
        %v2471 = vld [vmem:[%s382 + $0x148] sm:$0xff]
        %v2472 = vld [vmem:[%s382 + $0x150] sm:$0xff]
        %v2473 = vld [vmem:[%s382 + $0x158] sm:$0xff]
        %v2474 = vld [vmem:[%s382 + $0x160] sm:$0xff]
        %v2475 = vld [vmem:[%s382 + $0x168] sm:$0xff]
        %v2476 = vld [vmem:[%s382 + $0x170] sm:$0xff]
        %v2477 = vld [vmem:[%s382 + $0x178] sm:$0xff]
        %v2478 = vld [vmem:[%s382 + $0x180] sm:$0xff]
        %v2479 = vld [vmem:[%s382 + $0x188] sm:$0xff]
        %v2480 = vld [vmem:[%s382 + $0x190] sm:$0xff]
        %v2481 = vld [vmem:[%s382 + $0x198] sm:$0xff]
        %v2482 = vld [vmem:[%s382 + $0x1a0] sm:$0xff]
        %v2483 = vld [vmem:[%s382 + $0x1a8] sm:$0xff]
        %v2484 = vld [vmem:[%s382 + $0x1b0] sm:$0xff]
        %v2485 = vld [vmem:[%s382 + $0x1b8] sm:$0xff]
        %v2486 = vld [vmem:[%s382 + $0x1c0] sm:$0xff]
        %v2487 = vld [vmem:[%s382 + $0x1c8] sm:$0xff]
        %v2488 = vld [vmem:[%s382 + $0x1d0] sm:$0xff]
        %v2489 = vld [vmem:[%s382 + $0x1d8] sm:$0xff]
        %v2490 = vld [vmem:[%s382 + $0x1e0] sm:$0xff]
        %v2491 = vld [vmem:[%s382 + $0x1e8] sm:$0xff]
        %v2492 = vld [vmem:[%s382 + $0x1f0] sm:$0xff]
        %v2493 = vld [vmem:[%s382 + $0x1f8] sm:$0xff]
        %v2494 = vmul.f32 %v1856, 0.33333334
        %v2495 = vmul.f32 %v1859, 0.33333334
        %v2496 = vmul.f32 %v1864, 0.33333334
        %v2497 = vmul.f32 %v1867, 0.33333334
        %v2498 = vmul.f32 %v1872, 0.33333334
        %v2499 = vmul.f32 %v1875, 0.33333334
        %v2500 = vmul.f32 %v1880, 0.33333334
        %v2501 = vmul.f32 %v1883, 0.33333334
        %v2502 = vmul.f32 %v1888, 0.33333334
        %v2503 = vmul.f32 %v1891, 0.33333334
        %v2504 = vmul.f32 %v1896, 0.33333334
        %v2505 = vmul.f32 %v1899, 0.33333334
        %v2506 = vmul.f32 %v1904, 0.33333334
        %v2507 = vmul.f32 %v1907, 0.33333334
        %v2508 = vmul.f32 %v1912, 0.33333334
        %v2509 = vmul.f32 %v1915, 0.33333334
        %v2510 = vmul.f32 %v1920, 0.33333334
        %v2511 = vmul.f32 %v1923, 0.33333334
        %v2512 = vmul.f32 %v1928, 0.33333334
        %v2513 = vmul.f32 %v1931, 0.33333334
        %v2514 = vmul.f32 %v1936, 0.33333334
        %v2515 = vmul.f32 %v1939, 0.33333334
        %v2516 = vmul.f32 %v1944, 0.33333334
        %v2517 = vmul.f32 %v1947, 0.33333334
        %v2518 = vmul.f32 %v1952, 0.33333334
        %v2519 = vmul.f32 %v1955, 0.33333334
        %v2520 = vmul.f32 %v1960, 0.33333334
        %v2521 = vmul.f32 %v1963, 0.33333334
        %v2522 = vmul.f32 %v1968, 0.33333334
        %v2523 = vmul.f32 %v1971, 0.33333334
        %v2524 = vmul.f32 %v1976, 0.33333334
        %v2525 = vmul.f32 %v1979, 0.33333334
        %v2526 = vmul.f32 %v1984, 0.33333334
        %v2527 = vmul.f32 %v1987, 0.33333334
        %v2528 = vmul.f32 %v1992, 0.33333334
        %v2529 = vmul.f32 %v1995, 0.33333334
        %v2530 = vmul.f32 %v2000, 0.33333334
        %v2531 = vmul.f32 %v2003, 0.33333334
        %v2532 = vmul.f32 %v2008, 0.33333334
        %v2533 = vmul.f32 %v2011, 0.33333334
        %v2534 = vmul.f32 %v2016, 0.33333334
        %v2535 = vmul.f32 %v2019, 0.33333334
        %v2536 = vmul.f32 %v2024, 0.33333334
        %v2537 = vmul.f32 %v2027, 0.33333334
        %v2538 = vmul.f32 %v2032, 0.33333334
        %v2539 = vmul.f32 %v2035, 0.33333334
        %v2540 = vmul.f32 %v2040, 0.33333334
        %v2541 = vmul.f32 %v2043, 0.33333334
        %v2542 = vmul.f32 %v2048, 0.33333334
        %v2543 = vmul.f32 %v2051, 0.33333334
        %v2544 = vmul.f32 %v2056, 0.33333334
        %v2545 = vmul.f32 %v2059, 0.33333334
        %v2546 = vmul.f32 %v2064, 0.33333334
        %v2547 = vmul.f32 %v2067, 0.33333334
        %v2548 = vmul.f32 %v2072, 0.33333334
        %v2549 = vmul.f32 %v2075, 0.33333334
        %v2550 = vmul.f32 %v2080, 0.33333334
        %v2551 = vmul.f32 %v2083, 0.33333334
        %v2552 = vmul.f32 %v2088, 0.33333334
        %v2553 = vmul.f32 %v2091, 0.33333334
        %v2554 = vmul.f32 %v2096, 0.33333334
        %v2555 = vmul.f32 %v2099, 0.33333334
        %v2556 = vmul.f32 %v2104, 0.33333334
        %v2557 = vmul.f32 %v2107, 0.33333334
        %v2558 = vadd.f32 %v2430, %v2494
        %v2559 = vadd.f32 %v2431, %v2495
        %v2560 = vadd.f32 %v2432, %v2496
        %v2561 = vadd.f32 %v2433, %v2497
        %v2562 = vadd.f32 %v2434, %v2498
        %v2563 = vadd.f32 %v2435, %v2499
        %v2564 = vadd.f32 %v2436, %v2500
        %v2565 = vadd.f32 %v2437, %v2501
        %v2566 = vadd.f32 %v2438, %v2502
        %v2567 = vadd.f32 %v2439, %v2503
        %v2568 = vadd.f32 %v2440, %v2504
        %v2569 = vadd.f32 %v2441, %v2505
        %v2570 = vadd.f32 %v2442, %v2506
        %v2571 = vadd.f32 %v2443, %v2507
        %v2572 = vadd.f32 %v2444, %v2508
        %v2573 = vadd.f32 %v2445, %v2509
        %v2574 = vadd.f32 %v2446, %v2510
        %v2575 = vadd.f32 %v2447, %v2511
        %v2576 = vadd.f32 %v2448, %v2512
        %v2577 = vadd.f32 %v2449, %v2513
        %v2578 = vadd.f32 %v2450, %v2514
        %v2579 = vadd.f32 %v2451, %v2515
        %v2580 = vadd.f32 %v2452, %v2516
        %v2581 = vadd.f32 %v2453, %v2517
        %v2582 = vadd.f32 %v2454, %v2518
        %v2583 = vadd.f32 %v2455, %v2519
        %v2584 = vadd.f32 %v2456, %v2520
        %v2585 = vadd.f32 %v2457, %v2521
        %v2586 = vadd.f32 %v2458, %v2522
        %v2587 = vadd.f32 %v2459, %v2523
        %v2588 = vadd.f32 %v2460, %v2524
        %v2589 = vadd.f32 %v2461, %v2525
        %v2590 = vadd.f32 %v2462, %v2526
        %v2591 = vadd.f32 %v2463, %v2527
        %v2592 = vadd.f32 %v2464, %v2528
        %v2593 = vadd.f32 %v2465, %v2529
        %v2594 = vadd.f32 %v2466, %v2530
        %v2595 = vadd.f32 %v2467, %v2531
        %v2596 = vadd.f32 %v2468, %v2532
        %v2597 = vadd.f32 %v2469, %v2533
        %v2598 = vadd.f32 %v2470, %v2534
        %v2599 = vadd.f32 %v2471, %v2535
        %v2600 = vadd.f32 %v2472, %v2536
        %v2601 = vadd.f32 %v2473, %v2537
        %v2602 = vadd.f32 %v2474, %v2538
        %v2603 = vadd.f32 %v2475, %v2539
        %v2604 = vadd.f32 %v2476, %v2540
        %v2605 = vadd.f32 %v2477, %v2541
        %v2606 = vadd.f32 %v2478, %v2542
        %v2607 = vadd.f32 %v2479, %v2543
        %v2608 = vadd.f32 %v2480, %v2544
        %v2609 = vadd.f32 %v2481, %v2545
        %v2610 = vadd.f32 %v2482, %v2546
        %v2611 = vadd.f32 %v2483, %v2547
        %v2612 = vadd.f32 %v2484, %v2548
        %v2613 = vadd.f32 %v2485, %v2549
        %v2614 = vadd.f32 %v2486, %v2550
        %v2615 = vadd.f32 %v2487, %v2551
        %v2616 = vadd.f32 %v2488, %v2552
        %v2617 = vadd.f32 %v2489, %v2553
        %v2618 = vadd.f32 %v2490, %v2554
        %v2619 = vadd.f32 %v2491, %v2555
        %v2620 = vadd.f32 %v2492, %v2556
        %v2621 = vadd.f32 %v2493, %v2557
        %2622 = vst [vmem:[%s429] sm:$0xff] %v2558
        %2623 = vst [vmem:[%s429 + $0x8] sm:$0xff] %v2559
        %2624 = vst [vmem:[%s429 + $0x10] sm:$0xff] %v2560
        %2625 = vst [vmem:[%s429 + $0x18] sm:$0xff] %v2561
        %2626 = vst [vmem:[%s429 + $0x20] sm:$0xff] %v2562
        %2627 = vst [vmem:[%s429 + $0x28] sm:$0xff] %v2563
        %2628 = vst [vmem:[%s429 + $0x30] sm:$0xff] %v2564
        %2629 = vst [vmem:[%s429 + $0x38] sm:$0xff] %v2565
        %2630 = vst [vmem:[%s429 + $0x40] sm:$0xff] %v2566
        %2631 = vst [vmem:[%s429 + $0x48] sm:$0xff] %v2567
        %2632 = vst [vmem:[%s429 + $0x50] sm:$0xff] %v2568
        %2633 = vst [vmem:[%s429 + $0x58] sm:$0xff] %v2569
        %2634 = vst [vmem:[%s429 + $0x60] sm:$0xff] %v2570
        %2635 = vst [vmem:[%s429 + $0x68] sm:$0xff] %v2571
        %2636 = vst [vmem:[%s429 + $0x70] sm:$0xff] %v2572
        %2637 = vst [vmem:[%s429 + $0x78] sm:$0xff] %v2573
        %2638 = vst [vmem:[%s429 + $0x80] sm:$0xff] %v2574
        %2639 = vst [vmem:[%s429 + $0x88] sm:$0xff] %v2575
        %2640 = vst [vmem:[%s429 + $0x90] sm:$0xff] %v2576
        %2641 = vst [vmem:[%s429 + $0x98] sm:$0xff] %v2577
        %2642 = vst [vmem:[%s429 + $0xa0] sm:$0xff] %v2578
        %2643 = vst [vmem:[%s429 + $0xa8] sm:$0xff] %v2579
        %2644 = vst [vmem:[%s429 + $0xb0] sm:$0xff] %v2580
        %2645 = vst [vmem:[%s429 + $0xb8] sm:$0xff] %v2581
        %2646 = vst [vmem:[%s429 + $0xc0] sm:$0xff] %v2582
        %2647 = vst [vmem:[%s429 + $0xc8] sm:$0xff] %v2583
        %2648 = vst [vmem:[%s429 + $0xd0] sm:$0xff] %v2584
        %2649 = vst [vmem:[%s429 + $0xd8] sm:$0xff] %v2585
        %2650 = vst [vmem:[%s429 + $0xe0] sm:$0xff] %v2586
        %2651 = vst [vmem:[%s429 + $0xe8] sm:$0xff] %v2587
        %2652 = vst [vmem:[%s429 + $0xf0] sm:$0xff] %v2588
        %2653 = vst [vmem:[%s429 + $0xf8] sm:$0xff] %v2589
        %2654 = vst [vmem:[%s429 + $0x100] sm:$0xff] %v2590
        %2655 = vst [vmem:[%s429 + $0x108] sm:$0xff] %v2591
        %2656 = vst [vmem:[%s429 + $0x110] sm:$0xff] %v2592
        %2657 = vst [vmem:[%s429 + $0x118] sm:$0xff] %v2593
        %2658 = vst [vmem:[%s429 + $0x120] sm:$0xff] %v2594
        %2659 = vst [vmem:[%s429 + $0x128] sm:$0xff] %v2595
        %2660 = vst [vmem:[%s429 + $0x130] sm:$0xff] %v2596
        %2661 = vst [vmem:[%s429 + $0x138] sm:$0xff] %v2597
        %2662 = vst [vmem:[%s429 + $0x140] sm:$0xff] %v2598
        %2663 = vst [vmem:[%s429 + $0x148] sm:$0xff] %v2599
        %2664 = vst [vmem:[%s429 + $0x150] sm:$0xff] %v2600
        %2665 = vst [vmem:[%s429 + $0x158] sm:$0xff] %v2601
        %2666 = vst [vmem:[%s429 + $0x160] sm:$0xff] %v2602
        %2667 = vst [vmem:[%s429 + $0x168] sm:$0xff] %v2603
        %2668 = vst [vmem:[%s429 + $0x170] sm:$0xff] %v2604
        %2669 = vst [vmem:[%s429 + $0x178] sm:$0xff] %v2605
        %2670 = vst [vmem:[%s429 + $0x180] sm:$0xff] %v2606
        %2671 = vst [vmem:[%s429 + $0x188] sm:$0xff] %v2607
        %2672 = vst [vmem:[%s429 + $0x190] sm:$0xff] %v2608
        %2673 = vst [vmem:[%s429 + $0x198] sm:$0xff] %v2609
        %2674 = vst [vmem:[%s429 + $0x1a0] sm:$0xff] %v2610
        %2675 = vst [vmem:[%s429 + $0x1a8] sm:$0xff] %v2611
        %2676 = vst [vmem:[%s429 + $0x1b0] sm:$0xff] %v2612
        %2677 = vst [vmem:[%s429 + $0x1b8] sm:$0xff] %v2613
        %2678 = vst [vmem:[%s429 + $0x1c0] sm:$0xff] %v2614
        %2679 = vst [vmem:[%s429 + $0x1c8] sm:$0xff] %v2615
        %2680 = vst [vmem:[%s429 + $0x1d0] sm:$0xff] %v2616
        %2681 = vst [vmem:[%s429 + $0x1d8] sm:$0xff] %v2617
        %2682 = vst [vmem:[%s429 + $0x1e0] sm:$0xff] %v2618
        %2683 = vst [vmem:[%s429 + $0x1e8] sm:$0xff] %v2619
        %2684 = vst [vmem:[%s429 + $0x1f0] sm:$0xff] %v2620
        %2685 = vst [vmem:[%s429 + $0x1f8] sm:$0xff] %v2621
        %v2686 = vld [vmem:[#allocation2] sm:$0xff]
        %v2687 = vld [vmem:[#allocation2 + $0x8] sm:$0xff]
        %v2688 = vld [vmem:[#allocation2 + $0x10] sm:$0xff]
        %v2689 = vld [vmem:[#allocation2 + $0x18] sm:$0xff]
        %v2690 = vld [vmem:[#allocation2 + $0x20] sm:$0xff]
        %v2691 = vld [vmem:[#allocation2 + $0x28] sm:$0xff]
        %v2692 = vld [vmem:[#allocation2 + $0x30] sm:$0xff]
        %v2693 = vld [vmem:[#allocation2 + $0x38] sm:$0xff]
        %v2694 = vld [vmem:[#allocation2 + $0x40] sm:$0xff]
        %v2695 = vld [vmem:[#allocation2 + $0x48] sm:$0xff]
        %v2696 = vld [vmem:[#allocation2 + $0x50] sm:$0xff]
        %v2697 = vld [vmem:[#allocation2 + $0x58] sm:$0xff]
        %v2698 = vld [vmem:[#allocation2 + $0x60] sm:$0xff]
        %v2699 = vld [vmem:[#allocation2 + $0x68] sm:$0xff]
        %v2700 = vld [vmem:[#allocation2 + $0x70] sm:$0xff]
        %v2701 = vld [vmem:[#allocation2 + $0x78] sm:$0xff]
        %v2702 = vld [vmem:[#allocation2 + $0x80] sm:$0xff]
        %v2703 = vld [vmem:[#allocation2 + $0x88] sm:$0xff]
        %v2704 = vld [vmem:[#allocation2 + $0x90] sm:$0xff]
        %v2705 = vld [vmem:[#allocation2 + $0x98] sm:$0xff]
        %v2706 = vld [vmem:[#allocation2 + $0xa0] sm:$0xff]
        %v2707 = vld [vmem:[#allocation2 + $0xa8] sm:$0xff]
        %v2708 = vld [vmem:[#allocation2 + $0xb0] sm:$0xff]
        %v2709 = vld [vmem:[#allocation2 + $0xb8] sm:$0xff]
        %v2710 = vld [vmem:[#allocation2 + $0xc0] sm:$0xff]
        %v2711 = vld [vmem:[#allocation2 + $0xc8] sm:$0xff]
        %v2712 = vld [vmem:[#allocation2 + $0xd0] sm:$0xff]
        %v2713 = vld [vmem:[#allocation2 + $0xd8] sm:$0xff]
        %v2714 = vld [vmem:[#allocation2 + $0xe0] sm:$0xff]
        %v2715 = vld [vmem:[#allocation2 + $0xe8] sm:$0xff]
        %v2716 = vld [vmem:[#allocation2 + $0xf0] sm:$0xff]
        %v2717 = vld [vmem:[#allocation2 + $0xf8] sm:$0xff]
        %v2718 = vld [vmem:[#allocation2 + $0x100] sm:$0xff]
        %v2719 = vld [vmem:[#allocation2 + $0x108] sm:$0xff]
        %v2720 = vld [vmem:[#allocation2 + $0x110] sm:$0xff]
        %v2721 = vld [vmem:[#allocation2 + $0x118] sm:$0xff]
        %v2722 = vld [vmem:[#allocation2 + $0x120] sm:$0xff]
        %v2723 = vld [vmem:[#allocation2 + $0x128] sm:$0xff]
        %v2724 = vld [vmem:[#allocation2 + $0x130] sm:$0xff]
        %v2725 = vld [vmem:[#allocation2 + $0x138] sm:$0xff]
        %v2726 = vld [vmem:[#allocation2 + $0x140] sm:$0xff]
        %v2727 = vld [vmem:[#allocation2 + $0x148] sm:$0xff]
        %v2728 = vld [vmem:[#allocation2 + $0x150] sm:$0xff]
        %v2729 = vld [vmem:[#allocation2 + $0x158] sm:$0xff]
        %v2730 = vld [vmem:[#allocation2 + $0x160] sm:$0xff]
        %v2731 = vld [vmem:[#allocation2 + $0x168] sm:$0xff]
        %v2732 = vld [vmem:[#allocation2 + $0x170] sm:$0xff]
        %v2733 = vld [vmem:[#allocation2 + $0x178] sm:$0xff]
        %v2734 = vld [vmem:[#allocation2 + $0x180] sm:$0xff]
        %v2735 = vld [vmem:[#allocation2 + $0x188] sm:$0xff]
        %v2736 = vld [vmem:[#allocation2 + $0x190] sm:$0xff]
        %v2737 = vld [vmem:[#allocation2 + $0x198] sm:$0xff]
        %v2738 = vld [vmem:[#allocation2 + $0x1a0] sm:$0xff]
        %v2739 = vld [vmem:[#allocation2 + $0x1a8] sm:$0xff]
        %v2740 = vld [vmem:[#allocation2 + $0x1b0] sm:$0xff]
        %v2741 = vld [vmem:[#allocation2 + $0x1b8] sm:$0xff]
        %v2742 = vld [vmem:[#allocation2 + $0x1c0] sm:$0xff]
        %v2743 = vld [vmem:[#allocation2 + $0x1c8] sm:$0xff]
        %v2744 = vld [vmem:[#allocation2 + $0x1d0] sm:$0xff]
        %v2745 = vld [vmem:[#allocation2 + $0x1d8] sm:$0xff]
        %v2746 = vld [vmem:[#allocation2 + $0x1e0] sm:$0xff]
        %v2747 = vld [vmem:[#allocation2 + $0x1e8] sm:$0xff]
        %v2748 = vld [vmem:[#allocation2 + $0x1f0] sm:$0xff]
        %v2749 = vld [vmem:[#allocation2 + $0x1f8] sm:$0xff]
        %v2750 = vld [vmem:[%s373] sm:$0xf]
        %v2751 = vld [vmem:[%s373 + $0x4] sm:$0xf]
        %v2752 = vld [vmem:[%s373 + $0x8] sm:$0xf]
        %v2753 = vld [vmem:[%s373 + $0xc] sm:$0xf]
        %v2754 = vld [vmem:[%s373 + $0x10] sm:$0xf]
        %v2755 = vld [vmem:[%s373 + $0x14] sm:$0xf]
        %v2756 = vld [vmem:[%s373 + $0x18] sm:$0xf]
        %v2757 = vld [vmem:[%s373 + $0x1c] sm:$0xf]
        %v2758 = vld [vmem:[%s373 + $0x20] sm:$0xf]
        %v2759 = vld [vmem:[%s373 + $0x24] sm:$0xf]
        %v2760 = vld [vmem:[%s373 + $0x28] sm:$0xf]
        %v2761 = vld [vmem:[%s373 + $0x2c] sm:$0xf]
        %v2762 = vld [vmem:[%s373 + $0x30] sm:$0xf]
        %v2763 = vld [vmem:[%s373 + $0x34] sm:$0xf]
        %v2764 = vld [vmem:[%s373 + $0x38] sm:$0xf]
        %v2765 = vld [vmem:[%s373 + $0x3c] sm:$0xf]
        %v2766 = vld [vmem:[%s373 + $0x40] sm:$0xf]
        %v2767 = vld [vmem:[%s373 + $0x44] sm:$0xf]
        %v2768 = vld [vmem:[%s373 + $0x48] sm:$0xf]
        %v2769 = vld [vmem:[%s373 + $0x4c] sm:$0xf]
        %v2770 = vld [vmem:[%s373 + $0x50] sm:$0xf]
        %v2771 = vld [vmem:[%s373 + $0x54] sm:$0xf]
        %v2772 = vld [vmem:[%s373 + $0x58] sm:$0xf]
        %v2773 = vld [vmem:[%s373 + $0x5c] sm:$0xf]
        %v2774 = vld [vmem:[%s373 + $0x60] sm:$0xf]
        %v2775 = vld [vmem:[%s373 + $0x64] sm:$0xf]
        %v2776 = vld [vmem:[%s373 + $0x68] sm:$0xf]
        %v2777 = vld [vmem:[%s373 + $0x6c] sm:$0xf]
        %v2778 = vld [vmem:[%s373 + $0x70] sm:$0xf]
        %v2779 = vld [vmem:[%s373 + $0x74] sm:$0xf]
        %v2780 = vld [vmem:[%s373 + $0x78] sm:$0xf]
        %v2781 = vld [vmem:[%s373 + $0x7c] sm:$0xf]
        %v2782 = vld [vmem:[%s373 + $0x80] sm:$0xf]
        %v2783 = vld [vmem:[%s373 + $0x84] sm:$0xf]
        %v2784 = vld [vmem:[%s373 + $0x88] sm:$0xf]
        %v2785 = vld [vmem:[%s373 + $0x8c] sm:$0xf]
        %v2786 = vld [vmem:[%s373 + $0x90] sm:$0xf]
        %v2787 = vld [vmem:[%s373 + $0x94] sm:$0xf]
        %v2788 = vld [vmem:[%s373 + $0x98] sm:$0xf]
        %v2789 = vld [vmem:[%s373 + $0x9c] sm:$0xf]
        %v2790 = vld [vmem:[%s373 + $0xa0] sm:$0xf]
        %v2791 = vld [vmem:[%s373 + $0xa4] sm:$0xf]
        %v2792 = vld [vmem:[%s373 + $0xa8] sm:$0xf]
        %v2793 = vld [vmem:[%s373 + $0xac] sm:$0xf]
        %v2794 = vld [vmem:[%s373 + $0xb0] sm:$0xf]
        %v2795 = vld [vmem:[%s373 + $0xb4] sm:$0xf]
        %v2796 = vld [vmem:[%s373 + $0xb8] sm:$0xf]
        %v2797 = vld [vmem:[%s373 + $0xbc] sm:$0xf]
        %v2798 = vld [vmem:[%s373 + $0xc0] sm:$0xf]
        %v2799 = vld [vmem:[%s373 + $0xc4] sm:$0xf]
        %v2800 = vld [vmem:[%s373 + $0xc8] sm:$0xf]
        %v2801 = vld [vmem:[%s373 + $0xcc] sm:$0xf]
        %v2802 = vld [vmem:[%s373 + $0xd0] sm:$0xf]
        %v2803 = vld [vmem:[%s373 + $0xd4] sm:$0xf]
        %v2804 = vld [vmem:[%s373 + $0xd8] sm:$0xf]
        %v2805 = vld [vmem:[%s373 + $0xdc] sm:$0xf]
        %v2806 = vld [vmem:[%s373 + $0xe0] sm:$0xf]
        %v2807 = vld [vmem:[%s373 + $0xe4] sm:$0xf]
        %v2808 = vld [vmem:[%s373 + $0xe8] sm:$0xf]
        %v2809 = vld [vmem:[%s373 + $0xec] sm:$0xf]
        %v2810 = vld [vmem:[%s373 + $0xf0] sm:$0xf]
        %v2811 = vld [vmem:[%s373 + $0xf4] sm:$0xf]
        %v2812 = vld [vmem:[%s373 + $0xf8] sm:$0xf]
        %v2813 = vld [vmem:[%s373 + $0xfc] sm:$0xf]
        %2814 = vxpose.xlu0.c.b16.start [1/8] %v1084, 128
        %2815 = vxpose.xlu0.c.b16.cont [2/8] %v1088, 128
        %2816 = vxpose.xlu0.c.b16.cont [3/8] %v1092, 128
        %2817 = vxpose.xlu0.c.b16.cont [4/8] %v1096, 128
        %2818 = vxpose.xlu0.c.b16.cont [5/8] %v1100, 128
        %2819 = vxpose.xlu0.c.b16.cont [6/8] %v1104, 128
        %2820 = vxpose.xlu0.c.b16.cont [7/8] %v1108, 128
        %2821 = vxpose.xlu0.c.b16.end [8/8] %v1112, 128
        %v2822 = vpop.trf.xlu0
        %v2823 = vpop.trf.xlu0
        %v2824 = vpop.trf.xlu0
        %v2825 = vpop.trf.xlu0
        %v2826 = vpop.trf.xlu0
        %v2827 = vpop.trf.xlu0
        %v2828 = vpop.trf.xlu0
        %v2829 = vpop.trf.xlu0
        %2830 = vxpose.xlu0.c.b16.start [1/8] %v1085, 128
        %2831 = vxpose.xlu0.c.b16.cont [2/8] %v1089, 128
        %2832 = vxpose.xlu0.c.b16.cont [3/8] %v1093, 128
        %2833 = vxpose.xlu0.c.b16.cont [4/8] %v1097, 128
        %2834 = vxpose.xlu0.c.b16.cont [5/8] %v1101, 128
        %2835 = vxpose.xlu0.c.b16.cont [6/8] %v1105, 128
        %2836 = vxpose.xlu0.c.b16.cont [7/8] %v1109, 128
        %2837 = vxpose.xlu0.c.b16.end [8/8] %v1113, 128
        %v2838 = vpop.trf.xlu0
        %v2839 = vpop.trf.xlu0
        %v2840 = vpop.trf.xlu0
        %v2841 = vpop.trf.xlu0
        %v2842 = vpop.trf.xlu0
        %v2843 = vpop.trf.xlu0
        %v2844 = vpop.trf.xlu0
        %v2845 = vpop.trf.xlu0
        %2846 = vxpose.xlu0.c.b16.start [1/8] %v1086, 128
        %2847 = vxpose.xlu0.c.b16.cont [2/8] %v1090, 128
        %2848 = vxpose.xlu0.c.b16.cont [3/8] %v1094, 128
        %2849 = vxpose.xlu0.c.b16.cont [4/8] %v1098, 128
        %2850 = vxpose.xlu0.c.b16.cont [5/8] %v1102, 128
        %2851 = vxpose.xlu0.c.b16.cont [6/8] %v1106, 128
        %2852 = vxpose.xlu0.c.b16.cont [7/8] %v1110, 128
        %2853 = vxpose.xlu0.c.b16.end [8/8] %v1114, 128
        %v2854 = vpop.trf.xlu0
        %v2855 = vpop.trf.xlu0
        %v2856 = vpop.trf.xlu0
        %v2857 = vpop.trf.xlu0
        %v2858 = vpop.trf.xlu0
        %v2859 = vpop.trf.xlu0
        %v2860 = vpop.trf.xlu0
        %v2861 = vpop.trf.xlu0
        %2862 = vxpose.xlu0.c.b16.start [1/8] %v1087, 128
        %2863 = vxpose.xlu0.c.b16.cont [2/8] %v1091, 128
        %2864 = vxpose.xlu0.c.b16.cont [3/8] %v1095, 128
        %2865 = vxpose.xlu0.c.b16.cont [4/8] %v1099, 128
        %2866 = vxpose.xlu0.c.b16.cont [5/8] %v1103, 128
        %2867 = vxpose.xlu0.c.b16.cont [6/8] %v1107, 128
        %2868 = vxpose.xlu0.c.b16.cont [7/8] %v1111, 128
        %2869 = vxpose.xlu0.c.b16.end [8/8] %v1115, 128
        %v2870 = vpop.trf.xlu0
        %v2871 = vpop.trf.xlu0
        %v2872 = vpop.trf.xlu0
        %v2873 = vpop.trf.xlu0
        %v2874 = vpop.trf.xlu0
        %v2875 = vpop.trf.xlu0
        %v2876 = vpop.trf.xlu0
        %v2877 = vpop.trf.xlu0
        %2878 = vxpose.xlu0.c.b16.start [1/8] %v1116, 128
        %2879 = vxpose.xlu0.c.b16.cont [2/8] %v1120, 128
        %2880 = vxpose.xlu0.c.b16.cont [3/8] %v1124, 128
        %2881 = vxpose.xlu0.c.b16.cont [4/8] %v1128, 128
        %2882 = vxpose.xlu0.c.b16.cont [5/8] %v1132, 128
        %2883 = vxpose.xlu0.c.b16.cont [6/8] %v1136, 128
        %2884 = vxpose.xlu0.c.b16.cont [7/8] %v1140, 128
        %2885 = vxpose.xlu0.c.b16.end [8/8] %v1144, 128
        %v2886 = vpop.trf.xlu0
        %v2887 = vpop.trf.xlu0
        %v2888 = vpop.trf.xlu0
        %v2889 = vpop.trf.xlu0
        %v2890 = vpop.trf.xlu0
        %v2891 = vpop.trf.xlu0
        %v2892 = vpop.trf.xlu0
        %v2893 = vpop.trf.xlu0
        %2894 = vxpose.xlu0.c.b16.start [1/8] %v1117, 128
        %2895 = vxpose.xlu0.c.b16.cont [2/8] %v1121, 128
        %2896 = vxpose.xlu0.c.b16.cont [3/8] %v1125, 128
        %2897 = vxpose.xlu0.c.b16.cont [4/8] %v1129, 128
        %2898 = vxpose.xlu0.c.b16.cont [5/8] %v1133, 128
        %2899 = vxpose.xlu0.c.b16.cont [6/8] %v1137, 128
        %2900 = vxpose.xlu0.c.b16.cont [7/8] %v1141, 128
        %2901 = vxpose.xlu0.c.b16.end [8/8] %v1145, 128
        %v2902 = vpop.trf.xlu0
        %v2903 = vpop.trf.xlu0
        %v2904 = vpop.trf.xlu0
        %v2905 = vpop.trf.xlu0
        %v2906 = vpop.trf.xlu0
        %v2907 = vpop.trf.xlu0
        %v2908 = vpop.trf.xlu0
        %v2909 = vpop.trf.xlu0
        %2910 = vxpose.xlu0.c.b16.start [1/8] %v1118, 128
        %2911 = vxpose.xlu0.c.b16.cont [2/8] %v1122, 128
        %2912 = vxpose.xlu0.c.b16.cont [3/8] %v1126, 128
        %2913 = vxpose.xlu0.c.b16.cont [4/8] %v1130, 128
        %2914 = vxpose.xlu0.c.b16.cont [5/8] %v1134, 128
        %2915 = vxpose.xlu0.c.b16.cont [6/8] %v1138, 128
        %2916 = vxpose.xlu0.c.b16.cont [7/8] %v1142, 128
        %2917 = vxpose.xlu0.c.b16.end [8/8] %v1146, 128
        %v2918 = vpop.trf.xlu0
        %v2919 = vpop.trf.xlu0
        %v2920 = vpop.trf.xlu0
        %v2921 = vpop.trf.xlu0
        %v2922 = vpop.trf.xlu0
        %v2923 = vpop.trf.xlu0
        %v2924 = vpop.trf.xlu0
        %v2925 = vpop.trf.xlu0
        %2926 = vxpose.xlu0.c.b16.start [1/8] %v1119, 128
        %2927 = vxpose.xlu0.c.b16.cont [2/8] %v1123, 128
        %2928 = vxpose.xlu0.c.b16.cont [3/8] %v1127, 128
        %2929 = vxpose.xlu0.c.b16.cont [4/8] %v1131, 128
        %2930 = vxpose.xlu0.c.b16.cont [5/8] %v1135, 128
        %2931 = vxpose.xlu0.c.b16.cont [6/8] %v1139, 128
        %2932 = vxpose.xlu0.c.b16.cont [7/8] %v1143, 128
        %2933 = vxpose.xlu0.c.b16.end [8/8] %v1147, 128
        %v2934 = vpop.trf.xlu0
        %v2935 = vpop.trf.xlu0
        %v2936 = vpop.trf.xlu0
        %v2937 = vpop.trf.xlu0
        %v2938 = vpop.trf.xlu0
        %v2939 = vpop.trf.xlu0
        %v2940 = vpop.trf.xlu0
        %v2941 = vpop.trf.xlu0
        %2942 = vxpose.xlu0.c.b16.start [1/8] %v1148, 128
        %2943 = vxpose.xlu0.c.b16.cont [2/8] %v1152, 128
        %2944 = vxpose.xlu0.c.b16.cont [3/8] %v1156, 128
        %2945 = vxpose.xlu0.c.b16.cont [4/8] %v1160, 128
        %2946 = vxpose.xlu0.c.b16.cont [5/8] %v1164, 128
        %2947 = vxpose.xlu0.c.b16.cont [6/8] %v1168, 128
        %2948 = vxpose.xlu0.c.b16.cont [7/8] %v1172, 128
        %2949 = vxpose.xlu0.c.b16.end [8/8] %v1176, 128
        %v2950 = vpop.trf.xlu0
        %v2951 = vpop.trf.xlu0
        %v2952 = vpop.trf.xlu0
        %v2953 = vpop.trf.xlu0
        %v2954 = vpop.trf.xlu0
        %v2955 = vpop.trf.xlu0
        %v2956 = vpop.trf.xlu0
        %v2957 = vpop.trf.xlu0
        %2958 = vxpose.xlu0.c.b16.start [1/8] %v1149, 128
        %2959 = vxpose.xlu0.c.b16.cont [2/8] %v1153, 128
        %2960 = vxpose.xlu0.c.b16.cont [3/8] %v1157, 128
        %2961 = vxpose.xlu0.c.b16.cont [4/8] %v1161, 128
        %2962 = vxpose.xlu0.c.b16.cont [5/8] %v1165, 128
        %2963 = vxpose.xlu0.c.b16.cont [6/8] %v1169, 128
        %2964 = vxpose.xlu0.c.b16.cont [7/8] %v1173, 128
        %2965 = vxpose.xlu0.c.b16.end [8/8] %v1177, 128
        %v2966 = vpop.trf.xlu0
        %v2967 = vpop.trf.xlu0
        %v2968 = vpop.trf.xlu0
        %v2969 = vpop.trf.xlu0
        %v2970 = vpop.trf.xlu0
        %v2971 = vpop.trf.xlu0
        %v2972 = vpop.trf.xlu0
        %v2973 = vpop.trf.xlu0
        %2974 = vxpose.xlu0.c.b16.start [1/8] %v1150, 128
        %2975 = vxpose.xlu0.c.b16.cont [2/8] %v1154, 128
        %2976 = vxpose.xlu0.c.b16.cont [3/8] %v1158, 128
        %2977 = vxpose.xlu0.c.b16.cont [4/8] %v1162, 128
        %2978 = vxpose.xlu0.c.b16.cont [5/8] %v1166, 128
        %2979 = vxpose.xlu0.c.b16.cont [6/8] %v1170, 128
        %2980 = vxpose.xlu0.c.b16.cont [7/8] %v1174, 128
        %2981 = vxpose.xlu0.c.b16.end [8/8] %v1178, 128
        %v2982 = vpop.trf.xlu0
        %v2983 = vpop.trf.xlu0
        %v2984 = vpop.trf.xlu0
        %v2985 = vpop.trf.xlu0
        %v2986 = vpop.trf.xlu0
        %v2987 = vpop.trf.xlu0
        %v2988 = vpop.trf.xlu0
        %v2989 = vpop.trf.xlu0
        %2990 = vxpose.xlu0.c.b16.start [1/8] %v1151, 128
        %2991 = vxpose.xlu0.c.b16.cont [2/8] %v1155, 128
        %2992 = vxpose.xlu0.c.b16.cont [3/8] %v1159, 128
        %2993 = vxpose.xlu0.c.b16.cont [4/8] %v1163, 128
        %2994 = vxpose.xlu0.c.b16.cont [5/8] %v1167, 128
        %2995 = vxpose.xlu0.c.b16.cont [6/8] %v1171, 128
        %2996 = vxpose.xlu0.c.b16.cont [7/8] %v1175, 128
        %2997 = vxpose.xlu0.c.b16.end [8/8] %v1179, 128
        %v2998 = vpop.trf.xlu0
        %v2999 = vpop.trf.xlu0
        %v3000 = vpop.trf.xlu0
        %v3001 = vpop.trf.xlu0
        %v3002 = vpop.trf.xlu0
        %v3003 = vpop.trf.xlu0
        %v3004 = vpop.trf.xlu0
        %v3005 = vpop.trf.xlu0
        %3006 = vxpose.xlu0.c.b16.start [1/8] %v1180, 128
        %3007 = vxpose.xlu0.c.b16.cont [2/8] %v1184, 128
        %3008 = vxpose.xlu0.c.b16.cont [3/8] %v1188, 128
        %3009 = vxpose.xlu0.c.b16.cont [4/8] %v1192, 128
        %3010 = vxpose.xlu0.c.b16.cont [5/8] %v1196, 128
        %3011 = vxpose.xlu0.c.b16.cont [6/8] %v1200, 128
        %3012 = vxpose.xlu0.c.b16.cont [7/8] %v1204, 128
        %3013 = vxpose.xlu0.c.b16.end [8/8] %v1208, 128
        %v3014 = vpop.trf.xlu0
        %v3015 = vpop.trf.xlu0
        %v3016 = vpop.trf.xlu0
        %v3017 = vpop.trf.xlu0
        %v3018 = vpop.trf.xlu0
        %v3019 = vpop.trf.xlu0
        %v3020 = vpop.trf.xlu0
        %v3021 = vpop.trf.xlu0
        %3022 = vxpose.xlu0.c.b16.start [1/8] %v1181, 128
        %3023 = vxpose.xlu0.c.b16.cont [2/8] %v1185, 128
        %3024 = vxpose.xlu0.c.b16.cont [3/8] %v1189, 128
        %3025 = vxpose.xlu0.c.b16.cont [4/8] %v1193, 128
        %3026 = vxpose.xlu0.c.b16.cont [5/8] %v1197, 128
        %3027 = vxpose.xlu0.c.b16.cont [6/8] %v1201, 128
        %3028 = vxpose.xlu0.c.b16.cont [7/8] %v1205, 128
        %3029 = vxpose.xlu0.c.b16.end [8/8] %v1209, 128
        %v3030 = vpop.trf.xlu0
        %v3031 = vpop.trf.xlu0
        %v3032 = vpop.trf.xlu0
        %v3033 = vpop.trf.xlu0
        %v3034 = vpop.trf.xlu0
        %v3035 = vpop.trf.xlu0
        %v3036 = vpop.trf.xlu0
        %v3037 = vpop.trf.xlu0
        %3038 = vxpose.xlu0.c.b16.start [1/8] %v1182, 128
        %3039 = vxpose.xlu0.c.b16.cont [2/8] %v1186, 128
        %3040 = vxpose.xlu0.c.b16.cont [3/8] %v1190, 128
        %3041 = vxpose.xlu0.c.b16.cont [4/8] %v1194, 128
        %3042 = vxpose.xlu0.c.b16.cont [5/8] %v1198, 128
        %3043 = vxpose.xlu0.c.b16.cont [6/8] %v1202, 128
        %3044 = vxpose.xlu0.c.b16.cont [7/8] %v1206, 128
        %3045 = vxpose.xlu0.c.b16.end [8/8] %v1210, 128
        %v3046 = vpop.trf.xlu0
        %v3047 = vpop.trf.xlu0
        %v3048 = vpop.trf.xlu0
        %v3049 = vpop.trf.xlu0
        %v3050 = vpop.trf.xlu0
        %v3051 = vpop.trf.xlu0
        %v3052 = vpop.trf.xlu0
        %v3053 = vpop.trf.xlu0
        %3054 = vxpose.xlu0.c.b16.start [1/8] %v1183, 128
        %3055 = vxpose.xlu0.c.b16.cont [2/8] %v1187, 128
        %3056 = vxpose.xlu0.c.b16.cont [3/8] %v1191, 128
        %3057 = vxpose.xlu0.c.b16.cont [4/8] %v1195, 128
        %3058 = vxpose.xlu0.c.b16.cont [5/8] %v1199, 128
        %3059 = vxpose.xlu0.c.b16.cont [6/8] %v1203, 128
        %3060 = vxpose.xlu0.c.b16.cont [7/8] %v1207, 128
        %3061 = vxpose.xlu0.c.b16.end [8/8] %v1211, 128
        %v3062 = vpop.trf.xlu0
        %v3063 = vpop.trf.xlu0
        %v3064 = vpop.trf.xlu0
        %v3065 = vpop.trf.xlu0
        %v3066 = vpop.trf.xlu0
        %v3067 = vpop.trf.xlu0
        %v3068 = vpop.trf.xlu0
        %v3069 = vpop.trf.xlu0
        %v3134 = vunpack.c.l.b16 %v2750
        %v3135 = vunpack.c.l.b16 %v2751
        %v3136 = vunpack.c.l.b16 %v2752
        %v3137 = vunpack.c.l.b16 %v2753
        %v3138 = vunpack.c.l.b16 %v2754
        %v3139 = vunpack.c.l.b16 %v2755
        %v3140 = vunpack.c.l.b16 %v2756
        %v3141 = vunpack.c.l.b16 %v2757
        %v3142 = vunpack.c.l.b16 %v2758
        %v3143 = vunpack.c.l.b16 %v2759
        %v3144 = vunpack.c.l.b16 %v2760
        %v3145 = vunpack.c.l.b16 %v2761
        %v3146 = vunpack.c.l.b16 %v2762
        %v3147 = vunpack.c.l.b16 %v2763
        %v3148 = vunpack.c.l.b16 %v2764
        %v3149 = vunpack.c.l.b16 %v2765
        %v3150 = vunpack.c.l.b16 %v2766
        %v3151 = vunpack.c.l.b16 %v2767
        %v3152 = vunpack.c.l.b16 %v2768
        %v3153 = vunpack.c.l.b16 %v2769
        %v3154 = vunpack.c.l.b16 %v2770
        %v3155 = vunpack.c.l.b16 %v2771
        %v3156 = vunpack.c.l.b16 %v2772
        %v3157 = vunpack.c.l.b16 %v2773
        %v3158 = vunpack.c.l.b16 %v2774
        %v3159 = vunpack.c.l.b16 %v2775
        %v3160 = vunpack.c.l.b16 %v2776
        %v3161 = vunpack.c.l.b16 %v2777
        %v3162 = vunpack.c.l.b16 %v2778
        %v3163 = vunpack.c.l.b16 %v2779
        %v3164 = vunpack.c.l.b16 %v2780
        %v3165 = vunpack.c.l.b16 %v2781
        %v3166 = vunpack.c.l.b16 %v2782
        %v3167 = vunpack.c.l.b16 %v2783
        %v3168 = vunpack.c.l.b16 %v2784
        %v3169 = vunpack.c.l.b16 %v2785
        %v3170 = vunpack.c.l.b16 %v2786
        %v3171 = vunpack.c.l.b16 %v2787
        %v3172 = vunpack.c.l.b16 %v2788
        %v3173 = vunpack.c.l.b16 %v2789
        %v3174 = vunpack.c.l.b16 %v2790
        %v3175 = vunpack.c.l.b16 %v2791
        %v3176 = vunpack.c.l.b16 %v2792
        %v3177 = vunpack.c.l.b16 %v2793
        %v3178 = vunpack.c.l.b16 %v2794
        %v3179 = vunpack.c.l.b16 %v2795
        %v3180 = vunpack.c.l.b16 %v2796
        %v3181 = vunpack.c.l.b16 %v2797
        %v3182 = vunpack.c.l.b16 %v2798
        %v3183 = vunpack.c.l.b16 %v2799
        %v3184 = vunpack.c.l.b16 %v2800
        %v3185 = vunpack.c.l.b16 %v2801
        %v3186 = vunpack.c.l.b16 %v2802
        %v3187 = vunpack.c.l.b16 %v2803
        %v3188 = vunpack.c.l.b16 %v2804
        %v3189 = vunpack.c.l.b16 %v2805
        %v3190 = vunpack.c.l.b16 %v2806
        %v3191 = vunpack.c.l.b16 %v2807
        %v3192 = vunpack.c.l.b16 %v2808
        %v3193 = vunpack.c.l.b16 %v2809
        %v3194 = vunpack.c.l.b16 %v2810
        %v3195 = vunpack.c.l.b16 %v2811
        %v3196 = vunpack.c.l.b16 %v2812
        %v3197 = vunpack.c.l.b16 %v2813
        %v3198 = vpack.c.b16 %v3135, %v3134
        %v3199 = vpack.c.b16 %v3137, %v3136
        %v3200 = vpack.c.b16 %v3139, %v3138
        %v3201 = vpack.c.b16 %v3141, %v3140
        %v3202 = vpack.c.b16 %v3143, %v3142
        %v3203 = vpack.c.b16 %v3145, %v3144
        %v3204 = vpack.c.b16 %v3147, %v3146
        %v3205 = vpack.c.b16 %v3149, %v3148
        %v3206 = vpack.c.b16 %v3151, %v3150
        %v3207 = vpack.c.b16 %v3153, %v3152
        %v3208 = vpack.c.b16 %v3155, %v3154
        %v3209 = vpack.c.b16 %v3157, %v3156
        %v3210 = vpack.c.b16 %v3159, %v3158
        %v3211 = vpack.c.b16 %v3161, %v3160
        %v3212 = vpack.c.b16 %v3163, %v3162
        %v3213 = vpack.c.b16 %v3165, %v3164
        %v3214 = vpack.c.b16 %v3167, %v3166
        %v3215 = vpack.c.b16 %v3169, %v3168
        %v3216 = vpack.c.b16 %v3171, %v3170
        %v3217 = vpack.c.b16 %v3173, %v3172
        %v3218 = vpack.c.b16 %v3175, %v3174
        %v3219 = vpack.c.b16 %v3177, %v3176
        %v3220 = vpack.c.b16 %v3179, %v3178
        %v3221 = vpack.c.b16 %v3181, %v3180
        %v3222 = vpack.c.b16 %v3183, %v3182
        %v3223 = vpack.c.b16 %v3185, %v3184
        %v3224 = vpack.c.b16 %v3187, %v3186
        %v3225 = vpack.c.b16 %v3189, %v3188
        %v3226 = vpack.c.b16 %v3191, %v3190
        %v3227 = vpack.c.b16 %v3193, %v3192
        %v3228 = vpack.c.b16 %v3195, %v3194
        %v3229 = vpack.c.b16 %v3197, %v3196
        %3262 = vmatprep.subr.bf16.mxu0 0
        %3263 = vmatpush1.bf16.msra.mxu0 %v3198
        %3264 = vmatprep.subr.bf16.mxu0 0
        %3265 = vmatpush1.bf16.msra.mxu0 %v3199
        %3266 = vmatprep.subr.bf16.mxu0 0
        %3267 = vmatpush1.bf16.msra.mxu0 %v3200
        %3268 = vmatprep.subr.bf16.mxu0 0
        %3269 = vmatpush1.bf16.msra.mxu0 %v3201
        %3270 = vmatprep.subr.bf16.mxu0 0
        %3271 = vmatpush1.bf16.msra.mxu0 %v3202
        %3272 = vmatprep.subr.bf16.mxu0 0
        %3273 = vmatpush1.bf16.msra.mxu0 %v3203
        %3274 = vmatprep.subr.bf16.mxu0 0
        %3275 = vmatpush1.bf16.msra.mxu0 %v3204
        %3276 = vmatprep.subr.bf16.mxu0 0
        %3277 = vmatpush1.bf16.msra.mxu0 %v3205
        %3278 = vmatprep.subr.bf16.mxu0 0
        %3279 = vmatpush1.bf16.msra.mxu0 %v3206
        %3280 = vmatprep.subr.bf16.mxu0 0
        %3281 = vmatpush1.bf16.msra.mxu0 %v3207
        %3282 = vmatprep.subr.bf16.mxu0 0
        %3283 = vmatpush1.bf16.msra.mxu0 %v3208
        %3284 = vmatprep.subr.bf16.mxu0 0
        %3285 = vmatpush1.bf16.msra.mxu0 %v3209
        %3286 = vmatprep.subr.bf16.mxu0 0
        %3287 = vmatpush1.bf16.msra.mxu0 %v3210
        %3288 = vmatprep.subr.bf16.mxu0 0
        %3289 = vmatpush1.bf16.msra.mxu0 %v3211
        %3290 = vmatprep.subr.bf16.mxu0 0
        %3291 = vmatpush1.bf16.msra.mxu0 %v3212
        %3292 = vmatprep.subr.bf16.mxu0 0
        %3293 = vmatpush1.bf16.msra.mxu0 %v3213
        %3294 = vmatprep.mubr.bf16.mxu0 %v2886
        %3295 = vmatmul.mubr.bf16.gmra.mrb[0].mxu0 %v2822
        %v3296 = vpop.f32.mrb[0].mxu0
        %v3297 = vadd.f32 0.0, %v3296
        %v3298 = vpop.f32.mrb[0].mxu0
        %v3299 = vpop.f32.mrb[0].mxu0
        %v3300 = vadd.f32 0.0, %v3299
        %v3301 = vpop.f32.mrb[0].mxu0
        %3302 = vmatprep.mubr.bf16.mxu0 %v2887
        %3303 = vmatmul.mubr.bf16.gmra.mrb[0].mxu0 %v2823
        %v3304 = vpop.f32.mrb[0].mxu0
        %v3305 = vadd.f32 0.0, %v3304
        %v3306 = vpop.f32.mrb[0].mxu0
        %v3307 = vpop.f32.mrb[0].mxu0
        %v3308 = vadd.f32 0.0, %v3307
        %v3309 = vpop.f32.mrb[0].mxu0
        %3310 = vmatprep.mubr.bf16.mxu0 %v2888
        %3311 = vmatmul.mubr.bf16.gmra.mrb[0].mxu0 %v2824
        %v3312 = vpop.f32.mrb[0].mxu0
        %v3313 = vadd.f32 0.0, %v3312
        %v3314 = vpop.f32.mrb[0].mxu0
        %v3315 = vpop.f32.mrb[0].mxu0
        %v3316 = vadd.f32 0.0, %v3315
        %v3317 = vpop.f32.mrb[0].mxu0
        %3318 = vmatprep.mubr.bf16.mxu0 %v2889
        %3319 = vmatmul.mubr.bf16.gmra.mrb[0].mxu0 %v2825
        %v3320 = vpop.f32.mrb[0].mxu0
        %v3321 = vadd.f32 0.0, %v3320
        %v3322 = vpop.f32.mrb[0].mxu0
        %v3323 = vpop.f32.mrb[0].mxu0
        %v3324 = vadd.f32 0.0, %v3323
        %v3325 = vpop.f32.mrb[0].mxu0
        %3326 = vmatprep.mubr.bf16.mxu0 %v2890
        %3327 = vmatmul.mubr.bf16.gmra.mrb[0].mxu0 %v2826
        %v3328 = vpop.f32.mrb[0].mxu0
        %v3329 = vadd.f32 0.0, %v3328
        %v3330 = vpop.f32.mrb[0].mxu0
        %v3331 = vpop.f32.mrb[0].mxu0
        %v3332 = vadd.f32 0.0, %v3331
        %v3333 = vpop.f32.mrb[0].mxu0
        %3334 = vmatprep.mubr.bf16.mxu0 %v2891
        %3335 = vmatmul.mubr.bf16.gmra.mrb[0].mxu0 %v2827
        %v3336 = vpop.f32.mrb[0].mxu0
        %v3337 = vadd.f32 0.0, %v3336
        %v3338 = vpop.f32.mrb[0].mxu0
        %v3339 = vpop.f32.mrb[0].mxu0
        %v3340 = vadd.f32 0.0, %v3339
        %v3341 = vpop.f32.mrb[0].mxu0
        %3342 = vmatprep.mubr.bf16.mxu0 %v2892
        %3343 = vmatmul.mubr.bf16.gmra.mrb[0].mxu0 %v2828
        %v3344 = vpop.f32.mrb[0].mxu0
        %v3345 = vadd.f32 0.0, %v3344
        %v3346 = vpop.f32.mrb[0].mxu0
        %v3347 = vpop.f32.mrb[0].mxu0
        %v3348 = vadd.f32 0.0, %v3347
        %v3349 = vpop.f32.mrb[0].mxu0
        %3350 = vmatprep.mubr.bf16.mxu0 %v2893
        %3351 = vmatmul.mubr.bf16.gmra.mrb[0].mxu0 %v2829
        %v3352 = vpop.f32.mrb[0].mxu0
        %v3353 = vadd.f32 0.0, %v3352
        %v3354 = vpop.f32.mrb[0].mxu0
        %v3355 = vpop.f32.mrb[0].mxu0
        %v3356 = vadd.f32 0.0, %v3355
        %v3357 = vpop.f32.mrb[0].mxu0
        %3358 = vmatprep.mubr.bf16.mxu0 %v2902
        %3359 = vmatmul.mubr.bf16.gmra.mrb[0].mxu0 %v2838
        %v3360 = vpop.f32.mrb[0].mxu0
        %v3361 = vadd.f32 0.0, %v3360
        %v3362 = vpop.f32.mrb[0].mxu0
        %v3363 = vpop.f32.mrb[0].mxu0
        %v3364 = vadd.f32 0.0, %v3363
        %v3365 = vpop.f32.mrb[0].mxu0
        %3366 = vmatprep.mubr.bf16.mxu0 %v2903
        %3367 = vmatmul.mubr.bf16.gmra.mrb[0].mxu0 %v2839
        %v3368 = vpop.f32.mrb[0].mxu0
        %v3369 = vadd.f32 0.0, %v3368
        %v3370 = vpop.f32.mrb[0].mxu0
        %v3371 = vpop.f32.mrb[0].mxu0
        %v3372 = vadd.f32 0.0, %v3371
        %v3373 = vpop.f32.mrb[0].mxu0
        %3374 = vmatprep.mubr.bf16.mxu0 %v2904
        %3375 = vmatmul.mubr.bf16.gmra.mrb[0].mxu0 %v2840
        %v3376 = vpop.f32.mrb[0].mxu0
        %v3377 = vadd.f32 0.0, %v3376
        %v3378 = vpop.f32.mrb[0].mxu0
        %v3379 = vpop.f32.mrb[0].mxu0
        %v3380 = vadd.f32 0.0, %v3379
        %v3381 = vpop.f32.mrb[0].mxu0
        %3382 = vmatprep.mubr.bf16.mxu0 %v2905
        %3383 = vmatmul.mubr.bf16.gmra.mrb[0].mxu0 %v2841
        %v3384 = vpop.f32.mrb[0].mxu0
        %v3385 = vadd.f32 0.0, %v3384
        %v3386 = vpop.f32.mrb[0].mxu0
        %v3387 = vpop.f32.mrb[0].mxu0
        %v3388 = vadd.f32 0.0, %v3387
        %v3389 = vpop.f32.mrb[0].mxu0
        %3390 = vmatprep.mubr.bf16.mxu0 %v2906
        %3391 = vmatmul.mubr.bf16.gmra.mrb[0].mxu0 %v2842
        %v3392 = vpop.f32.mrb[0].mxu0
        %v3393 = vadd.f32 0.0, %v3392
        %v3394 = vpop.f32.mrb[0].mxu0
        %v3395 = vpop.f32.mrb[0].mxu0
        %v3396 = vadd.f32 0.0, %v3395
        %v3397 = vpop.f32.mrb[0].mxu0
        %3398 = vmatprep.mubr.bf16.mxu0 %v2907
        %3399 = vmatmul.mubr.bf16.gmra.mrb[0].mxu0 %v2843
        %v3400 = vpop.f32.mrb[0].mxu0
        %v3401 = vadd.f32 0.0, %v3400
        %v3402 = vpop.f32.mrb[0].mxu0
        %v3403 = vpop.f32.mrb[0].mxu0
        %v3404 = vadd.f32 0.0, %v3403
        %v3405 = vpop.f32.mrb[0].mxu0
        %3406 = vmatprep.mubr.bf16.mxu0 %v2908
        %3407 = vmatmul.mubr.bf16.gmra.mrb[0].mxu0 %v2844
        %v3408 = vpop.f32.mrb[0].mxu0
        %v3409 = vadd.f32 0.0, %v3408
        %v3410 = vpop.f32.mrb[0].mxu0
        %v3411 = vpop.f32.mrb[0].mxu0
        %v3412 = vadd.f32 0.0, %v3411
        %v3413 = vpop.f32.mrb[0].mxu0
        %3414 = vmatprep.mubr.bf16.mxu0 %v2909
        %3415 = vmatmul.mubr.bf16.gmra.mrb[0].mxu0 %v2845
        %v3416 = vpop.f32.mrb[0].mxu0
        %v3417 = vadd.f32 0.0, %v3416
        %v3418 = vpop.f32.mrb[0].mxu0
        %v3419 = vpop.f32.mrb[0].mxu0
        %v3420 = vadd.f32 0.0, %v3419
        %v3421 = vpop.f32.mrb[0].mxu0
        %3422 = vmatprep.mubr.bf16.mxu0 %v2918
        %3423 = vmatmul.mubr.bf16.gmra.mrb[0].mxu0 %v2854
        %v3424 = vpop.f32.mrb[0].mxu0
        %v3425 = vadd.f32 0.0, %v3424
        %v3426 = vpop.f32.mrb[0].mxu0
        %v3427 = vpop.f32.mrb[0].mxu0
        %v3428 = vadd.f32 0.0, %v3427
        %v3429 = vpop.f32.mrb[0].mxu0
        %3430 = vmatprep.mubr.bf16.mxu0 %v2919
        %3431 = vmatmul.mubr.bf16.gmra.mrb[0].mxu0 %v2855
        %v3432 = vpop.f32.mrb[0].mxu0
        %v3433 = vadd.f32 0.0, %v3432
        %v3434 = vpop.f32.mrb[0].mxu0
        %v3435 = vpop.f32.mrb[0].mxu0
        %v3436 = vadd.f32 0.0, %v3435
        %v3437 = vpop.f32.mrb[0].mxu0
        %3438 = vmatprep.mubr.bf16.mxu0 %v2920
        %3439 = vmatmul.mubr.bf16.gmra.mrb[0].mxu0 %v2856
        %v3440 = vpop.f32.mrb[0].mxu0
        %v3441 = vadd.f32 0.0, %v3440
        %v3442 = vpop.f32.mrb[0].mxu0
        %v3443 = vpop.f32.mrb[0].mxu0
        %v3444 = vadd.f32 0.0, %v3443
        %v3445 = vpop.f32.mrb[0].mxu0
        %3446 = vmatprep.mubr.bf16.mxu0 %v2921
        %3447 = vmatmul.mubr.bf16.gmra.mrb[0].mxu0 %v2857
        %v3448 = vpop.f32.mrb[0].mxu0
        %v3449 = vadd.f32 0.0, %v3448
        %v3450 = vpop.f32.mrb[0].mxu0
        %v3451 = vpop.f32.mrb[0].mxu0
        %v3452 = vadd.f32 0.0, %v3451
        %v3453 = vpop.f32.mrb[0].mxu0
        %3454 = vmatprep.mubr.bf16.mxu0 %v2922
        %3455 = vmatmul.mubr.bf16.gmra.mrb[0].mxu0 %v2858
        %v3456 = vpop.f32.mrb[0].mxu0
        %v3457 = vadd.f32 0.0, %v3456
        %v3458 = vpop.f32.mrb[0].mxu0
        %v3459 = vpop.f32.mrb[0].mxu0
        %v3460 = vadd.f32 0.0, %v3459
        %v3461 = vpop.f32.mrb[0].mxu0
        %3462 = vmatprep.mubr.bf16.mxu0 %v2923
        %3463 = vmatmul.mubr.bf16.gmra.mrb[0].mxu0 %v2859
        %v3464 = vpop.f32.mrb[0].mxu0
        %v3465 = vadd.f32 0.0, %v3464
        %v3466 = vpop.f32.mrb[0].mxu0
        %v3467 = vpop.f32.mrb[0].mxu0
        %v3468 = vadd.f32 0.0, %v3467
        %v3469 = vpop.f32.mrb[0].mxu0
        %3470 = vmatprep.mubr.bf16.mxu0 %v2924
        %3471 = vmatmul.mubr.bf16.gmra.mrb[0].mxu0 %v2860
        %v3472 = vpop.f32.mrb[0].mxu0
        %v3473 = vadd.f32 0.0, %v3472
        %v3474 = vpop.f32.mrb[0].mxu0
        %v3475 = vpop.f32.mrb[0].mxu0
        %v3476 = vadd.f32 0.0, %v3475
        %v3477 = vpop.f32.mrb[0].mxu0
        %3478 = vmatprep.mubr.bf16.mxu0 %v2925
        %3479 = vmatmul.mubr.bf16.gmra.mrb[0].mxu0 %v2861
        %v3480 = vpop.f32.mrb[0].mxu0
        %v3481 = vadd.f32 0.0, %v3480
        %v3482 = vpop.f32.mrb[0].mxu0
        %v3483 = vpop.f32.mrb[0].mxu0
        %v3484 = vadd.f32 0.0, %v3483
        %v3485 = vpop.f32.mrb[0].mxu0
        %3486 = vmatprep.mubr.bf16.mxu0 %v2934
        %3487 = vmatmul.mubr.bf16.gmra.mrb[0].mxu0 %v2870
        %v3488 = vpop.f32.mrb[0].mxu0
        %v3489 = vadd.f32 0.0, %v3488
        %v3490 = vpop.f32.mrb[0].mxu0
        %v3491 = vpop.f32.mrb[0].mxu0
        %v3492 = vadd.f32 0.0, %v3491
        %v3493 = vpop.f32.mrb[0].mxu0
        %3494 = vmatprep.mubr.bf16.mxu0 %v2935
        %3495 = vmatmul.mubr.bf16.gmra.mrb[0].mxu0 %v2871
        %v3496 = vpop.f32.mrb[0].mxu0
        %v3497 = vadd.f32 0.0, %v3496
        %v3498 = vpop.f32.mrb[0].mxu0
        %v3499 = vpop.f32.mrb[0].mxu0
        %v3500 = vadd.f32 0.0, %v3499
        %v3501 = vpop.f32.mrb[0].mxu0
        %3502 = vmatprep.mubr.bf16.mxu0 %v2936
        %3503 = vmatmul.mubr.bf16.gmra.mrb[0].mxu0 %v2872
        %v3504 = vpop.f32.mrb[0].mxu0
        %v3505 = vadd.f32 0.0, %v3504
        %v3506 = vpop.f32.mrb[0].mxu0
        %v3507 = vpop.f32.mrb[0].mxu0
        %v3508 = vadd.f32 0.0, %v3507
        %v3509 = vpop.f32.mrb[0].mxu0
        %3510 = vmatprep.mubr.bf16.mxu0 %v2937
        %3511 = vmatmul.mubr.bf16.gmra.mrb[0].mxu0 %v2873
        %v3512 = vpop.f32.mrb[0].mxu0
        %v3513 = vadd.f32 0.0, %v3512
        %v3514 = vpop.f32.mrb[0].mxu0
        %v3515 = vpop.f32.mrb[0].mxu0
        %v3516 = vadd.f32 0.0, %v3515
        %v3517 = vpop.f32.mrb[0].mxu0
        %3518 = vmatprep.mubr.bf16.mxu0 %v2938
        %3519 = vmatmul.mubr.bf16.gmra.mrb[0].mxu0 %v2874
        %v3520 = vpop.f32.mrb[0].mxu0
        %v3521 = vadd.f32 0.0, %v3520
        %v3522 = vpop.f32.mrb[0].mxu0
        %v3523 = vpop.f32.mrb[0].mxu0
        %v3524 = vadd.f32 0.0, %v3523
        %v3525 = vpop.f32.mrb[0].mxu0
        %3526 = vmatprep.mubr.bf16.mxu0 %v2939
        %3527 = vmatmul.mubr.bf16.gmra.mrb[0].mxu0 %v2875
        %v3528 = vpop.f32.mrb[0].mxu0
        %v3529 = vadd.f32 0.0, %v3528
        %v3530 = vpop.f32.mrb[0].mxu0
        %v3531 = vpop.f32.mrb[0].mxu0
        %v3532 = vadd.f32 0.0, %v3531
        %v3533 = vpop.f32.mrb[0].mxu0
        %3534 = vmatprep.mubr.bf16.mxu0 %v2940
        %3535 = vmatmul.mubr.bf16.gmra.mrb[0].mxu0 %v2876
        %v3536 = vpop.f32.mrb[0].mxu0
        %v3537 = vadd.f32 0.0, %v3536
        %v3538 = vpop.f32.mrb[0].mxu0
        %v3539 = vpop.f32.mrb[0].mxu0
        %v3540 = vadd.f32 0.0, %v3539
        %v3541 = vpop.f32.mrb[0].mxu0
        %3542 = vmatprep.mubr.bf16.mxu0 %v2941
        %3543 = vmatmul.mubr.bf16.gmra.mrb[0].mxu0 %v2877
        %v3544 = vpop.f32.mrb[0].mxu0
        %v3545 = vadd.f32 0.0, %v3544
        %v3546 = vpop.f32.mrb[0].mxu0
        %v3547 = vpop.f32.mrb[0].mxu0
        %v3548 = vadd.f32 0.0, %v3547
        %v3549 = vpop.f32.mrb[0].mxu0
        %3550 = vdwg.mxu0
        %3551 = vmatprep.subr.bf16.mxu0 0
        %3552 = vmatpush1.bf16.msra.mxu0 %v3214
        %3553 = vmatprep.subr.bf16.mxu0 0
        %3554 = vmatpush1.bf16.msra.mxu0 %v3215
        %3555 = vmatprep.subr.bf16.mxu0 0
        %3556 = vmatpush1.bf16.msra.mxu0 %v3216
        %3557 = vmatprep.subr.bf16.mxu0 0
        %3558 = vmatpush1.bf16.msra.mxu0 %v3217
        %3559 = vmatprep.subr.bf16.mxu0 0
        %3560 = vmatpush1.bf16.msra.mxu0 %v3218
        %3561 = vmatprep.subr.bf16.mxu0 0
        %3562 = vmatpush1.bf16.msra.mxu0 %v3219
        %3563 = vmatprep.subr.bf16.mxu0 0
        %3564 = vmatpush1.bf16.msra.mxu0 %v3220
        %3565 = vmatprep.subr.bf16.mxu0 0
        %3566 = vmatpush1.bf16.msra.mxu0 %v3221
        %3567 = vmatprep.subr.bf16.mxu0 0
        %3568 = vmatpush1.bf16.msra.mxu0 %v3222
        %3569 = vmatprep.subr.bf16.mxu0 0
        %3570 = vmatpush1.bf16.msra.mxu0 %v3223
        %3571 = vmatprep.subr.bf16.mxu0 0
        %3572 = vmatpush1.bf16.msra.mxu0 %v3224
        %3573 = vmatprep.subr.bf16.mxu0 0
        %3574 = vmatpush1.bf16.msra.mxu0 %v3225
        %3575 = vmatprep.subr.bf16.mxu0 0
        %3576 = vmatpush1.bf16.msra.mxu0 %v3226
        %3577 = vmatprep.subr.bf16.mxu0 0
        %3578 = vmatpush1.bf16.msra.mxu0 %v3227
        %3579 = vmatprep.subr.bf16.mxu0 0
        %3580 = vmatpush1.bf16.msra.mxu0 %v3228
        %3581 = vmatprep.subr.bf16.mxu0 0
        %3582 = vmatpush1.bf16.msra.mxu0 %v3229
        %3583 = vmatprep.mubr.bf16.mxu0 %v3014
        %3584 = vmatmul.mubr.bf16.gmra.mrb[0].mxu0 %v2950
        %v3585 = vpop.f32.mrb[0].mxu0
        %v3586 = vadd.f32 %v3297, %v3585
        %v3587 = vpop.f32.mrb[0].mxu0
        %v3588 = vpop.f32.mrb[0].mxu0
        %v3589 = vadd.f32 %v3300, %v3588
        %v3590 = vpop.f32.mrb[0].mxu0
        %3591 = vmatprep.mubr.bf16.mxu0 %v3015
        %3592 = vmatmul.mubr.bf16.gmra.mrb[0].mxu0 %v2951
        %v3593 = vpop.f32.mrb[0].mxu0
        %v3594 = vadd.f32 %v3305, %v3593
        %v3595 = vpop.f32.mrb[0].mxu0
        %v3596 = vpop.f32.mrb[0].mxu0
        %v3597 = vadd.f32 %v3308, %v3596
        %v3598 = vpop.f32.mrb[0].mxu0
        %3599 = vmatprep.mubr.bf16.mxu0 %v3016
        %3600 = vmatmul.mubr.bf16.gmra.mrb[0].mxu0 %v2952
        %v3601 = vpop.f32.mrb[0].mxu0
        %v3602 = vadd.f32 %v3313, %v3601
        %v3603 = vpop.f32.mrb[0].mxu0
        %v3604 = vpop.f32.mrb[0].mxu0
        %v3605 = vadd.f32 %v3316, %v3604
        %v3606 = vpop.f32.mrb[0].mxu0
        %3607 = vmatprep.mubr.bf16.mxu0 %v3017
        %3608 = vmatmul.mubr.bf16.gmra.mrb[0].mxu0 %v2953
        %v3609 = vpop.f32.mrb[0].mxu0
        %v3610 = vadd.f32 %v3321, %v3609
        %v3611 = vpop.f32.mrb[0].mxu0
        %v3612 = vpop.f32.mrb[0].mxu0
        %v3613 = vadd.f32 %v3324, %v3612
        %v3614 = vpop.f32.mrb[0].mxu0
        %3615 = vmatprep.mubr.bf16.mxu0 %v3018
        %3616 = vmatmul.mubr.bf16.gmra.mrb[0].mxu0 %v2954
        %v3617 = vpop.f32.mrb[0].mxu0
        %v3618 = vadd.f32 %v3329, %v3617
        %v3619 = vpop.f32.mrb[0].mxu0
        %v3620 = vpop.f32.mrb[0].mxu0
        %v3621 = vadd.f32 %v3332, %v3620
        %v3622 = vpop.f32.mrb[0].mxu0
        %3623 = vmatprep.mubr.bf16.mxu0 %v3019
        %3624 = vmatmul.mubr.bf16.gmra.mrb[0].mxu0 %v2955
        %v3625 = vpop.f32.mrb[0].mxu0
        %v3626 = vadd.f32 %v3337, %v3625
        %v3627 = vpop.f32.mrb[0].mxu0
        %v3628 = vpop.f32.mrb[0].mxu0
        %v3629 = vadd.f32 %v3340, %v3628
        %v3630 = vpop.f32.mrb[0].mxu0
        %3631 = vmatprep.mubr.bf16.mxu0 %v3020
        %3632 = vmatmul.mubr.bf16.gmra.mrb[0].mxu0 %v2956
        %v3633 = vpop.f32.mrb[0].mxu0
        %v3634 = vadd.f32 %v3345, %v3633
        %v3635 = vpop.f32.mrb[0].mxu0
        %v3636 = vpop.f32.mrb[0].mxu0
        %v3637 = vadd.f32 %v3348, %v3636
        %v3638 = vpop.f32.mrb[0].mxu0
        %3639 = vmatprep.mubr.bf16.mxu0 %v3021
        %3640 = vmatmul.mubr.bf16.gmra.mrb[0].mxu0 %v2957
        %v3641 = vpop.f32.mrb[0].mxu0
        %v3642 = vadd.f32 %v3353, %v3641
        %v3643 = vpop.f32.mrb[0].mxu0
        %v3644 = vpop.f32.mrb[0].mxu0
        %v3645 = vadd.f32 %v3356, %v3644
        %v3646 = vpop.f32.mrb[0].mxu0
        %3647 = vmatprep.mubr.bf16.mxu0 %v3030
        %3648 = vmatmul.mubr.bf16.gmra.mrb[0].mxu0 %v2966
        %v3649 = vpop.f32.mrb[0].mxu0
        %v3650 = vadd.f32 %v3361, %v3649
        %v3651 = vpop.f32.mrb[0].mxu0
        %v3652 = vpop.f32.mrb[0].mxu0
        %v3653 = vadd.f32 %v3364, %v3652
        %v3654 = vpop.f32.mrb[0].mxu0
        %3655 = vmatprep.mubr.bf16.mxu0 %v3031
        %3656 = vmatmul.mubr.bf16.gmra.mrb[0].mxu0 %v2967
        %v3657 = vpop.f32.mrb[0].mxu0
        %v3658 = vadd.f32 %v3369, %v3657
        %v3659 = vpop.f32.mrb[0].mxu0
        %v3660 = vpop.f32.mrb[0].mxu0
        %v3661 = vadd.f32 %v3372, %v3660
        %v3662 = vpop.f32.mrb[0].mxu0
        %3663 = vmatprep.mubr.bf16.mxu0 %v3032
        %3664 = vmatmul.mubr.bf16.gmra.mrb[0].mxu0 %v2968
        %v3665 = vpop.f32.mrb[0].mxu0
        %v3666 = vadd.f32 %v3377, %v3665
        %v3667 = vpop.f32.mrb[0].mxu0
        %v3668 = vpop.f32.mrb[0].mxu0
        %v3669 = vadd.f32 %v3380, %v3668
        %v3670 = vpop.f32.mrb[0].mxu0
        %3671 = vmatprep.mubr.bf16.mxu0 %v3033
        %3672 = vmatmul.mubr.bf16.gmra.mrb[0].mxu0 %v2969
        %v3673 = vpop.f32.mrb[0].mxu0
        %v3674 = vadd.f32 %v3385, %v3673
        %v3675 = vpop.f32.mrb[0].mxu0
        %v3676 = vpop.f32.mrb[0].mxu0
        %v3677 = vadd.f32 %v3388, %v3676
        %v3678 = vpop.f32.mrb[0].mxu0
        %3679 = vmatprep.mubr.bf16.mxu0 %v3034
        %3680 = vmatmul.mubr.bf16.gmra.mrb[0].mxu0 %v2970
        %v3681 = vpop.f32.mrb[0].mxu0
        %v3682 = vadd.f32 %v3393, %v3681
        %v3683 = vpop.f32.mrb[0].mxu0
        %v3684 = vpop.f32.mrb[0].mxu0
        %v3685 = vadd.f32 %v3396, %v3684
        %v3686 = vpop.f32.mrb[0].mxu0
        %3687 = vmatprep.mubr.bf16.mxu0 %v3035
        %3688 = vmatmul.mubr.bf16.gmra.mrb[0].mxu0 %v2971
        %v3689 = vpop.f32.mrb[0].mxu0
        %v3690 = vadd.f32 %v3401, %v3689
        %v3691 = vpop.f32.mrb[0].mxu0
        %v3692 = vpop.f32.mrb[0].mxu0
        %v3693 = vadd.f32 %v3404, %v3692
        %v3694 = vpop.f32.mrb[0].mxu0
        %3695 = vmatprep.mubr.bf16.mxu0 %v3036
        %3696 = vmatmul.mubr.bf16.gmra.mrb[0].mxu0 %v2972
        %v3697 = vpop.f32.mrb[0].mxu0
        %v3698 = vadd.f32 %v3409, %v3697
        %v3699 = vpop.f32.mrb[0].mxu0
        %v3700 = vpop.f32.mrb[0].mxu0
        %v3701 = vadd.f32 %v3412, %v3700
        %v3702 = vpop.f32.mrb[0].mxu0
        %3703 = vmatprep.mubr.bf16.mxu0 %v3037
        %3704 = vmatmul.mubr.bf16.gmra.mrb[0].mxu0 %v2973
        %v3705 = vpop.f32.mrb[0].mxu0
        %v3706 = vadd.f32 %v3417, %v3705
        %v3707 = vpop.f32.mrb[0].mxu0
        %v3708 = vpop.f32.mrb[0].mxu0
        %v3709 = vadd.f32 %v3420, %v3708
        %v3710 = vpop.f32.mrb[0].mxu0
        %3711 = vmatprep.mubr.bf16.mxu0 %v3046
        %3712 = vmatmul.mubr.bf16.gmra.mrb[0].mxu0 %v2982
        %v3713 = vpop.f32.mrb[0].mxu0
        %v3714 = vadd.f32 %v3425, %v3713
        %v3715 = vpop.f32.mrb[0].mxu0
        %v3716 = vpop.f32.mrb[0].mxu0
        %v3717 = vadd.f32 %v3428, %v3716
        %v3718 = vpop.f32.mrb[0].mxu0
        %3719 = vmatprep.mubr.bf16.mxu0 %v3047
        %3720 = vmatmul.mubr.bf16.gmra.mrb[0].mxu0 %v2983
        %v3721 = vpop.f32.mrb[0].mxu0
        %v3722 = vadd.f32 %v3433, %v3721
        %v3723 = vpop.f32.mrb[0].mxu0
        %v3724 = vpop.f32.mrb[0].mxu0
        %v3725 = vadd.f32 %v3436, %v3724
        %v3726 = vpop.f32.mrb[0].mxu0
        %3727 = vmatprep.mubr.bf16.mxu0 %v3048
        %3728 = vmatmul.mubr.bf16.gmra.mrb[0].mxu0 %v2984
        %v3729 = vpop.f32.mrb[0].mxu0
        %v3730 = vadd.f32 %v3441, %v3729
        %v3731 = vpop.f32.mrb[0].mxu0
        %v3732 = vpop.f32.mrb[0].mxu0
        %v3733 = vadd.f32 %v3444, %v3732
        %v3734 = vpop.f32.mrb[0].mxu0
        %3735 = vmatprep.mubr.bf16.mxu0 %v3049
        %3736 = vmatmul.mubr.bf16.gmra.mrb[0].mxu0 %v2985
        %v3737 = vpop.f32.mrb[0].mxu0
        %v3738 = vadd.f32 %v3449, %v3737
        %v3739 = vpop.f32.mrb[0].mxu0
        %v3740 = vpop.f32.mrb[0].mxu0
        %v3741 = vadd.f32 %v3452, %v3740
        %v3742 = vpop.f32.mrb[0].mxu0
        %3743 = vmatprep.mubr.bf16.mxu0 %v3050
        %3744 = vmatmul.mubr.bf16.gmra.mrb[0].mxu0 %v2986
        %v3745 = vpop.f32.mrb[0].mxu0
        %v3746 = vadd.f32 %v3457, %v3745
        %v3747 = vpop.f32.mrb[0].mxu0
        %v3748 = vpop.f32.mrb[0].mxu0
        %v3749 = vadd.f32 %v3460, %v3748
        %v3750 = vpop.f32.mrb[0].mxu0
        %3751 = vmatprep.mubr.bf16.mxu0 %v3051
        %3752 = vmatmul.mubr.bf16.gmra.mrb[0].mxu0 %v2987
        %v3753 = vpop.f32.mrb[0].mxu0
        %v3754 = vadd.f32 %v3465, %v3753
        %v3755 = vpop.f32.mrb[0].mxu0
        %v3756 = vpop.f32.mrb[0].mxu0
        %v3757 = vadd.f32 %v3468, %v3756
        %v3758 = vpop.f32.mrb[0].mxu0
        %3759 = vmatprep.mubr.bf16.mxu0 %v3052
        %3760 = vmatmul.mubr.bf16.gmra.mrb[0].mxu0 %v2988
        %v3761 = vpop.f32.mrb[0].mxu0
        %v3762 = vadd.f32 %v3473, %v3761
        %v3763 = vpop.f32.mrb[0].mxu0
        %v3764 = vpop.f32.mrb[0].mxu0
        %v3765 = vadd.f32 %v3476, %v3764
        %v3766 = vpop.f32.mrb[0].mxu0
        %3767 = vmatprep.mubr.bf16.mxu0 %v3053
        %3768 = vmatmul.mubr.bf16.gmra.mrb[0].mxu0 %v2989
        %v3769 = vpop.f32.mrb[0].mxu0
        %v3770 = vadd.f32 %v3481, %v3769
        %v3771 = vpop.f32.mrb[0].mxu0
        %v3772 = vpop.f32.mrb[0].mxu0
        %v3773 = vadd.f32 %v3484, %v3772
        %v3774 = vpop.f32.mrb[0].mxu0
        %3775 = vmatprep.mubr.bf16.mxu0 %v3062
        %3776 = vmatmul.mubr.bf16.gmra.mrb[0].mxu0 %v2998
        %v3777 = vpop.f32.mrb[0].mxu0
        %v3778 = vadd.f32 %v3489, %v3777
        %v3779 = vpop.f32.mrb[0].mxu0
        %v3780 = vpop.f32.mrb[0].mxu0
        %v3781 = vadd.f32 %v3492, %v3780
        %v3782 = vpop.f32.mrb[0].mxu0
        %3783 = vmatprep.mubr.bf16.mxu0 %v3063
        %3784 = vmatmul.mubr.bf16.gmra.mrb[0].mxu0 %v2999
        %v3785 = vpop.f32.mrb[0].mxu0
        %v3786 = vadd.f32 %v3497, %v3785
        %v3787 = vpop.f32.mrb[0].mxu0
        %v3788 = vpop.f32.mrb[0].mxu0
        %v3789 = vadd.f32 %v3500, %v3788
        %v3790 = vpop.f32.mrb[0].mxu0
        %3791 = vmatprep.mubr.bf16.mxu0 %v3064
        %3792 = vmatmul.mubr.bf16.gmra.mrb[0].mxu0 %v3000
        %v3793 = vpop.f32.mrb[0].mxu0
        %v3794 = vadd.f32 %v3505, %v3793
        %v3795 = vpop.f32.mrb[0].mxu0
        %v3796 = vpop.f32.mrb[0].mxu0
        %v3797 = vadd.f32 %v3508, %v3796
        %v3798 = vpop.f32.mrb[0].mxu0
        %3799 = vmatprep.mubr.bf16.mxu0 %v3065
        %3800 = vmatmul.mubr.bf16.gmra.mrb[0].mxu0 %v3001
        %v3801 = vpop.f32.mrb[0].mxu0
        %v3802 = vadd.f32 %v3513, %v3801
        %v3803 = vpop.f32.mrb[0].mxu0
        %v3804 = vpop.f32.mrb[0].mxu0
        %v3805 = vadd.f32 %v3516, %v3804
        %v3806 = vpop.f32.mrb[0].mxu0
        %3807 = vmatprep.mubr.bf16.mxu0 %v3066
        %3808 = vmatmul.mubr.bf16.gmra.mrb[0].mxu0 %v3002
        %v3809 = vpop.f32.mrb[0].mxu0
        %v3810 = vadd.f32 %v3521, %v3809
        %v3811 = vpop.f32.mrb[0].mxu0
        %v3812 = vpop.f32.mrb[0].mxu0
        %v3813 = vadd.f32 %v3524, %v3812
        %v3814 = vpop.f32.mrb[0].mxu0
        %3815 = vmatprep.mubr.bf16.mxu0 %v3067
        %3816 = vmatmul.mubr.bf16.gmra.mrb[0].mxu0 %v3003
        %v3817 = vpop.f32.mrb[0].mxu0
        %v3818 = vadd.f32 %v3529, %v3817
        %v3819 = vpop.f32.mrb[0].mxu0
        %v3820 = vpop.f32.mrb[0].mxu0
        %v3821 = vadd.f32 %v3532, %v3820
        %v3822 = vpop.f32.mrb[0].mxu0
        %3823 = vmatprep.mubr.bf16.mxu0 %v3068
        %3824 = vmatmul.mubr.bf16.gmra.mrb[0].mxu0 %v3004
        %v3825 = vpop.f32.mrb[0].mxu0
        %v3826 = vadd.f32 %v3537, %v3825
        %v3827 = vpop.f32.mrb[0].mxu0
        %v3828 = vpop.f32.mrb[0].mxu0
        %v3829 = vadd.f32 %v3540, %v3828
        %v3830 = vpop.f32.mrb[0].mxu0
        %3831 = vmatprep.mubr.bf16.mxu0 %v3069
        %3832 = vmatmul.mubr.bf16.gmra.mrb[0].mxu0 %v3005
        %v3833 = vpop.f32.mrb[0].mxu0
        %v3834 = vadd.f32 %v3545, %v3833
        %v3835 = vpop.f32.mrb[0].mxu0
        %v3836 = vpop.f32.mrb[0].mxu0
        %v3837 = vadd.f32 %v3548, %v3836
        %v3838 = vpop.f32.mrb[0].mxu0
        %3839 = vdwg.mxu0
        %v3840 = vadd.f32 %v2686, %v3586
        %v3841 = vadd.f32 %v2687, %v3589
        %v3842 = vadd.f32 %v2688, %v3594
        %v3843 = vadd.f32 %v2689, %v3597
        %v3844 = vadd.f32 %v2690, %v3602
        %v3845 = vadd.f32 %v2691, %v3605
        %v3846 = vadd.f32 %v2692, %v3610
        %v3847 = vadd.f32 %v2693, %v3613
        %v3848 = vadd.f32 %v2694, %v3618
        %v3849 = vadd.f32 %v2695, %v3621
        %v3850 = vadd.f32 %v2696, %v3626
        %v3851 = vadd.f32 %v2697, %v3629
        %v3852 = vadd.f32 %v2698, %v3634
        %v3853 = vadd.f32 %v2699, %v3637
        %v3854 = vadd.f32 %v2700, %v3642
        %v3855 = vadd.f32 %v2701, %v3645
        %v3856 = vadd.f32 %v2702, %v3650
        %v3857 = vadd.f32 %v2703, %v3653
        %v3858 = vadd.f32 %v2704, %v3658
        %v3859 = vadd.f32 %v2705, %v3661
        %v3860 = vadd.f32 %v2706, %v3666
        %v3861 = vadd.f32 %v2707, %v3669
        %v3862 = vadd.f32 %v2708, %v3674
        %v3863 = vadd.f32 %v2709, %v3677
        %v3864 = vadd.f32 %v2710, %v3682
        %v3865 = vadd.f32 %v2711, %v3685
        %v3866 = vadd.f32 %v2712, %v3690
        %v3867 = vadd.f32 %v2713, %v3693
        %v3868 = vadd.f32 %v2714, %v3698
        %v3869 = vadd.f32 %v2715, %v3701
        %v3870 = vadd.f32 %v2716, %v3706
        %v3871 = vadd.f32 %v2717, %v3709
        %v3872 = vadd.f32 %v2718, %v3714
        %v3873 = vadd.f32 %v2719, %v3717
        %v3874 = vadd.f32 %v2720, %v3722
        %v3875 = vadd.f32 %v2721, %v3725
        %v3876 = vadd.f32 %v2722, %v3730
        %v3877 = vadd.f32 %v2723, %v3733
        %v3878 = vadd.f32 %v2724, %v3738
        %v3879 = vadd.f32 %v2725, %v3741
        %v3880 = vadd.f32 %v2726, %v3746
        %v3881 = vadd.f32 %v2727, %v3749
        %v3882 = vadd.f32 %v2728, %v3754
        %v3883 = vadd.f32 %v2729, %v3757
        %v3884 = vadd.f32 %v2730, %v3762
        %v3885 = vadd.f32 %v2731, %v3765
        %v3886 = vadd.f32 %v2732, %v3770
        %v3887 = vadd.f32 %v2733, %v3773
        %v3888 = vadd.f32 %v2734, %v3778
        %v3889 = vadd.f32 %v2735, %v3781
        %v3890 = vadd.f32 %v2736, %v3786
        %v3891 = vadd.f32 %v2737, %v3789
        %v3892 = vadd.f32 %v2738, %v3794
        %v3893 = vadd.f32 %v2739, %v3797
        %v3894 = vadd.f32 %v2740, %v3802
        %v3895 = vadd.f32 %v2741, %v3805
        %v3896 = vadd.f32 %v2742, %v3810
        %v3897 = vadd.f32 %v2743, %v3813
        %v3898 = vadd.f32 %v2744, %v3818
        %v3899 = vadd.f32 %v2745, %v3821
        %v3900 = vadd.f32 %v2746, %v3826
        %v3901 = vadd.f32 %v2747, %v3829
        %v3902 = vadd.f32 %v2748, %v3834
        %v3903 = vadd.f32 %v2749, %v3837
        %3904 = vst [vmem:[#allocation2] sm:$0xff] %v3840
        %3905 = vst [vmem:[#allocation2 + $0x8] sm:$0xff] %v3841
        %3906 = vst [vmem:[#allocation2 + $0x10] sm:$0xff] %v3842
        %3907 = vst [vmem:[#allocation2 + $0x18] sm:$0xff] %v3843
        %3908 = vst [vmem:[#allocation2 + $0x20] sm:$0xff] %v3844
        %3909 = vst [vmem:[#allocation2 + $0x28] sm:$0xff] %v3845
        %3910 = vst [vmem:[#allocation2 + $0x30] sm:$0xff] %v3846
        %3911 = vst [vmem:[#allocation2 + $0x38] sm:$0xff] %v3847
        %3912 = vst [vmem:[#allocation2 + $0x40] sm:$0xff] %v3848
        %3913 = vst [vmem:[#allocation2 + $0x48] sm:$0xff] %v3849
        %3914 = vst [vmem:[#allocation2 + $0x50] sm:$0xff] %v3850
        %3915 = vst [vmem:[#allocation2 + $0x58] sm:$0xff] %v3851
        %3916 = vst [vmem:[#allocation2 + $0x60] sm:$0xff] %v3852
        %3917 = vst [vmem:[#allocation2 + $0x68] sm:$0xff] %v3853
        %3918 = vst [vmem:[#allocation2 + $0x70] sm:$0xff] %v3854
        %3919 = vst [vmem:[#allocation2 + $0x78] sm:$0xff] %v3855
        %3920 = vst [vmem:[#allocation2 + $0x80] sm:$0xff] %v3856
        %3921 = vst [vmem:[#allocation2 + $0x88] sm:$0xff] %v3857
        %3922 = vst [vmem:[#allocation2 + $0x90] sm:$0xff] %v3858
        %3923 = vst [vmem:[#allocation2 + $0x98] sm:$0xff] %v3859
        %3924 = vst [vmem:[#allocation2 + $0xa0] sm:$0xff] %v3860
        %3925 = vst [vmem:[#allocation2 + $0xa8] sm:$0xff] %v3861
        %3926 = vst [vmem:[#allocation2 + $0xb0] sm:$0xff] %v3862
        %3927 = vst [vmem:[#allocation2 + $0xb8] sm:$0xff] %v3863
        %3928 = vst [vmem:[#allocation2 + $0xc0] sm:$0xff] %v3864
        %3929 = vst [vmem:[#allocation2 + $0xc8] sm:$0xff] %v3865
        %3930 = vst [vmem:[#allocation2 + $0xd0] sm:$0xff] %v3866
        %3931 = vst [vmem:[#allocation2 + $0xd8] sm:$0xff] %v3867
        %3932 = vst [vmem:[#allocation2 + $0xe0] sm:$0xff] %v3868
        %3933 = vst [vmem:[#allocation2 + $0xe8] sm:$0xff] %v3869
        %3934 = vst [vmem:[#allocation2 + $0xf0] sm:$0xff] %v3870
        %3935 = vst [vmem:[#allocation2 + $0xf8] sm:$0xff] %v3871
        %3936 = vst [vmem:[#allocation2 + $0x100] sm:$0xff] %v3872
        %3937 = vst [vmem:[#allocation2 + $0x108] sm:$0xff] %v3873
        %3938 = vst [vmem:[#allocation2 + $0x110] sm:$0xff] %v3874
        %3939 = vst [vmem:[#allocation2 + $0x118] sm:$0xff] %v3875
        %3940 = vst [vmem:[#allocation2 + $0x120] sm:$0xff] %v3876
        %3941 = vst [vmem:[#allocation2 + $0x128] sm:$0xff] %v3877
        %3942 = vst [vmem:[#allocation2 + $0x130] sm:$0xff] %v3878
        %3943 = vst [vmem:[#allocation2 + $0x138] sm:$0xff] %v3879
        %3944 = vst [vmem:[#allocation2 + $0x140] sm:$0xff] %v3880
        %3945 = vst [vmem:[#allocation2 + $0x148] sm:$0xff] %v3881
        %3946 = vst [vmem:[#allocation2 + $0x150] sm:$0xff] %v3882
        %3947 = vst [vmem:[#allocation2 + $0x158] sm:$0xff] %v3883
        %3948 = vst [vmem:[#allocation2 + $0x160] sm:$0xff] %v3884
        %3949 = vst [vmem:[#allocation2 + $0x168] sm:$0xff] %v3885
        %3950 = vst [vmem:[#allocation2 + $0x170] sm:$0xff] %v3886
        %3951 = vst [vmem:[#allocation2 + $0x178] sm:$0xff] %v3887
        %3952 = vst [vmem:[#allocation2 + $0x180] sm:$0xff] %v3888
        %3953 = vst [vmem:[#allocation2 + $0x188] sm:$0xff] %v3889
        %3954 = vst [vmem:[#allocation2 + $0x190] sm:$0xff] %v3890
        %3955 = vst [vmem:[#allocation2 + $0x198] sm:$0xff] %v3891
        %3956 = vst [vmem:[#allocation2 + $0x1a0] sm:$0xff] %v3892
        %3957 = vst [vmem:[#allocation2 + $0x1a8] sm:$0xff] %v3893
        %3958 = vst [vmem:[#allocation2 + $0x1b0] sm:$0xff] %v3894
        %3959 = vst [vmem:[#allocation2 + $0x1b8] sm:$0xff] %v3895
        %3960 = vst [vmem:[#allocation2 + $0x1c0] sm:$0xff] %v3896
        %3961 = vst [vmem:[#allocation2 + $0x1c8] sm:$0xff] %v3897
        %3962 = vst [vmem:[#allocation2 + $0x1d0] sm:$0xff] %v3898
        %3963 = vst [vmem:[#allocation2 + $0x1d8] sm:$0xff] %v3899
        %3964 = vst [vmem:[#allocation2 + $0x1e0] sm:$0xff] %v3900
        %3965 = vst [vmem:[#allocation2 + $0x1e8] sm:$0xff] %v3901
        %3966 = vst [vmem:[#allocation2 + $0x1f0] sm:$0xff] %v3902
        %3967 = vst [vmem:[#allocation2 + $0x1f8] sm:$0xff] %v3903
        %p3968 = scmp.eq.s32.totalorder %s31, 1
        // Predicated region
        $region65: #{tpu_custom_call.1} parent=39 // pred_check
          %p3969 = pneg %p3968
        $region66: #{tpu_custom_call.1} parent=39 // pred_check_branch
          %3971 = sbr.rel (%p3969) target = $region68
        $region67: #{tpu_custom_call.1} parent=39 // pred_region
          %v3972 = vld [vmem:[#allocation2] sm:$0xff]
          %v3973 = vld [vmem:[#allocation2 + $0x8] sm:$0xff]
          %v3974 = vld [vmem:[#allocation2 + $0x10] sm:$0xff]
          %v3975 = vld [vmem:[#allocation2 + $0x18] sm:$0xff]
          %v3976 = vld [vmem:[#allocation2 + $0x20] sm:$0xff]
          %v3977 = vld [vmem:[#allocation2 + $0x28] sm:$0xff]
          %v3978 = vld [vmem:[#allocation2 + $0x30] sm:$0xff]
          %v3979 = vld [vmem:[#allocation2 + $0x38] sm:$0xff]
          %v3980 = vld [vmem:[#allocation2 + $0x40] sm:$0xff]
          %v3981 = vld [vmem:[#allocation2 + $0x48] sm:$0xff]
          %v3982 = vld [vmem:[#allocation2 + $0x50] sm:$0xff]
          %v3983 = vld [vmem:[#allocation2 + $0x58] sm:$0xff]
          %v3984 = vld [vmem:[#allocation2 + $0x60] sm:$0xff]
          %v3985 = vld [vmem:[#allocation2 + $0x68] sm:$0xff]
          %v3986 = vld [vmem:[#allocation2 + $0x70] sm:$0xff]
          %v3987 = vld [vmem:[#allocation2 + $0x78] sm:$0xff]
          %v3988 = vld [vmem:[#allocation2 + $0x80] sm:$0xff]
          %v3989 = vld [vmem:[#allocation2 + $0x88] sm:$0xff]
          %v3990 = vld [vmem:[#allocation2 + $0x90] sm:$0xff]
          %v3991 = vld [vmem:[#allocation2 + $0x98] sm:$0xff]
          %v3992 = vld [vmem:[#allocation2 + $0xa0] sm:$0xff]
          %v3993 = vld [vmem:[#allocation2 + $0xa8] sm:$0xff]
          %v3994 = vld [vmem:[#allocation2 + $0xb0] sm:$0xff]
          %v3995 = vld [vmem:[#allocation2 + $0xb8] sm:$0xff]
          %v3996 = vld [vmem:[#allocation2 + $0xc0] sm:$0xff]
          %v3997 = vld [vmem:[#allocation2 + $0xc8] sm:$0xff]
          %v3998 = vld [vmem:[#allocation2 + $0xd0] sm:$0xff]
          %v3999 = vld [vmem:[#allocation2 + $0xd8] sm:$0xff]
          %v4000 = vld [vmem:[#allocation2 + $0xe0] sm:$0xff]
          %v4001 = vld [vmem:[#allocation2 + $0xe8] sm:$0xff]
          %v4002 = vld [vmem:[#allocation2 + $0xf0] sm:$0xff]
          %v4003 = vld [vmem:[#allocation2 + $0xf8] sm:$0xff]
          %v4004 = vld [vmem:[#allocation2 + $0x100] sm:$0xff]
          %v4005 = vld [vmem:[#allocation2 + $0x108] sm:$0xff]
          %v4006 = vld [vmem:[#allocation2 + $0x110] sm:$0xff]
          %v4007 = vld [vmem:[#allocation2 + $0x118] sm:$0xff]
          %v4008 = vld [vmem:[#allocation2 + $0x120] sm:$0xff]
          %v4009 = vld [vmem:[#allocation2 + $0x128] sm:$0xff]
          %v4010 = vld [vmem:[#allocation2 + $0x130] sm:$0xff]
          %v4011 = vld [vmem:[#allocation2 + $0x138] sm:$0xff]
          %v4012 = vld [vmem:[#allocation2 + $0x140] sm:$0xff]
          %v4013 = vld [vmem:[#allocation2 + $0x148] sm:$0xff]
          %v4014 = vld [vmem:[#allocation2 + $0x150] sm:$0xff]
          %v4015 = vld [vmem:[#allocation2 + $0x158] sm:$0xff]
          %v4016 = vld [vmem:[#allocation2 + $0x160] sm:$0xff]
          %v4017 = vld [vmem:[#allocation2 + $0x168] sm:$0xff]
          %v4018 = vld [vmem:[#allocation2 + $0x170] sm:$0xff]
          %v4019 = vld [vmem:[#allocation2 + $0x178] sm:$0xff]
          %v4020 = vld [vmem:[#allocation2 + $0x180] sm:$0xff]
          %v4021 = vld [vmem:[#allocation2 + $0x188] sm:$0xff]
          %v4022 = vld [vmem:[#allocation2 + $0x190] sm:$0xff]
          %v4023 = vld [vmem:[#allocation2 + $0x198] sm:$0xff]
          %v4024 = vld [vmem:[#allocation2 + $0x1a0] sm:$0xff]
          %v4025 = vld [vmem:[#allocation2 + $0x1a8] sm:$0xff]
          %v4026 = vld [vmem:[#allocation2 + $0x1b0] sm:$0xff]
          %v4027 = vld [vmem:[#allocation2 + $0x1b8] sm:$0xff]
          %v4028 = vld [vmem:[#allocation2 + $0x1c0] sm:$0xff]
          %v4029 = vld [vmem:[#allocation2 + $0x1c8] sm:$0xff]
          %v4030 = vld [vmem:[#allocation2 + $0x1d0] sm:$0xff]
          %v4031 = vld [vmem:[#allocation2 + $0x1d8] sm:$0xff]
          %v4032 = vld [vmem:[#allocation2 + $0x1e0] sm:$0xff]
          %v4033 = vld [vmem:[#allocation2 + $0x1e8] sm:$0xff]
          %v4034 = vld [vmem:[#allocation2 + $0x1f0] sm:$0xff]
          %v4035 = vld [vmem:[#allocation2 + $0x1f8] sm:$0xff]
          %v4036 = vmul.f32 %v3972, 0.5
          %v4037 = vmul.f32 %v3973, 0.5
          %v4038 = vmul.f32 %v3974, 0.5
          %v4039 = vmul.f32 %v3975, 0.5
          %v4040 = vmul.f32 %v3976, 0.5
          %v4041 = vmul.f32 %v3977, 0.5
          %v4042 = vmul.f32 %v3978, 0.5
          %v4043 = vmul.f32 %v3979, 0.5
          %v4044 = vmul.f32 %v3980, 0.5
          %v4045 = vmul.f32 %v3981, 0.5
          %v4046 = vmul.f32 %v3982, 0.5
          %v4047 = vmul.f32 %v3983, 0.5
          %v4048 = vmul.f32 %v3984, 0.5
          %v4049 = vmul.f32 %v3985, 0.5
          %v4050 = vmul.f32 %v3986, 0.5
          %v4051 = vmul.f32 %v3987, 0.5
          %v4052 = vmul.f32 %v3988, 0.5
          %v4053 = vmul.f32 %v3989, 0.5
          %v4054 = vmul.f32 %v3990, 0.5
          %v4055 = vmul.f32 %v3991, 0.5
          %v4056 = vmul.f32 %v3992, 0.5
          %v4057 = vmul.f32 %v3993, 0.5
          %v4058 = vmul.f32 %v3994, 0.5
          %v4059 = vmul.f32 %v3995, 0.5
          %v4060 = vmul.f32 %v3996, 0.5
          %v4061 = vmul.f32 %v3997, 0.5
          %v4062 = vmul.f32 %v3998, 0.5
          %v4063 = vmul.f32 %v3999, 0.5
          %v4064 = vmul.f32 %v4000, 0.5
          %v4065 = vmul.f32 %v4001, 0.5
          %v4066 = vmul.f32 %v4002, 0.5
          %v4067 = vmul.f32 %v4003, 0.5
          %v4068 = vmul.f32 %v4004, 0.5
          %v4069 = vmul.f32 %v4005, 0.5
          %v4070 = vmul.f32 %v4006, 0.5
          %v4071 = vmul.f32 %v4007, 0.5
          %v4072 = vmul.f32 %v4008, 0.5
          %v4073 = vmul.f32 %v4009, 0.5
          %v4074 = vmul.f32 %v4010, 0.5
          %v4075 = vmul.f32 %v4011, 0.5
          %v4076 = vmul.f32 %v4012, 0.5
          %v4077 = vmul.f32 %v4013, 0.5
          %v4078 = vmul.f32 %v4014, 0.5
          %v4079 = vmul.f32 %v4015, 0.5
          %v4080 = vmul.f32 %v4016, 0.5
          %v4081 = vmul.f32 %v4017, 0.5
          %v4082 = vmul.f32 %v4018, 0.5
          %v4083 = vmul.f32 %v4019, 0.5
          %v4084 = vmul.f32 %v4020, 0.5
          %v4085 = vmul.f32 %v4021, 0.5
          %v4086 = vmul.f32 %v4022, 0.5
          %v4087 = vmul.f32 %v4023, 0.5
          %v4088 = vmul.f32 %v4024, 0.5
          %v4089 = vmul.f32 %v4025, 0.5
          %v4090 = vmul.f32 %v4026, 0.5
          %v4091 = vmul.f32 %v4027, 0.5
          %v4092 = vmul.f32 %v4028, 0.5
          %v4093 = vmul.f32 %v4029, 0.5
          %v4094 = vmul.f32 %v4030, 0.5
          %v4095 = vmul.f32 %v4031, 0.5
          %v4096 = vmul.f32 %v4032, 0.5
          %v4097 = vmul.f32 %v4033, 0.5
          %v4098 = vmul.f32 %v4034, 0.5
          %v4099 = vmul.f32 %v4035, 0.5
          %v4100 = vpack.c.bf16 %v4037, %v4036
          %v4101 = vpack.c.bf16 %v4039, %v4038
          %v4102 = vpack.c.bf16 %v4041, %v4040
          %v4103 = vpack.c.bf16 %v4043, %v4042
          %v4104 = vpack.c.bf16 %v4045, %v4044
          %v4105 = vpack.c.bf16 %v4047, %v4046
          %v4106 = vpack.c.bf16 %v4049, %v4048
          %v4107 = vpack.c.bf16 %v4051, %v4050
          %v4108 = vpack.c.bf16 %v4053, %v4052
          %v4109 = vpack.c.bf16 %v4055, %v4054
          %v4110 = vpack.c.bf16 %v4057, %v4056
          %v4111 = vpack.c.bf16 %v4059, %v4058
          %v4112 = vpack.c.bf16 %v4061, %v4060
          %v4113 = vpack.c.bf16 %v4063, %v4062
          %v4114 = vpack.c.bf16 %v4065, %v4064
          %v4115 = vpack.c.bf16 %v4067, %v4066
          %v4116 = vpack.c.bf16 %v4069, %v4068
          %v4117 = vpack.c.bf16 %v4071, %v4070
          %v4118 = vpack.c.bf16 %v4073, %v4072
          %v4119 = vpack.c.bf16 %v4075, %v4074
          %v4120 = vpack.c.bf16 %v4077, %v4076
          %v4121 = vpack.c.bf16 %v4079, %v4078
          %v4122 = vpack.c.bf16 %v4081, %v4080
          %v4123 = vpack.c.bf16 %v4083, %v4082
          %v4124 = vpack.c.bf16 %v4085, %v4084
          %v4125 = vpack.c.bf16 %v4087, %v4086
          %v4126 = vpack.c.bf16 %v4089, %v4088
          %v4127 = vpack.c.bf16 %v4091, %v4090
          %v4128 = vpack.c.bf16 %v4093, %v4092
          %v4129 = vpack.c.bf16 %v4095, %v4094
          %v4130 = vpack.c.bf16 %v4097, %v4096
          %v4131 = vpack.c.bf16 %v4099, %v4098
          %v4164 = vunpack.c.l.b16 %v4100
          %v4165 = vunpack.c.h.b16 %v4100
          %v4166 = vunpack.c.l.b16 %v4101
          %v4167 = vunpack.c.h.b16 %v4101
          %v4168 = vunpack.c.l.b16 %v4102
          %v4169 = vunpack.c.h.b16 %v4102
          %v4170 = vunpack.c.l.b16 %v4103
          %v4171 = vunpack.c.h.b16 %v4103
          %v4172 = vunpack.c.l.b16 %v4104
          %v4173 = vunpack.c.h.b16 %v4104
          %v4174 = vunpack.c.l.b16 %v4105
          %v4175 = vunpack.c.h.b16 %v4105
          %v4176 = vunpack.c.l.b16 %v4106
          %v4177 = vunpack.c.h.b16 %v4106
          %v4178 = vunpack.c.l.b16 %v4107
          %v4179 = vunpack.c.h.b16 %v4107
          %v4180 = vunpack.c.l.b16 %v4108
          %v4181 = vunpack.c.h.b16 %v4108
          %v4182 = vunpack.c.l.b16 %v4109
          %v4183 = vunpack.c.h.b16 %v4109
          %v4184 = vunpack.c.l.b16 %v4110
          %v4185 = vunpack.c.h.b16 %v4110
          %v4186 = vunpack.c.l.b16 %v4111
          %v4187 = vunpack.c.h.b16 %v4111
          %v4188 = vunpack.c.l.b16 %v4112
          %v4189 = vunpack.c.h.b16 %v4112
          %v4190 = vunpack.c.l.b16 %v4113
          %v4191 = vunpack.c.h.b16 %v4113
          %v4192 = vunpack.c.l.b16 %v4114
          %v4193 = vunpack.c.h.b16 %v4114
          %v4194 = vunpack.c.l.b16 %v4115
          %v4195 = vunpack.c.h.b16 %v4115
          %v4196 = vunpack.c.l.b16 %v4116
          %v4197 = vunpack.c.h.b16 %v4116
          %v4198 = vunpack.c.l.b16 %v4117
          %v4199 = vunpack.c.h.b16 %v4117
          %v4200 = vunpack.c.l.b16 %v4118
          %v4201 = vunpack.c.h.b16 %v4118
          %v4202 = vunpack.c.l.b16 %v4119
          %v4203 = vunpack.c.h.b16 %v4119
          %v4204 = vunpack.c.l.b16 %v4120
          %v4205 = vunpack.c.h.b16 %v4120
          %v4206 = vunpack.c.l.b16 %v4121
          %v4207 = vunpack.c.h.b16 %v4121
          %v4208 = vunpack.c.l.b16 %v4122
          %v4209 = vunpack.c.h.b16 %v4122
          %v4210 = vunpack.c.l.b16 %v4123
          %v4211 = vunpack.c.h.b16 %v4123
          %v4212 = vunpack.c.l.b16 %v4124
          %v4213 = vunpack.c.h.b16 %v4124
          %v4214 = vunpack.c.l.b16 %v4125
          %v4215 = vunpack.c.h.b16 %v4125
          %v4216 = vunpack.c.l.b16 %v4126
          %v4217 = vunpack.c.h.b16 %v4126
          %v4218 = vunpack.c.l.b16 %v4127
          %v4219 = vunpack.c.h.b16 %v4127
          %v4220 = vunpack.c.l.b16 %v4128
          %v4221 = vunpack.c.h.b16 %v4128
          %v4222 = vunpack.c.l.b16 %v4129
          %v4223 = vunpack.c.h.b16 %v4129
          %v4224 = vunpack.c.l.b16 %v4130
          %v4225 = vunpack.c.h.b16 %v4130
          %v4226 = vunpack.c.l.b16 %v4131
          %v4227 = vunpack.c.h.b16 %v4131
          %v4228 = vpack.c.b16 %v4164, %v4164
          %v4229 = vpack.c.b16 %v4165, %v4165
          %v4230 = vpack.c.b16 %v4166, %v4166
          %v4231 = vpack.c.b16 %v4167, %v4167
          %v4232 = vpack.c.b16 %v4168, %v4168
          %v4233 = vpack.c.b16 %v4169, %v4169
          %v4234 = vpack.c.b16 %v4170, %v4170
          %v4235 = vpack.c.b16 %v4171, %v4171
          %v4236 = vpack.c.b16 %v4172, %v4172
          %v4237 = vpack.c.b16 %v4173, %v4173
          %v4238 = vpack.c.b16 %v4174, %v4174
          %v4239 = vpack.c.b16 %v4175, %v4175
          %v4240 = vpack.c.b16 %v4176, %v4176
          %v4241 = vpack.c.b16 %v4177, %v4177
          %v4242 = vpack.c.b16 %v4178, %v4178
          %v4243 = vpack.c.b16 %v4179, %v4179
          %v4244 = vpack.c.b16 %v4180, %v4180
          %v4245 = vpack.c.b16 %v4181, %v4181
          %v4246 = vpack.c.b16 %v4182, %v4182
          %v4247 = vpack.c.b16 %v4183, %v4183
          %v4248 = vpack.c.b16 %v4184, %v4184
          %v4249 = vpack.c.b16 %v4185, %v4185
          %v4250 = vpack.c.b16 %v4186, %v4186
          %v4251 = vpack.c.b16 %v4187, %v4187
          %v4252 = vpack.c.b16 %v4188, %v4188
          %v4253 = vpack.c.b16 %v4189, %v4189
          %v4254 = vpack.c.b16 %v4190, %v4190
          %v4255 = vpack.c.b16 %v4191, %v4191
          %v4256 = vpack.c.b16 %v4192, %v4192
          %v4257 = vpack.c.b16 %v4193, %v4193
          %v4258 = vpack.c.b16 %v4194, %v4194
          %v4259 = vpack.c.b16 %v4195, %v4195
          %v4260 = vpack.c.b16 %v4196, %v4196
          %v4261 = vpack.c.b16 %v4197, %v4197
          %v4262 = vpack.c.b16 %v4198, %v4198
          %v4263 = vpack.c.b16 %v4199, %v4199
          %v4264 = vpack.c.b16 %v4200, %v4200
          %v4265 = vpack.c.b16 %v4201, %v4201
          %v4266 = vpack.c.b16 %v4202, %v4202
          %v4267 = vpack.c.b16 %v4203, %v4203
          %v4268 = vpack.c.b16 %v4204, %v4204
          %v4269 = vpack.c.b16 %v4205, %v4205
          %v4270 = vpack.c.b16 %v4206, %v4206
          %v4271 = vpack.c.b16 %v4207, %v4207
          %v4272 = vpack.c.b16 %v4208, %v4208
          %v4273 = vpack.c.b16 %v4209, %v4209
          %v4274 = vpack.c.b16 %v4210, %v4210
          %v4275 = vpack.c.b16 %v4211, %v4211
          %v4276 = vpack.c.b16 %v4212, %v4212
          %v4277 = vpack.c.b16 %v4213, %v4213
          %v4278 = vpack.c.b16 %v4214, %v4214
          %v4279 = vpack.c.b16 %v4215, %v4215
          %v4280 = vpack.c.b16 %v4216, %v4216
          %v4281 = vpack.c.b16 %v4217, %v4217
          %v4282 = vpack.c.b16 %v4218, %v4218
          %v4283 = vpack.c.b16 %v4219, %v4219
          %v4284 = vpack.c.b16 %v4220, %v4220
          %v4285 = vpack.c.b16 %v4221, %v4221
          %v4286 = vpack.c.b16 %v4222, %v4222
          %v4287 = vpack.c.b16 %v4223, %v4223
          %v4288 = vpack.c.b16 %v4224, %v4224
          %v4289 = vpack.c.b16 %v4225, %v4225
          %v4290 = vpack.c.b16 %v4226, %v4226
          %v4291 = vpack.c.b16 %v4227, %v4227
          %4356 = vst [vmem:[#allocation14] sm:$0xf] %v4228
          %4357 = vst [vmem:[#allocation14 + $0x4] sm:$0xf] %v4229
          %4358 = vst [vmem:[#allocation14 + $0x8] sm:$0xf] %v4230
          %4359 = vst [vmem:[#allocation14 + $0xc] sm:$0xf] %v4231
          %4360 = vst [vmem:[#allocation14 + $0x10] sm:$0xf] %v4232
          %4361 = vst [vmem:[#allocation14 + $0x14] sm:$0xf] %v4233
          %4362 = vst [vmem:[#allocation14 + $0x18] sm:$0xf] %v4234
          %4363 = vst [vmem:[#allocation14 + $0x1c] sm:$0xf] %v4235
          %4364 = vst [vmem:[#allocation14 + $0x20] sm:$0xf] %v4236
          %4365 = vst [vmem:[#allocation14 + $0x24] sm:$0xf] %v4237
          %4366 = vst [vmem:[#allocation14 + $0x28] sm:$0xf] %v4238
          %4367 = vst [vmem:[#allocation14 + $0x2c] sm:$0xf] %v4239
          %4368 = vst [vmem:[#allocation14 + $0x30] sm:$0xf] %v4240
          %4369 = vst [vmem:[#allocation14 + $0x34] sm:$0xf] %v4241
          %4370 = vst [vmem:[#allocation14 + $0x38] sm:$0xf] %v4242
          %4371 = vst [vmem:[#allocation14 + $0x3c] sm:$0xf] %v4243
          %4372 = vst [vmem:[#allocation14 + $0x40] sm:$0xf] %v4244
          %4373 = vst [vmem:[#allocation14 + $0x44] sm:$0xf] %v4245
          %4374 = vst [vmem:[#allocation14 + $0x48] sm:$0xf] %v4246
          %4375 = vst [vmem:[#allocation14 + $0x4c] sm:$0xf] %v4247
          %4376 = vst [vmem:[#allocation14 + $0x50] sm:$0xf] %v4248
          %4377 = vst [vmem:[#allocation14 + $0x54] sm:$0xf] %v4249
          %4378 = vst [vmem:[#allocation14 + $0x58] sm:$0xf] %v4250
          %4379 = vst [vmem:[#allocation14 + $0x5c] sm:$0xf] %v4251
          %4380 = vst [vmem:[#allocation14 + $0x60] sm:$0xf] %v4252
          %4381 = vst [vmem:[#allocation14 + $0x64] sm:$0xf] %v4253
          %4382 = vst [vmem:[#allocation14 + $0x68] sm:$0xf] %v4254
          %4383 = vst [vmem:[#allocation14 + $0x6c] sm:$0xf] %v4255
          %4384 = vst [vmem:[#allocation14 + $0x70] sm:$0xf] %v4256
          %4385 = vst [vmem:[#allocation14 + $0x74] sm:$0xf] %v4257
          %4386 = vst [vmem:[#allocation14 + $0x78] sm:$0xf] %v4258
          %4387 = vst [vmem:[#allocation14 + $0x7c] sm:$0xf] %v4259
          %4388 = vst [vmem:[#allocation14 + $0x80] sm:$0xf] %v4260
          %4389 = vst [vmem:[#allocation14 + $0x84] sm:$0xf] %v4261
          %4390 = vst [vmem:[#allocation14 + $0x88] sm:$0xf] %v4262
          %4391 = vst [vmem:[#allocation14 + $0x8c] sm:$0xf] %v4263
          %4392 = vst [vmem:[#allocation14 + $0x90] sm:$0xf] %v4264
          %4393 = vst [vmem:[#allocation14 + $0x94] sm:$0xf] %v4265
          %4394 = vst [vmem:[#allocation14 + $0x98] sm:$0xf] %v4266
          %4395 = vst [vmem:[#allocation14 + $0x9c] sm:$0xf] %v4267
          %4396 = vst [vmem:[#allocation14 + $0xa0] sm:$0xf] %v4268
          %4397 = vst [vmem:[#allocation14 + $0xa4] sm:$0xf] %v4269
          %4398 = vst [vmem:[#allocation14 + $0xa8] sm:$0xf] %v4270
          %4399 = vst [vmem:[#allocation14 + $0xac] sm:$0xf] %v4271
          %4400 = vst [vmem:[#allocation14 + $0xb0] sm:$0xf] %v4272
          %4401 = vst [vmem:[#allocation14 + $0xb4] sm:$0xf] %v4273
          %4402 = vst [vmem:[#allocation14 + $0xb8] sm:$0xf] %v4274
          %4403 = vst [vmem:[#allocation14 + $0xbc] sm:$0xf] %v4275
          %4404 = vst [vmem:[#allocation14 + $0xc0] sm:$0xf] %v4276
          %4405 = vst [vmem:[#allocation14 + $0xc4] sm:$0xf] %v4277
          %4406 = vst [vmem:[#allocation14 + $0xc8] sm:$0xf] %v4278
          %4407 = vst [vmem:[#allocation14 + $0xcc] sm:$0xf] %v4279
          %4408 = vst [vmem:[#allocation14 + $0xd0] sm:$0xf] %v4280
          %4409 = vst [vmem:[#allocation14 + $0xd4] sm:$0xf] %v4281
          %4410 = vst [vmem:[#allocation14 + $0xd8] sm:$0xf] %v4282
          %4411 = vst [vmem:[#allocation14 + $0xdc] sm:$0xf] %v4283
          %4412 = vst [vmem:[#allocation14 + $0xe0] sm:$0xf] %v4284
          %4413 = vst [vmem:[#allocation14 + $0xe4] sm:$0xf] %v4285
          %4414 = vst [vmem:[#allocation14 + $0xe8] sm:$0xf] %v4286
          %4415 = vst [vmem:[#allocation14 + $0xec] sm:$0xf] %v4287
          %4416 = vst [vmem:[#allocation14 + $0xf0] sm:$0xf] %v4288
          %4417 = vst [vmem:[#allocation14 + $0xf4] sm:$0xf] %v4289
          %4418 = vst [vmem:[#allocation14 + $0xf8] sm:$0xf] %v4290
          %4419 = vst [vmem:[#allocation14 + $0xfc] sm:$0xf] %v4291
          %v4420 = vld [vmem:[#allocation10] sm:$0xff]
          %v4421 = vld [vmem:[#allocation10 + $0x8] sm:$0xff]
          %v4422 = vld [vmem:[#allocation10 + $0x10] sm:$0xff]
          %v4423 = vld [vmem:[#allocation10 + $0x18] sm:$0xff]
          %v4424 = vld [vmem:[#allocation10 + $0x20] sm:$0xff]
          %v4425 = vld [vmem:[#allocation10 + $0x28] sm:$0xff]
          %v4426 = vld [vmem:[#allocation10 + $0x30] sm:$0xff]
          %v4427 = vld [vmem:[#allocation10 + $0x38] sm:$0xff]
          %v4428 = vld [vmem:[#allocation10 + $0x40] sm:$0xff]
          %v4429 = vld [vmem:[#allocation10 + $0x48] sm:$0xff]
          %v4430 = vld [vmem:[#allocation10 + $0x50] sm:$0xff]
          %v4431 = vld [vmem:[#allocation10 + $0x58] sm:$0xff]
          %v4432 = vld [vmem:[#allocation10 + $0x60] sm:$0xff]
          %v4433 = vld [vmem:[#allocation10 + $0x68] sm:$0xff]
          %v4434 = vld [vmem:[#allocation10 + $0x70] sm:$0xff]
          %v4435 = vld [vmem:[#allocation10 + $0x78] sm:$0xff]
          %v4436 = vld [vmem:[#allocation10 + $0x80] sm:$0xff]
          %v4437 = vld [vmem:[#allocation10 + $0x88] sm:$0xff]
          %v4438 = vld [vmem:[#allocation10 + $0x90] sm:$0xff]
          %v4439 = vld [vmem:[#allocation10 + $0x98] sm:$0xff]
          %v4440 = vld [vmem:[#allocation10 + $0xa0] sm:$0xff]
          %v4441 = vld [vmem:[#allocation10 + $0xa8] sm:$0xff]
          %v4442 = vld [vmem:[#allocation10 + $0xb0] sm:$0xff]
          %v4443 = vld [vmem:[#allocation10 + $0xb8] sm:$0xff]
          %v4444 = vld [vmem:[#allocation10 + $0xc0] sm:$0xff]
          %v4445 = vld [vmem:[#allocation10 + $0xc8] sm:$0xff]
          %v4446 = vld [vmem:[#allocation10 + $0xd0] sm:$0xff]
          %v4447 = vld [vmem:[#allocation10 + $0xd8] sm:$0xff]
          %v4448 = vld [vmem:[#allocation10 + $0xe0] sm:$0xff]
          %v4449 = vld [vmem:[#allocation10 + $0xe8] sm:$0xff]
          %v4450 = vld [vmem:[#allocation10 + $0xf0] sm:$0xff]
          %v4451 = vld [vmem:[#allocation10 + $0xf8] sm:$0xff]
          %v4452 = vld [vmem:[#allocation10 + $0x100] sm:$0xff]
          %v4453 = vld [vmem:[#allocation10 + $0x108] sm:$0xff]
          %v4454 = vld [vmem:[#allocation10 + $0x110] sm:$0xff]
          %v4455 = vld [vmem:[#allocation10 + $0x118] sm:$0xff]
          %v4456 = vld [vmem:[#allocation10 + $0x120] sm:$0xff]
          %v4457 = vld [vmem:[#allocation10 + $0x128] sm:$0xff]
          %v4458 = vld [vmem:[#allocation10 + $0x130] sm:$0xff]
          %v4459 = vld [vmem:[#allocation10 + $0x138] sm:$0xff]
          %v4460 = vld [vmem:[#allocation10 + $0x140] sm:$0xff]
          %v4461 = vld [vmem:[#allocation10 + $0x148] sm:$0xff]
          %v4462 = vld [vmem:[#allocation10 + $0x150] sm:$0xff]
          %v4463 = vld [vmem:[#allocation10 + $0x158] sm:$0xff]
          %v4464 = vld [vmem:[#allocation10 + $0x160] sm:$0xff]
          %v4465 = vld [vmem:[#allocation10 + $0x168] sm:$0xff]
          %v4466 = vld [vmem:[#allocation10 + $0x170] sm:$0xff]
          %v4467 = vld [vmem:[#allocation10 + $0x178] sm:$0xff]
          %v4468 = vld [vmem:[#allocation10 + $0x180] sm:$0xff]
          %v4469 = vld [vmem:[#allocation10 + $0x188] sm:$0xff]
          %v4470 = vld [vmem:[#allocation10 + $0x190] sm:$0xff]
          %v4471 = vld [vmem:[#allocation10 + $0x198] sm:$0xff]
          %v4472 = vld [vmem:[#allocation10 + $0x1a0] sm:$0xff]
          %v4473 = vld [vmem:[#allocation10 + $0x1a8] sm:$0xff]
          %v4474 = vld [vmem:[#allocation10 + $0x1b0] sm:$0xff]
          %v4475 = vld [vmem:[#allocation10 + $0x1b8] sm:$0xff]
          %v4476 = vld [vmem:[#allocation10 + $0x1c0] sm:$0xff]
          %v4477 = vld [vmem:[#allocation10 + $0x1c8] sm:$0xff]
          %v4478 = vld [vmem:[#allocation10 + $0x1d0] sm:$0xff]
          %v4479 = vld [vmem:[#allocation10 + $0x1d8] sm:$0xff]
          %v4480 = vld [vmem:[#allocation10 + $0x1e0] sm:$0xff]
          %v4481 = vld [vmem:[#allocation10 + $0x1e8] sm:$0xff]
          %v4482 = vld [vmem:[#allocation10 + $0x1f0] sm:$0xff]
          %v4483 = vld [vmem:[#allocation10 + $0x1f8] sm:$0xff]
          %v4484 = vmul.f32 %v3972, 0.16666667
          %v4485 = vmul.f32 %v3973, 0.16666667
          %v4486 = vmul.f32 %v3974, 0.16666667
          %v4487 = vmul.f32 %v3975, 0.16666667
          %v4488 = vmul.f32 %v3976, 0.16666667
          %v4489 = vmul.f32 %v3977, 0.16666667
          %v4490 = vmul.f32 %v3978, 0.16666667
          %v4491 = vmul.f32 %v3979, 0.16666667
          %v4492 = vmul.f32 %v3980, 0.16666667
          %v4493 = vmul.f32 %v3981, 0.16666667
          %v4494 = vmul.f32 %v3982, 0.16666667
          %v4495 = vmul.f32 %v3983, 0.16666667
          %v4496 = vmul.f32 %v3984, 0.16666667
          %v4497 = vmul.f32 %v3985, 0.16666667
          %v4498 = vmul.f32 %v3986, 0.16666667
          %v4499 = vmul.f32 %v3987, 0.16666667
          %v4500 = vmul.f32 %v3988, 0.16666667
          %v4501 = vmul.f32 %v3989, 0.16666667
          %v4502 = vmul.f32 %v3990, 0.16666667
          %v4503 = vmul.f32 %v3991, 0.16666667
          %v4504 = vmul.f32 %v3992, 0.16666667
          %v4505 = vmul.f32 %v3993, 0.16666667
          %v4506 = vmul.f32 %v3994, 0.16666667
          %v4507 = vmul.f32 %v3995, 0.16666667
          %v4508 = vmul.f32 %v3996, 0.16666667
          %v4509 = vmul.f32 %v3997, 0.16666667
          %v4510 = vmul.f32 %v3998, 0.16666667
          %v4511 = vmul.f32 %v3999, 0.16666667
          %v4512 = vmul.f32 %v4000, 0.16666667
          %v4513 = vmul.f32 %v4001, 0.16666667
          %v4514 = vmul.f32 %v4002, 0.16666667
          %v4515 = vmul.f32 %v4003, 0.16666667
          %v4516 = vmul.f32 %v4004, 0.16666667
          %v4517 = vmul.f32 %v4005, 0.16666667
          %v4518 = vmul.f32 %v4006, 0.16666667
          %v4519 = vmul.f32 %v4007, 0.16666667
          %v4520 = vmul.f32 %v4008, 0.16666667
          %v4521 = vmul.f32 %v4009, 0.16666667
          %v4522 = vmul.f32 %v4010, 0.16666667
          %v4523 = vmul.f32 %v4011, 0.16666667
          %v4524 = vmul.f32 %v4012, 0.16666667
          %v4525 = vmul.f32 %v4013, 0.16666667
          %v4526 = vmul.f32 %v4014, 0.16666667
          %v4527 = vmul.f32 %v4015, 0.16666667
          %v4528 = vmul.f32 %v4016, 0.16666667
          %v4529 = vmul.f32 %v4017, 0.16666667
          %v4530 = vmul.f32 %v4018, 0.16666667
          %v4531 = vmul.f32 %v4019, 0.16666667
          %v4532 = vmul.f32 %v4020, 0.16666667
          %v4533 = vmul.f32 %v4021, 0.16666667
          %v4534 = vmul.f32 %v4022, 0.16666667
          %v4535 = vmul.f32 %v4023, 0.16666667
          %v4536 = vmul.f32 %v4024, 0.16666667
          %v4537 = vmul.f32 %v4025, 0.16666667
          %v4538 = vmul.f32 %v4026, 0.16666667
          %v4539 = vmul.f32 %v4027, 0.16666667
          %v4540 = vmul.f32 %v4028, 0.16666667
          %v4541 = vmul.f32 %v4029, 0.16666667
          %v4542 = vmul.f32 %v4030, 0.16666667
          %v4543 = vmul.f32 %v4031, 0.16666667
          %v4544 = vmul.f32 %v4032, 0.16666667
          %v4545 = vmul.f32 %v4033, 0.16666667
          %v4546 = vmul.f32 %v4034, 0.16666667
          %v4547 = vmul.f32 %v4035, 0.16666667
          %v4548 = vadd.f32 %v4420, %v4484
          %v4549 = vadd.f32 %v4421, %v4485
          %v4550 = vadd.f32 %v4422, %v4486
          %v4551 = vadd.f32 %v4423, %v4487
          %v4552 = vadd.f32 %v4424, %v4488
          %v4553 = vadd.f32 %v4425, %v4489
          %v4554 = vadd.f32 %v4426, %v4490
          %v4555 = vadd.f32 %v4427, %v4491
          %v4556 = vadd.f32 %v4428, %v4492
          %v4557 = vadd.f32 %v4429, %v4493
          %v4558 = vadd.f32 %v4430, %v4494
          %v4559 = vadd.f32 %v4431, %v4495
          %v4560 = vadd.f32 %v4432, %v4496
          %v4561 = vadd.f32 %v4433, %v4497
          %v4562 = vadd.f32 %v4434, %v4498
          %v4563 = vadd.f32 %v4435, %v4499
          %v4564 = vadd.f32 %v4436, %v4500
          %v4565 = vadd.f32 %v4437, %v4501
          %v4566 = vadd.f32 %v4438, %v4502
          %v4567 = vadd.f32 %v4439, %v4503
          %v4568 = vadd.f32 %v4440, %v4504
          %v4569 = vadd.f32 %v4441, %v4505
          %v4570 = vadd.f32 %v4442, %v4506
          %v4571 = vadd.f32 %v4443, %v4507
          %v4572 = vadd.f32 %v4444, %v4508
          %v4573 = vadd.f32 %v4445, %v4509
          %v4574 = vadd.f32 %v4446, %v4510
          %v4575 = vadd.f32 %v4447, %v4511
          %v4576 = vadd.f32 %v4448, %v4512
          %v4577 = vadd.f32 %v4449, %v4513
          %v4578 = vadd.f32 %v4450, %v4514
          %v4579 = vadd.f32 %v4451, %v4515
          %v4580 = vadd.f32 %v4452, %v4516
          %v4581 = vadd.f32 %v4453, %v4517
          %v4582 = vadd.f32 %v4454, %v4518
          %v4583 = vadd.f32 %v4455, %v4519
          %v4584 = vadd.f32 %v4456, %v4520
          %v4585 = vadd.f32 %v4457, %v4521
          %v4586 = vadd.f32 %v4458, %v4522
          %v4587 = vadd.f32 %v4459, %v4523
          %v4588 = vadd.f32 %v4460, %v4524
          %v4589 = vadd.f32 %v4461, %v4525
          %v4590 = vadd.f32 %v4462, %v4526
          %v4591 = vadd.f32 %v4463, %v4527
          %v4592 = vadd.f32 %v4464, %v4528
          %v4593 = vadd.f32 %v4465, %v4529
          %v4594 = vadd.f32 %v4466, %v4530
          %v4595 = vadd.f32 %v4467, %v4531
          %v4596 = vadd.f32 %v4468, %v4532
          %v4597 = vadd.f32 %v4469, %v4533
          %v4598 = vadd.f32 %v4470, %v4534
          %v4599 = vadd.f32 %v4471, %v4535
          %v4600 = vadd.f32 %v4472, %v4536
          %v4601 = vadd.f32 %v4473, %v4537
          %v4602 = vadd.f32 %v4474, %v4538
          %v4603 = vadd.f32 %v4475, %v4539
          %v4604 = vadd.f32 %v4476, %v4540
          %v4605 = vadd.f32 %v4477, %v4541
          %v4606 = vadd.f32 %v4478, %v4542
          %v4607 = vadd.f32 %v4479, %v4543
          %v4608 = vadd.f32 %v4480, %v4544
          %v4609 = vadd.f32 %v4481, %v4545
          %v4610 = vadd.f32 %v4482, %v4546
          %v4611 = vadd.f32 %v4483, %v4547
          %4612 = vst [vmem:[#allocation15] sm:$0xff] %v4548
          %4613 = vst [vmem:[#allocation15 + $0x8] sm:$0xff] %v4549
          %4614 = vst [vmem:[#allocation15 + $0x10] sm:$0xff] %v4550
          %4615 = vst [vmem:[#allocation15 + $0x18] sm:$0xff] %v4551
          %4616 = vst [vmem:[#allocation15 + $0x20] sm:$0xff] %v4552
          %4617 = vst [vmem:[#allocation15 + $0x28] sm:$0xff] %v4553
          %4618 = vst [vmem:[#allocation15 + $0x30] sm:$0xff] %v4554
          %4619 = vst [vmem:[#allocation15 + $0x38] sm:$0xff] %v4555
          %4620 = vst [vmem:[#allocation15 + $0x40] sm:$0xff] %v4556
          %4621 = vst [vmem:[#allocation15 + $0x48] sm:$0xff] %v4557
          %4622 = vst [vmem:[#allocation15 + $0x50] sm:$0xff] %v4558
          %4623 = vst [vmem:[#allocation15 + $0x58] sm:$0xff] %v4559
          %4624 = vst [vmem:[#allocation15 + $0x60] sm:$0xff] %v4560
          %4625 = vst [vmem:[#allocation15 + $0x68] sm:$0xff] %v4561
          %4626 = vst [vmem:[#allocation15 + $0x70] sm:$0xff] %v4562
          %4627 = vst [vmem:[#allocation15 + $0x78] sm:$0xff] %v4563
          %4628 = vst [vmem:[#allocation15 + $0x80] sm:$0xff] %v4564
          %4629 = vst [vmem:[#allocation15 + $0x88] sm:$0xff] %v4565
          %4630 = vst [vmem:[#allocation15 + $0x90] sm:$0xff] %v4566
          %4631 = vst [vmem:[#allocation15 + $0x98] sm:$0xff] %v4567
          %4632 = vst [vmem:[#allocation15 + $0xa0] sm:$0xff] %v4568
          %4633 = vst [vmem:[#allocation15 + $0xa8] sm:$0xff] %v4569
          %4634 = vst [vmem:[#allocation15 + $0xb0] sm:$0xff] %v4570
          %4635 = vst [vmem:[#allocation15 + $0xb8] sm:$0xff] %v4571
          %4636 = vst [vmem:[#allocation15 + $0xc0] sm:$0xff] %v4572
          %4637 = vst [vmem:[#allocation15 + $0xc8] sm:$0xff] %v4573
          %4638 = vst [vmem:[#allocation15 + $0xd0] sm:$0xff] %v4574
          %4639 = vst [vmem:[#allocation15 + $0xd8] sm:$0xff] %v4575
          %4640 = vst [vmem:[#allocation15 + $0xe0] sm:$0xff] %v4576
          %4641 = vst [vmem:[#allocation15 + $0xe8] sm:$0xff] %v4577
          %4642 = vst [vmem:[#allocation15 + $0xf0] sm:$0xff] %v4578
          %4643 = vst [vmem:[#allocation15 + $0xf8] sm:$0xff] %v4579
          %4644 = vst [vmem:[#allocation15 + $0x100] sm:$0xff] %v4580
          %4645 = vst [vmem:[#allocation15 + $0x108] sm:$0xff] %v4581
          %4646 = vst [vmem:[#allocation15 + $0x110] sm:$0xff] %v4582
          %4647 = vst [vmem:[#allocation15 + $0x118] sm:$0xff] %v4583
          %4648 = vst [vmem:[#allocation15 + $0x120] sm:$0xff] %v4584
          %4649 = vst [vmem:[#allocation15 + $0x128] sm:$0xff] %v4585
          %4650 = vst [vmem:[#allocation15 + $0x130] sm:$0xff] %v4586
          %4651 = vst [vmem:[#allocation15 + $0x138] sm:$0xff] %v4587
          %4652 = vst [vmem:[#allocation15 + $0x140] sm:$0xff] %v4588
          %4653 = vst [vmem:[#allocation15 + $0x148] sm:$0xff] %v4589
          %4654 = vst [vmem:[#allocation15 + $0x150] sm:$0xff] %v4590
          %4655 = vst [vmem:[#allocation15 + $0x158] sm:$0xff] %v4591
          %4656 = vst [vmem:[#allocation15 + $0x160] sm:$0xff] %v4592
          %4657 = vst [vmem:[#allocation15 + $0x168] sm:$0xff] %v4593
          %4658 = vst [vmem:[#allocation15 + $0x170] sm:$0xff] %v4594
          %4659 = vst [vmem:[#allocation15 + $0x178] sm:$0xff] %v4595
          %4660 = vst [vmem:[#allocation15 + $0x180] sm:$0xff] %v4596
          %4661 = vst [vmem:[#allocation15 + $0x188] sm:$0xff] %v4597
          %4662 = vst [vmem:[#allocation15 + $0x190] sm:$0xff] %v4598
          %4663 = vst [vmem:[#allocation15 + $0x198] sm:$0xff] %v4599
          %4664 = vst [vmem:[#allocation15 + $0x1a0] sm:$0xff] %v4600
          %4665 = vst [vmem:[#allocation15 + $0x1a8] sm:$0xff] %v4601
          %4666 = vst [vmem:[#allocation15 + $0x1b0] sm:$0xff] %v4602
          %4667 = vst [vmem:[#allocation15 + $0x1b8] sm:$0xff] %v4603
          %4668 = vst [vmem:[#allocation15 + $0x1c0] sm:$0xff] %v4604
          %4669 = vst [vmem:[#allocation15 + $0x1c8] sm:$0xff] %v4605
          %4670 = vst [vmem:[#allocation15 + $0x1d0] sm:$0xff] %v4606
          %4671 = vst [vmem:[#allocation15 + $0x1d8] sm:$0xff] %v4607
          %4672 = vst [vmem:[#allocation15 + $0x1e0] sm:$0xff] %v4608
          %4673 = vst [vmem:[#allocation15 + $0x1e8] sm:$0xff] %v4609
          %4674 = vst [vmem:[#allocation15 + $0x1f0] sm:$0xff] %v4610
          %4675 = vst [vmem:[#allocation15 + $0x1f8] sm:$0xff] %v4611
        $region68: #{tpu_custom_call.1} parent=39 // pred_fallthru
          _
        %s4676 = sand.u32 %s159, 1
        %s4677 = scalar_lea.sflag [#allocation5], %s4676
        %s4678 = sand.u32 %s159, 1
        %s4679 = smul.addr %s4678, 256
        %s4680 = scalar_lea.vmem [#allocation11], %s4679
        %s4681 = sand.u32 %s31, 1
        %s4682 = scalar_lea.sflag [#allocation13], %s4681
        %s4683 = sand.u32 %s185, 1
        %s4684 = smul.addr %s4683, 512
        %s4685 = scalar_lea.vmem [#allocation12], %s4684
        // Predicated region
        $region69: #{tpu_custom_call.1} parent=39 // pred_check
          %p4686 = pneg %p169
        $region70: #{tpu_custom_call.1} parent=39 // pred_check_branch
          %4688 = sbr.rel (%p4686) target = $region72
        $region71: #{tpu_custom_call.1} parent=39 // pred_region
          %s4689 = smul.u32 64, %s31
          %s4691 = ssub.s32 4096, 4096
          %4692 = vsyncadd %s4677, %s4691
          %s4693 = smul.addr %s4689, 64
          %s4694 = scalar_lea.hbm %s5, %s4693
          %s4695 = sshll.u32 %s4680, 4
          %s4696 = int_to_ptr.vmem [resolvable:$true] %s4695
          %4701 = dma.vmem_to_hbm [thread:$0]  %s4696, 4096, %s4694, %s4677, 64, 64, 4
        $region72: #{tpu_custom_call.1} parent=39 // pred_fallthru
          _
        // Predicated region
        $region73: #{tpu_custom_call.1} parent=39 // pred_check
          %p4702 = pneg %p195
        $region74: #{tpu_custom_call.1} parent=39 // pred_check_branch
          %4704 = sbr.rel (%p4702) target = $region76
        $region75: #{tpu_custom_call.1} parent=39 // pred_region
          %s4705 = smul.u32 64, %s31
          %s4707 = ssub.s32 8192, 8192
          %4708 = vsyncadd %s4682, %s4707
          %s4709 = smul.addr %s4705, 128
          %s4710 = scalar_lea.hbm %s6, %s4709
          %s4711 = sshll.u32 %s4685, 4
          %s4712 = int_to_ptr.vmem [resolvable:$true] %s4711
          %4717 = dma.vmem_to_hbm [thread:$0]  %s4712, 8192, %s4710, %s4682, 128, 128, 8
        $region76: #{tpu_custom_call.1} parent=39 // pred_fallthru
          _
        // Predicated region
        $region77: #{tpu_custom_call.1} parent=39 // pred_check
          %p4718 = pneg %p216
        $region78: #{tpu_custom_call.1} parent=39 // pred_check_branch
          %4720 = sbr.rel (%p4718) target = $region80
        $region79: #{tpu_custom_call.1} parent=39 // pred_region
          %s4722 = ssub.s32 4096, 4096
          %4723 = vsyncadd [#allocation13], %s4722
          %s4724 = sshll.u32 [#allocation14], 4
          %s4725 = int_to_ptr.vmem [resolvable:$true] %s4724
          %4730 = dma.vmem_to_hbm [thread:$0]  %s4725, 4096, %s7, [#allocation13], 64, 64, 4
        $region80: #{tpu_custom_call.1} parent=39 // pred_fallthru
          _
        // Predicated region
        $region81: #{tpu_custom_call.1} parent=39 // pred_check
          %p4731 = pneg %p237
        $region82: #{tpu_custom_call.1} parent=39 // pred_check_branch
          %4733 = sbr.rel (%p4731) target = $region84
        $region83: #{tpu_custom_call.1} parent=39 // pred_region
          %s4735 = ssub.s32 8192, 8192
          %4736 = vsyncadd [#allocation16], %s4735
          %s4737 = sshll.u32 [#allocation15], 4
          %s4738 = int_to_ptr.vmem [resolvable:$true] %s4737
          %4743 = dma.vmem_to_hbm [thread:$0]  %s4738, 8192, %s8, [#allocation16], 128, 128, 8
        $region84: #{tpu_custom_call.1} parent=39 // pred_fallthru
          _
        // Predicated region
        $region85: #{tpu_custom_call.1} parent=39 // pred_check
          %p4744 = pneg %p216
        $region86: #{tpu_custom_call.1} parent=39 // pred_check_branch
          %4746 = sbr.rel (%p4744) target = $region88
        $region87: #{tpu_custom_call.1} parent=39 // pred_region
          %4747 = dma.done [#allocation13], 4096
        $region88: #{tpu_custom_call.1} parent=39 // pred_fallthru
          _
        // Predicated region
        $region89: #{tpu_custom_call.1} parent=39 // pred_check
          %p4748 = pneg %p237
        $region90: #{tpu_custom_call.1} parent=39 // pred_check_branch
          %4750 = sbr.rel (%p4748) target = $region92
        $region91: #{tpu_custom_call.1} parent=39 // pred_region
          %4751 = dma.done [#allocation16], 8192
        $region92: #{tpu_custom_call.1} parent=39 // pred_fallthru
          _
      $region40: #{tpu_custom_call.1} parent=5 // pred_fallthru
        _
      %p4752 = scmp.le.s32.totalorder 2, %s26
      // Predicated region
      $region93: #{tpu_custom_call.1} parent=5 // pred_check
        %p4753 = pneg %p4752
      $region94: #{tpu_custom_call.1} parent=5 // pred_check_branch
        %4755 = sbr.rel (%p4753) target = $region96
      $region95: #{tpu_custom_call.1} parent=5 // pred_region
        %s4756 = ssub.s32 %s26, 2
        // Predicated region
        $region97: #{tpu_custom_call.1} parent=95 // pred_check
          %p4757 = pneg %p175
        $region98: #{tpu_custom_call.1} parent=95 // pred_check_branch
          %4759 = sbr.rel (%p4757) target = $region100
        $region99: #{tpu_custom_call.1} parent=95 // pred_region
          %s4760 = sand.u32 %s160, 1
          %s4761 = scalar_lea.sflag [#allocation5], %s4760
          %s4762 = sand.u32 %s160, 1
          %s4763 = smul.addr %s4762, 256
          %s4764 = scalar_lea.vmem [#allocation11], %s4763
          %4765 = dma.done %s4761, 4096
        $region100: #{tpu_custom_call.1} parent=95 // pred_fallthru
          _
        // Predicated region
        $region101: #{tpu_custom_call.1} parent=95 // pred_check
          %p4766 = pneg %p201
        $region102: #{tpu_custom_call.1} parent=95 // pred_check_branch
          %4768 = sbr.rel (%p4766) target = $region104
        $region103: #{tpu_custom_call.1} parent=95 // pred_region
          %s4769 = sand.u32 %s32, 1
          %s4770 = scalar_lea.sflag [#allocation13], %s4769
          %s4771 = sand.u32 %s186, 1
          %s4772 = smul.addr %s4771, 512
          %s4773 = scalar_lea.vmem [#allocation12], %s4772
          %4774 = dma.done %s4770, 8192
        $region104: #{tpu_custom_call.1} parent=95 // pred_fallthru
          _
      $region96: #{tpu_custom_call.1} parent=5 // pred_fallthru
        _
    $region6: #{tpu_custom_call.1} parent=1 // loop_footer
      %s30 = sadd.s32 1, %s26
    $region7: #{tpu_custom_call.1} parent=1 // loop_footer_branch
      %25 = sbr.rel target = $region3
    $region8: #{tpu_custom_call.1} parent=1 // loop_exit
      _
    %4775 = vsyncpa [#allocation4], 1
    %s4776 = scalar_lea.sflag [#allocation4], 1
    %4777 = vsyncpa %s4776, 1
    %4778 = vsyncpa [#allocation7], 1
    %4779 = vsyncpa [#allocation5], 1
    %s4780 = scalar_lea.sflag [#allocation5], 1
    %4781 = vsyncpa %s4780, 1
    %4782 = vsyncpa [#allocation13], 1
    %s4783 = scalar_lea.sflag [#allocation13], 1
    %4784 = vsyncpa %s4783, 1
    %4785 = vsyncpa [#allocation16], 1

</llo_original>
